<compile_context>
chip_gen: v7x
topology: tpu7x:2x2x1
jax: 0.10.0
libtpu: 0.0.40
codegen_flags: <defaults>
</compile_context>

<pallas_src>
import functools

import jax
import jax.numpy as jnp
from jax import lax
from jax.experimental import pallas as pl
from jax.experimental.pallas import tpu as pltpu

# ---------------- configuration (matches module __init__ choices) ----------------
NUM_FREQ_XYZ = 6          # DenseWarp default num_freq_xyz
NUM_FREQ_T = 6            # num_freq_t
T_DIM = 32                # TimeEmbedding output channels (synthetic choice)
INST_DIM = 32             # CondMLP instance-code channels (synthetic choice)
W_POST = 256              # DenseWarp hidden width (W=256, D=2)
W_SKIN = 64               # delta-skinning MLP hidden width
PE_DIM = 3 * (2 * NUM_FREQ_XYZ + 1)   # 39 posemb channels for xyz
PE_PAD = 40               # pad posemb rows to a multiple of 8 for clean MXU K
QF_DIM = 10               # quadratic-form features: [x2,y2,z2,xy,xz,yz,x,y,z,1]
QF_PAD = 16               # padded K for the (B,16)@(16,tile) Gaussian-bone matmul
TILE_PTS = 4096           # point tile (lane dim); multiple of 128


def _choose_tile(npts):
    """Pick a point tile and padded point count (tile | padded, tile multiple of 128)."""
    if npts >= TILE_PTS:
        tile = TILE_PTS
    else:
        tile = max(128, ((npts + 127) // 128) * 128)
    np_pad = ((npts + tile - 1) // tile) * tile
    return tile, np_pad


# ---------------- plain-JAX glue: embeddings & dual-quaternion algebra ----------------
def pos_embedding(x, num_freq):
    """[x, sin(2^k x), cos(2^k x)]_{k<num_freq}; out dim = in_dim*(2*num_freq+1)."""
    parts = [x]
    for k in range(num_freq):
        f = 2.0 ** k
        parts.append(jnp.sin(f * x))
        parts.append(jnp.cos(f * x))
    return jnp.concatenate(parts, axis=-1)


def quat_mul(a, b):
    aw, ax, ay, az = a[..., 0], a[..., 1], a[..., 2], a[..., 3]
    bw, bx, by, bz = b[..., 0], b[..., 1], b[..., 2], b[..., 3]
    return jnp.stack(
        [aw * bw - ax * bx - ay * by - az * bz,
         aw * bx + ax * bw + ay * bz - az * by,
         aw * by - ax * bz + ay * bw + az * bx,
         aw * bz + ax * by - ay * bx + az * bw], axis=-1)


def quat_conj(q):
    return q * jnp.array([1.0, -1.0, -1.0, -1.0], q.dtype)


def dq_inverse(dq):
    qr, qd = dq
    return (quat_conj(qr), quat_conj(qd))


def dq_mul(a, b):
    return (quat_mul(a[0], b[0]), quat_mul(a[0], b[1]) + quat_mul(a[1], b[0]))


def _qmul4(a, b):
    """Quaternion product on component tuples (used inside the kernel)."""
    aw, ax, ay, az = a
    bw, bx, by, bz = b
    return (aw * bw - ax * bx - ay * by - az * bz,
            aw * bx + ax * bw + ay * bz - az * by,
            aw * by - ax * bz + ay * bw + az * bx,
            aw * bz + ax * by - ay * bx + az * bw)


def gauss_quad_coeffs(qr, qd, log_scale):
    """Per-(frame,bone) quadratic-form coefficients for the Gaussian bone term.

    qr, qd: (M,B,4) bone->object dual quaternions; log_scale: (3,B).
    Returns C: (M,B,QF_PAD) f32 with
        C @ [x^2,y^2,z^2,xy,xz,yz,x,y,z,1,0...] = -0.5 * (x-t)^T R diag(e^{-2 ls}) R^T (x-t).
    """
    qw, qx, qy, qz = qr[..., 0], qr[..., 1], qr[..., 2], qr[..., 3]
    R = jnp.stack([
        jnp.stack([1 - 2 * (qy * qy + qz * qz), 2 * (qx * qy - qw * qz),
                   2 * (qx * qz + qw * qy)], -1),
        jnp.stack([2 * (qx * qy + qw * qz), 1 - 2 * (qx * qx + qz * qz),
                   2 * (qy * qz - qw * qx)], -1),
        jnp.stack([2 * (qx * qz - qw * qy), 2 * (qy * qz + qw * qx),
                   1 - 2 * (qx * qx + qy * qy)], -1),
    ], axis=-2)                                                     # (M,B,3,3) bone->obj
    t = 2.0 * quat_mul(qd, quat_conj(qr))[..., 1:]                  # (M,B,3) bone centers
    isc = jnp.exp(-2.0 * log_scale)                                 # (3,B)
    A = jnp.einsum("mbik,kb,mbjk->mbij", R, isc, R)                 # (M,B,3,3)
    At = jnp.einsum("mbij,mbj->mbi", A, t)                          # (M,B,3)
    c_quad = -0.5 * jnp.stack([A[..., 0, 0], A[..., 1, 1], A[..., 2, 2]], -1)
    c_cross = -jnp.stack([A[..., 0, 1], A[..., 0, 2], A[..., 1, 2]], -1)
    c_const = -0.5 * jnp.sum(t * At, axis=-1, keepdims=True)
    Mn, Bn = qr.shape[0], qr.shape[1]
    pad = jnp.zeros((Mn, Bn, QF_PAD - QF_DIM), jnp.float32)
    return jnp.concatenate([c_quad, c_cross, At, c_const, pad], axis=-1).astype(jnp.float32)


# ---------------- in-kernel building blocks ----------------
def _posemb_rows(xT):
    """Posemb in transposed layout: (3, tile) f32 -> (PE_PAD, tile) bf16.

    Double-angle recurrence: 1 sin + 1 cos EUP evaluation per coordinate; higher octaves
    are 3 VPU multiplies/adds each (sin2a = 2 s c, cos2a = 1 - 2 s^2)."""
    s = jnp.sin(xT)
    c = jnp.cos(xT)
    parts = [xT, s, c]
    sk, ck = s, c
    for _ in range(1, NUM_FREQ_XYZ):
        sk, ck = 2.0 * sk * ck, 1.0 - 2.0 * sk * sk
        parts.append(sk)
        parts.append(ck)
    parts.append(jnp.zeros((PE_PAD - PE_DIM, xT.shape[1]), xT.dtype))
    return jnp.concatenate(parts, axis=0).astype(jnp.bfloat16)


def _dense_warp_block(xT, fbias, w0x_ref, w1_ref, b1_ref, w2_ref, b2_ref):
    """CondMLP (D=2, W=256) residual warp in transposed layout; per-frame (time|inst)
    part of layer 0 pre-folded into fbias; 0.1 residual scale pre-folded into w2/b2."""
    peT = _posemb_rows(xT)                                             # (PE_PAD, tile)
    h = jnp.dot(w0x_ref[...], peT, preferred_element_type=jnp.float32) + fbias
    h = jnp.maximum(h, 0.0)                                            # (256, tile)
    h = jnp.dot(w1_ref[...], h.astype(jnp.bfloat16),
                preferred_element_type=jnp.float32) + b1_ref[...]
    h = jnp.maximum(h, 0.0)
    motion = jnp.dot(w2_ref[...], h.astype(jnp.bfloat16),
                     preferred_element_type=jnp.float32) + b2_ref[...]  # (3, tile)
    return xT + motion


def _skin_dqs_block(xT, dbias, cquad, q8, wd0_ref, wd1_ref, bd1_ref):
    """Skinning logits (Gaussian bones on the MXU + delta MLP) -> softmax -> DQ blend/apply.
    Returns (out (3,tile), aux (2,tile) = [skin_entropy, delta_skin])."""
    tile = xT.shape[1]

    # delta-skinning MLP; per-instance part folded into dbias
    peT = _posemb_rows(xT)                                             # (PE_PAD, tile)
    h = jnp.dot(wd0_ref[...], peT, preferred_element_type=jnp.float32) + dbias
    h = jnp.maximum(h, 0.0)                                            # (W_SKIN, tile)
    delta = jnp.dot(wd1_ref[...], h.astype(jnp.bfloat16),
                    preferred_element_type=jnp.float32) + bd1_ref[...]  # (B, tile)

    # Gaussian-bone term -0.5*dist2 as a quadratic form on the MXU (f32 for precision)
    px, py, pz = xT[0:1, :], xT[1:2, :], xT[2:3, :]                    # (1, tile)
    ones = jnp.ones_like(px)
    zpad = jnp.zeros((QF_PAD - QF_DIM, tile), xT.dtype)
    feat = jnp.concatenate([px * px, py * py, pz * pz, px * py, px * pz, py * pz,
                            px, py, pz, ones, zpad], axis=0)           # (16, tile)
    skin = delta + jnp.dot(cquad, feat, preferred_element_type=jnp.float32)  # (B, tile)

    # softmax over bones
    m = jnp.max(skin, axis=0, keepdims=True)                           # (1, tile)
    e = jnp.exp(skin - m)
    s = jnp.sum(e, axis=0, keepdims=True)
    prob = e * pl.reciprocal(s, approx=True)

    # aux: cross_entropy_skin_loss = logsumexp - max; delta_skin = mean(delta^2)
    ent = jnp.log(s)
    dsk = jnp.mean(delta * delta, axis=0, keepdims=True)
    aux = jnp.concatenate([ent, dsk], axis=0)                          # (2, tile)

    # blend se3 dual quaternions with skinning weights on the MXU: (8,B) @ (B,tile)
    qb = jnp.dot(q8, prob, preferred_element_type=jnp.float32)         # (8, tile)
    bw_, bx_, by_, bz_ = qb[0:1, :], qb[1:2, :], qb[2:3, :], qb[3:4, :]
    ew_, ex_, ey_, ez_ = qb[4:5, :], qb[5:6, :], qb[6:7, :], qb[7:8, :]
    inv_n = lax.rsqrt(bw_ * bw_ + bx_ * bx_ + by_ * by_ + bz_ * bz_)
    bw_, bx_, by_, bz_ = bw_ * inv_n, bx_ * inv_n, by_ * inv_n, bz_ * inv_n
    ew_, ex_, ey_, ez_ = ew_ * inv_n, ex_ * inv_n, ey_ * inv_n, ez_ * inv_n

    # rotate point by blended real quaternion: v + 2w(u x v) + 2u x (u x v)
    cx = by_ * pz - bz_ * py
    cy = bz_ * px - bx_ * pz
    cz = bx_ * py - by_ * px
    ccx = by_ * cz - bz_ * cy
    ccy = bz_ * cx - bx_ * cz
    ccz = bx_ * cy - by_ * cx
    rx = px + 2.0 * (bw_ * cx + ccx)
    ry = py + 2.0 * (bw_ * cy + ccy)
    rz = pz + 2.0 * (bw_ * cz + ccz)
    # blended translation: 2 * vec(qd_blend (x) conj(qr_blend))
    _, ttx, tty, ttz = _qmul4((ew_, ex_, ey_, ez_), (bw_, -bx_, -by_, -bz_))
    out = jnp.concatenate([rx + 2.0 * ttx, ry + 2.0 * tty, rz + 2.0 * ttz], axis=0)
    return out, aux


# ---------------- fused Pallas kernel: post-warp + skinning ----------------
def composed_warp_kernel(xyz_ref, fbias_ref, dbias_ref, cquad_ref, q8_ref,
                         w0x_ref, w1_ref, b1_ref, w2_ref, b2_ref,
                         wd0_ref, wd1_ref, bd1_ref,
                         out_ref, aux_ref, *, order_fwd):
    xT = xyz_ref[0]                                                    # (3, tile) f32
    if order_fwd:
        # forward: DenseWarp(post_warp) first, then skinning on the warped points
        wx = _dense_warp_block(xT, fbias_ref[0], w0x_ref, w1_ref, b1_ref, w2_ref, b2_ref)
        out, aux = _skin_dqs_block(wx, dbias_ref[0], cquad_ref[0], q8_ref[0],
                                   wd0_ref, wd1_ref, bd1_ref)
    else:
        # backward: skinning first, then DenseWarp(backward_map) on the skinned points
        sx, aux = _skin_dqs_block(xT, dbias_ref[0], cquad_ref[0], q8_ref[0],
                                  wd0_ref, wd1_ref, bd1_ref)
        out = _dense_warp_block(sx, fbias_ref[0], w0x_ref, w1_ref, b1_ref, w2_ref, b2_ref)
    out_ref[0] = out
    aux_ref[0] = aux


def composed_warp_pallas(xyzT, fbias, dbias, cquad, q8, dense_params, skin_params, *,
                         order_fwd):
    """xyzT: (M, 3, Np) padded point-transposed coords; fbias: (M, W_POST, 1);
    dbias: (M, W_SKIN, 1); cquad: (M, B, QF_PAD); q8: (M, 8, B).
    Returns (out (M,3,Np), aux (M,2,Np)=[skin_entropy, delta_skin])."""
    M, _, Np = xyzT.shape
    B = q8.shape[2]
    tile = Np if Np <= TILE_PTS else TILE_PTS
    assert Np % tile == 0
    w0x = dense_params["w0xT"]
    w1, b1 = dense_params["w1T"], dense_params["b1T"]
    w2, b2 = dense_params["w2sT"], dense_params["b2sT"]
    wd0, wd1, bd1 = skin_params

    def const(shape):
        # constant weights/biases: same block every grid step
        return pl.BlockSpec(shape, lambda m, n: (0, 0))

    kernel = functools.partial(composed_warp_kernel, order_fwd=order_fwd)
    return pl.pallas_call(
        kernel,
        out_shape=(jax.ShapeDtypeStruct((M, 3, Np), jnp.float32),
                   jax.ShapeDtypeStruct((M, 2, Np), jnp.float32)),
        grid_spec=pltpu.PrefetchScalarGridSpec(
            num_scalar_prefetch=0,
            grid=(M, Np // tile),
            in_specs=[
                pl.BlockSpec((1, 3, tile), lambda m, n: (m, 0, n)),
                pl.BlockSpec((1, W_POST, 1), lambda m, n: (m, 0, 0)),
                pl.BlockSpec((1, W_SKIN, 1), lambda m, n: (m, 0, 0)),
                pl.BlockSpec((1, B, QF_PAD), lambda m, n: (m, 0, 0)),
                pl.BlockSpec((1, 8, B), lambda m, n: (m, 0, 0)),
                const(w0x.shape), const(w1.shape), const(b1.shape),
                const(w2.shape), const(b2.shape),
                const(wd0.shape), const(wd1.shape), const(bd1.shape),
            ],
            out_specs=[
                pl.BlockSpec((1, 3, tile), lambda m, n: (m, 0, n)),
                pl.BlockSpec((1, 2, tile), lambda m, n: (m, 0, n)),
            ],
        ),
        compiler_params=pltpu.CompilerParams(
            dimension_semantics=("parallel", "parallel"),
            vmem_limit_bytes=48 * 1024 * 1024),
    )(xyzT, fbias, dbias, cquad, q8, w0x, w1, b1, w2, b2, wd0, wd1, bd1)


# ---------------- parameter init + module wrapper ----------------
def _init_linear_t(key, fan_in, fan_out, dtype=jnp.float32, pad_to=None):
    """Returns (W^T of shape (fan_out, fan_in[->pad_to]) in `dtype`, bias (fan_out, 1) f32).
    Init scale uses the true fan_in; padded columns are zeros."""
    kw, kb = jax.random.split(key)
    w_t = jax.random.normal(kw, (fan_out, fan_in), jnp.float32) / jnp.sqrt(float(fan_in))
    if pad_to is not None and pad_to > fan_in:
        w_t = jnp.pad(w_t, ((0, 0), (0, pad_to - fan_in)))
    b_t = 0.01 * jax.random.normal(kb, (fan_out, 1), jnp.float32)
    return w_t.astype(dtype), b_t


class ComposedWarpPallas:
    """ComposedWarp with warp_type='comp_skel-human_dense' (skeleton + dense post warp)."""

    def __init__(self, frame_info, num_se3=8, seed=0):
        self.num_frames = frame_info["frame_offset"][-1]
        self.num_inst = len(frame_info["frame_offset"]) - 1
        self.num_se3 = num_se3

        keys = jax.random.split(jax.random.PRNGKey(seed), 12)
        # TimeEmbedding (synthetic): fourier(num_freq_t) -> linear -> T_DIM
        kw, kb = jax.random.split(keys[0])
        self.time_w = (jax.random.normal(kw, (2 * NUM_FREQ_T + 1, T_DIM), jnp.float32)
                       / jnp.sqrt(float(2 * NUM_FREQ_T + 1)))
        self.time_b = 0.01 * jax.random.normal(kb, (1, T_DIM), jnp.float32)
        # CondMLP instance codes
        self.inst_table = 0.1 * jax.random.normal(keys[1], (self.num_inst, INST_DIM),
                                                  jnp.float32)
        # DenseWarp post_warp: forward_map and backward_map CondMLPs (D=2, W=256)
        self.fwd_params = self._init_cond_mlp(keys[2])
        self.bwd_params = self._init_cond_mlp(keys[3])
        # SkinningField: per-bone Gaussian log scales + delta-skin MLP
        self.log_scale = jnp.full((3, num_se3), jnp.log(0.03), jnp.float32)
        self.wd0xT, _ = _init_linear_t(keys[4], PE_DIM, W_SKIN, jnp.bfloat16, pad_to=PE_PAD)
        k_i, k_b = jax.random.split(keys[5])
        self.wd0_inst = (jax.random.normal(k_i, (INST_DIM, W_SKIN), jnp.float32)
                         / jnp.sqrt(float(INST_DIM)))
        self.bd0 = 0.01 * jax.random.normal(k_b, (1, W_SKIN), jnp.float32)
        self.wd1T, self.bd1T = _init_linear_t(keys[6], W_SKIN, num_se3, jnp.bfloat16)
        # SkinningWarp.logibeta (unused in forward)
        self.logibeta = -jnp.log(jnp.array([0.01], jnp.float32))

    @staticmethod
    def _init_cond_mlp(key):
        k0, kf, kb0, k1, k2 = jax.random.split(key, 5)
        w0xT, _ = _init_linear_t(k0, PE_DIM, W_POST, jnp.bfloat16, pad_to=PE_PAD)
        w0f = (jax.random.normal(kf, (T_DIM + INST_DIM, W_POST), jnp.float32)
               / jnp.sqrt(float(T_DIM + INST_DIM)))
        b0 = 0.01 * jax.random.normal(kb0, (1, W_POST), jnp.float32)
        w1T, b1T = _init_linear_t(k1, W_POST, W_POST, jnp.bfloat16)
        w2T, b2T = _init_linear_t(k2, W_POST, 3, jnp.float32)
        # fold DenseWarp's 0.1 residual scale into the output layer (host-side, once)
        w2sT = (0.1 * w2T).astype(jnp.bfloat16)
        b2sT = 0.1 * b2T
        return {"w0xT": w0xT, "w0f": w0f, "b0": b0,
                "w1T": w1T, "b1T": b1T, "w2sT": w2sT, "b2sT": b2sT}

    def _frame_bias(self, frame_id, inst_id, params):
        """Fold the (time | instance) contribution of layer 0 into a per-frame bias."""
        t = frame_id.astype(jnp.float32) / float(self.num_frames)
        t_four = pos_embedding(t[:, None], NUM_FREQ_T)                   # (M, 13)
        t_embed = t_four @ self.time_w + self.time_b                     # (M, T_DIM)
        inst_code = self.inst_table[inst_id]                             # (M, INST_DIM)
        per_frame = jnp.concatenate([t_embed, inst_code], axis=-1)       # (M, 64)
        return (per_frame @ params["w0f"] + params["b0"])[..., None]     # (M, 256, 1)

    # ComposedWarp.forward
    def forward(self, xyz, frame_id, inst_id, backward=False, samples_dict=None,
                return_aux=False):
        samples_dict = samples_dict or {}
        M, N, Dp, _ = xyz.shape
        Npts = N * Dp
        _, np_pad = _choose_tile(Npts)

        # TODO(synk): frame_id=None / inst_id=None ("mean instance") branches not implemented.
        assert frame_id is not None and inst_id is not None

        # point-transposed layout: (M, 3, Np_pad), zero-pad extra points
        xyzT = jnp.swapaxes(xyz.reshape(M, Npts, 3), 1, 2)
        if np_pad != Npts:
            xyzT = jnp.pad(xyzT, ((0, 0), (0, 0), (0, np_pad - Npts)))

        # TODO(synk): ArticulationSkelMLP (forward kinematics) not implemented; articulations
        #             must be supplied via samples_dict (reference forward also supports this).
        t_art = samples_dict["t_articulation"]          # ((M,B,4), (M,B,4))
        rest_art = samples_dict["rest_articulation"]
        if backward:
            se3 = dq_mul(rest_art, dq_inverse(t_art))
            articulation = t_art
        else:
            se3 = dq_mul(t_art, dq_inverse(rest_art))
            articulation = rest_art                      # frame_id = None inside skinning

        # se3 dual quats packed as (M, 8, B): rows [qr_w,x,y,z, qd_w,x,y,z]
        q8 = jnp.swapaxes(jnp.concatenate([se3[0], se3[1]], axis=-1), 1, 2)
        # Gaussian-bone quadratic-form coefficients (per frame, per bone)
        cquad = gauss_quad_coeffs(articulation[0], articulation[1], self.log_scale)

        params = self.bwd_params if backward else self.fwd_params
        fbias = self._frame_bias(frame_id, inst_id, params)              # (M, 256, 1)
        inst_code = self.inst_table[inst_id]                             # (M, INST_DIM)
        dbias = (inst_code @ self.wd0_inst + self.bd0)[..., None]        # (M, W_SKIN, 1)

        outT, auxT = composed_warp_pallas(
            xyzT, fbias, dbias, cquad, q8, params,
            (self.wd0xT, self.wd1T, self.bd1T), order_fwd=not backward)

        out = jnp.swapaxes(outT[:, :, :Npts], 1, 2).reshape(M, N, Dp, 3)
        warp_dict = {
            "skin_entropy": auxT[:, 0, :Npts].reshape(M, N, Dp, 1),
            "delta_skin": auxT[:, 1, :Npts].reshape(M, N, Dp, 1),
        }
        if return_aux:
            return out, warp_dict
        return out


# ---------------- demo ----------------
def random_dq(key, M, B, trans_scale=0.1):
    """Deterministic random unit dual quaternions: (qr, qd), each (M, B, 4)."""
    k1, k2 = jax.random.split(key)
    qr = jax.random.normal(k1, (M, B, 4), jnp.float32)
    qr = qr / jnp.linalg.norm(qr, axis=-1, keepdims=True)
    t = trans_scale * jax.random.normal(k2, (M, B, 3), jnp.float32)
    t_quat = jnp.concatenate([jnp.zeros((M, B, 1), jnp.float32), t], axis=-1)
    qd = 0.5 * quat_mul(t_quat, qr)
    return qr, qd


if __name__ == "__main__":
    frame_info = {"frame_offset": [0, 8, 16]}   # 16 frames, 2 instances
    M, N, Dp, B = 2, 8, 4, 8

    model = ComposedWarpPallas(frame_info, num_se3=B, seed=0)

    key = jax.random.PRNGKey(0)
    kx, kt, kr = jax.random.split(key, 3)
    xyz = 0.2 * jax.random.normal(kx, (M, N, Dp, 3), jnp.float32)
    frame_id = jnp.array([3, 11], jnp.int32)
    inst_id = jnp.array([0, 1], jnp.int32)
    samples_dict = {
        "t_articulation": random_dq(kt, M, B),
        "rest_articulation": random_dq(kr, M, B),
    }

    out, warp_dict = model.forward(xyz, frame_id, inst_id, backward=False,
                                   samples_dict=samples_dict, return_aux=True)
    jax.block_until_ready((out, warp_dict))
    assert out.shape == (M, N, Dp, 3)
    assert warp_dict["skin_entropy"].shape == (M, N, Dp, 1)
    assert warp_dict["delta_skin"].shape == (M, N, Dp, 1)
    assert bool(jnp.all(jnp.isfinite(out)))
    assert bool(jnp.all(jnp.isfinite(warp_dict["skin_entropy"])))
    assert bool(jnp.all(jnp.isfinite(warp_dict["delta_skin"])))
    print("KERNEL_OK")
</pallas_src>

<mosaic_0001>
module attributes {stable_mosaic.version = 11 : i64} {
  func.func @composed_warp_kernel(%arg0: i32, %arg1: i32, %arg2: memref<1x3x128xf32, #tpu.memory_space<vmem>>, %arg3: memref<1x256x1xf32, #tpu.memory_space<vmem>>, %arg4: memref<1x64x1xf32, #tpu.memory_space<vmem>>, %arg5: memref<1x8x16xf32, #tpu.memory_space<vmem>>, %arg6: memref<1x8x8xf32, #tpu.memory_space<vmem>>, %arg7: memref<256x40xbf16, #tpu.memory_space<vmem>>, %arg8: memref<256x256xbf16, #tpu.memory_space<vmem>>, %arg9: memref<256x1xf32, #tpu.memory_space<vmem>>, %arg10: memref<3x256xbf16, #tpu.memory_space<vmem>>, %arg11: memref<3x1xf32, #tpu.memory_space<vmem>>, %arg12: memref<64x40xbf16, #tpu.memory_space<vmem>>, %arg13: memref<8x64xbf16, #tpu.memory_space<vmem>>, %arg14: memref<8x1xf32, #tpu.memory_space<vmem>>, %arg15: memref<1x3x128xf32, #tpu.memory_space<vmem>>, %arg16: memref<1x2x128xf32, #tpu.memory_space<vmem>>) attributes {dimension_semantics = [#tpu.dimension_semantics<parallel>, #tpu.dimension_semantics<parallel>], iteration_bounds = array<i64: 2, 1>, scalar_prefetch = 0 : i64, scratch_operands = 0 : i64, tpu.core_type = #tpu.core_type<tc>, window_params = [{transform_indices = @transform_0, window_bounds = array<i64: 1, 3, 128>}, {transform_indices = @transform_1, window_bounds = array<i64: 1, 256, 1>}, {transform_indices = @transform_2, window_bounds = array<i64: 1, 64, 1>}, {transform_indices = @transform_3, window_bounds = array<i64: 1, 8, 16>}, {transform_indices = @transform_4, window_bounds = array<i64: 1, 8, 8>}, {pipeline_mode = #tpu.pipeline_mode<synchronous>, transform_indices = @transform_5, window_bounds = array<i64: 256, 40>}, {pipeline_mode = #tpu.pipeline_mode<synchronous>, transform_indices = @transform_6, window_bounds = array<i64: 256, 256>}, {pipeline_mode = #tpu.pipeline_mode<synchronous>, transform_indices = @transform_7, window_bounds = array<i64: 256, 1>}, {pipeline_mode = #tpu.pipeline_mode<synchronous>, transform_indices = @transform_8, window_bounds = array<i64: 3, 256>}, {pipeline_mode = #tpu.pipeline_mode<synchronous>, transform_indices = @transform_9, window_bounds = array<i64: 3, 1>}, {pipeline_mode = #tpu.pipeline_mode<synchronous>, transform_indices = @transform_10, window_bounds = array<i64: 64, 40>}, {pipeline_mode = #tpu.pipeline_mode<synchronous>, transform_indices = @transform_11, window_bounds = array<i64: 8, 64>}, {pipeline_mode = #tpu.pipeline_mode<synchronous>, transform_indices = @transform_12, window_bounds = array<i64: 8, 1>}, {transform_indices = @transform_13, window_bounds = array<i64: 1, 3, 128>}, {transform_indices = @transform_14, window_bounds = array<i64: 1, 2, 128>}]} {
    %c0 = arith.constant 0 : index
    %c0_0 = arith.constant 0 : index
    %c0_1 = arith.constant 0 : index
    %0 = vector.load %arg2[%c0, %c0_0, %c0_1] : memref<1x3x128xf32, #tpu.memory_space<vmem>>, vector<1x3x128xf32>
    %1 = vector.shape_cast %0 : vector<1x3x128xf32> to vector<3x128xf32>
    %c0_2 = arith.constant 0 : index
    %c0_3 = arith.constant 0 : index
    %c0_4 = arith.constant 0 : index
    %2 = vector.load %arg3[%c0_2, %c0_3, %c0_4] : memref<1x256x1xf32, #tpu.memory_space<vmem>>, vector<1x256x1xf32>
    %3 = vector.shape_cast %2 : vector<1x256x1xf32> to vector<256x1xf32>
    %4 = math.sin %1 : vector<3x128xf32>
    %5 = math.cos %1 : vector<3x128xf32>
    %cst = arith.constant 2.000000e+00 : f32
    %6 = vector.broadcast %cst : f32 to vector<3x128xf32>
    %7 = arith.mulf %6, %4 : vector<3x128xf32>
    %8 = arith.mulf %7, %5 : vector<3x128xf32>
    %cst_5 = arith.constant 2.000000e+00 : f32
    %9 = vector.broadcast %cst_5 : f32 to vector<3x128xf32>
    %10 = arith.mulf %9, %4 : vector<3x128xf32>
    %11 = arith.mulf %10, %4 : vector<3x128xf32>
    %cst_6 = arith.constant 1.000000e+00 : f32
    %12 = vector.broadcast %cst_6 : f32 to vector<3x128xf32>
    %13 = arith.subf %12, %11 : vector<3x128xf32>
    %cst_7 = arith.constant 2.000000e+00 : f32
    %14 = vector.broadcast %cst_7 : f32 to vector<3x128xf32>
    %15 = arith.mulf %14, %8 : vector<3x128xf32>
    %16 = arith.mulf %15, %13 : vector<3x128xf32>
    %cst_8 = arith.constant 2.000000e+00 : f32
    %17 = vector.broadcast %cst_8 : f32 to vector<3x128xf32>
    %18 = arith.mulf %17, %8 : vector<3x128xf32>
    %19 = arith.mulf %18, %8 : vector<3x128xf32>
    %cst_9 = arith.constant 1.000000e+00 : f32
    %20 = vector.broadcast %cst_9 : f32 to vector<3x128xf32>
    %21 = arith.subf %20, %19 : vector<3x128xf32>
    %cst_10 = arith.constant 2.000000e+00 : f32
    %22 = vector.broadcast %cst_10 : f32 to vector<3x128xf32>
    %23 = arith.mulf %22, %16 : vector<3x128xf32>
    %24 = arith.mulf %23, %21 : vector<3x128xf32>
    %cst_11 = arith.constant 2.000000e+00 : f32
    %25 = vector.broadcast %cst_11 : f32 to vector<3x128xf32>
    %26 = arith.mulf %25, %16 : vector<3x128xf32>
    %27 = arith.mulf %26, %16 : vector<3x128xf32>
    %cst_12 = arith.constant 1.000000e+00 : f32
    %28 = vector.broadcast %cst_12 : f32 to vector<3x128xf32>
    %29 = arith.subf %28, %27 : vector<3x128xf32>
    %cst_13 = arith.constant 2.000000e+00 : f32
    %30 = vector.broadcast %cst_13 : f32 to vector<3x128xf32>
    %31 = arith.mulf %30, %24 : vector<3x128xf32>
    %32 = arith.mulf %31, %29 : vector<3x128xf32>
    %cst_14 = arith.constant 2.000000e+00 : f32
    %33 = vector.broadcast %cst_14 : f32 to vector<3x128xf32>
    %34 = arith.mulf %33, %24 : vector<3x128xf32>
    %35 = arith.mulf %34, %24 : vector<3x128xf32>
    %cst_15 = arith.constant 1.000000e+00 : f32
    %36 = vector.broadcast %cst_15 : f32 to vector<3x128xf32>
    %37 = arith.subf %36, %35 : vector<3x128xf32>
    %cst_16 = arith.constant 2.000000e+00 : f32
    %38 = vector.broadcast %cst_16 : f32 to vector<3x128xf32>
    %39 = arith.mulf %38, %32 : vector<3x128xf32>
    %40 = arith.mulf %39, %37 : vector<3x128xf32>
    %cst_17 = arith.constant 2.000000e+00 : f32
    %41 = vector.broadcast %cst_17 : f32 to vector<3x128xf32>
    %42 = arith.mulf %41, %32 : vector<3x128xf32>
    %43 = arith.mulf %42, %32 : vector<3x128xf32>
    %cst_18 = arith.constant 1.000000e+00 : f32
    %44 = vector.broadcast %cst_18 : f32 to vector<3x128xf32>
    %45 = arith.subf %44, %43 : vector<3x128xf32>
    %cst_19 = arith.constant 0.000000e+00 : f32
    %46 = vector.broadcast %cst_19 : f32 to vector<1x128xf32>
    %47 = tpu.concatenate %1, %4, %5, %8, %13, %16, %21, %24, %29, %32, %37, %40, %45, %46 in 0 : vector<3x128xf32>, vector<3x128xf32>, vector<3x128xf32>, vector<3x128xf32>, vector<3x128xf32>, vector<3x128xf32>, vector<3x128xf32>, vector<3x128xf32>, vector<3x128xf32>, vector<3x128xf32>, vector<3x128xf32>, vector<3x128xf32>, vector<3x128xf32>, vector<1x128xf32> -> vector<40x128xf32>
    %48 = arith.truncf %47 : vector<40x128xf32> to vector<40x128xbf16>
    %c0_20 = arith.constant 0 : index
    %c0_21 = arith.constant 0 : index
    %49 = vector.load %arg7[%c0_20, %c0_21] : memref<256x40xbf16, #tpu.memory_space<vmem>>, vector<256x40xbf16>
    %cst_22 = arith.constant dense<0.000000e+00> : vector<256x128xf32>
    %50 = tpu.matmul %49, %48, %cst_22 {dimension_numbers = #tpu.dot_dimension_numbers<[1], [0], [0], [1], [0, 0, 1, 1], [], []>} : vector<256x40xbf16>, vector<40x128xbf16>, vector<256x128xf32> -> vector<256x128xf32>
    %51 = vector.broadcast %3 : vector<256x1xf32> to vector<256x128xf32>
    %52 = arith.addf %50, %51 : vector<256x128xf32>
    %cst_23 = arith.constant 0.000000e+00 : f32
    %53 = vector.broadcast %cst_23 : f32 to vector<256x128xf32>
    %54 = arith.maximumf %52, %53 : vector<256x128xf32>
    %c0_24 = arith.constant 0 : index
    %c0_25 = arith.constant 0 : index
    %55 = vector.load %arg8[%c0_24, %c0_25] : memref<256x256xbf16, #tpu.memory_space<vmem>>, vector<256x256xbf16>
    %56 = arith.truncf %54 : vector<256x128xf32> to vector<256x128xbf16>
    %cst_26 = arith.constant dense<0.000000e+00> : vector<256x128xf32>
    %57 = tpu.matmul %55, %56, %cst_26 {dimension_numbers = #tpu.dot_dimension_numbers<[1], [0], [0], [1], [0, 0, 1, 1], [], []>} : vector<256x256xbf16>, vector<256x128xbf16>, vector<256x128xf32> -> vector<256x128xf32>
    %c0_27 = arith.constant 0 : index
    %c0_28 = arith.constant 0 : index
    %58 = vector.load %arg9[%c0_27, %c0_28] : memref<256x1xf32, #tpu.memory_space<vmem>>, vector<256x1xf32>
    %59 = vector.broadcast %58 : vector<256x1xf32> to vector<256x128xf32>
    %60 = arith.addf %57, %59 : vector<256x128xf32>
    %cst_29 = arith.constant 0.000000e+00 : f32
    %61 = vector.broadcast %cst_29 : f32 to vector<256x128xf32>
    %62 = arith.maximumf %60, %61 : vector<256x128xf32>
    %c0_30 = arith.constant 0 : index
    %c0_31 = arith.constant 0 : index
    %63 = vector.load %arg10[%c0_30, %c0_31] : memref<3x256xbf16, #tpu.memory_space<vmem>>, vector<3x256xbf16>
    %64 = arith.truncf %62 : vector<256x128xf32> to vector<256x128xbf16>
    %cst_32 = arith.constant dense<0.000000e+00> : vector<3x128xf32>
    %65 = tpu.matmul %63, %64, %cst_32 {dimension_numbers = #tpu.dot_dimension_numbers<[1], [0], [0], [1], [0, 0, 1, 1], [], []>} : vector<3x256xbf16>, vector<256x128xbf16>, vector<3x128xf32> -> vector<3x128xf32>
    %c0_33 = arith.constant 0 : index
    %c0_34 = arith.constant 0 : index
    %66 = vector.load %arg11[%c0_33, %c0_34] : memref<3x1xf32, #tpu.memory_space<vmem>>, vector<3x1xf32>
    %67 = vector.broadcast %66 : vector<3x1xf32> to vector<3x128xf32>
    %68 = arith.addf %65, %67 : vector<3x128xf32>
    %69 = arith.addf %1, %68 : vector<3x128xf32>
    %c0_35 = arith.constant 0 : index
    %c0_36 = arith.constant 0 : index
    %c0_37 = arith.constant 0 : index
    %70 = vector.load %arg4[%c0_35, %c0_36, %c0_37] : memref<1x64x1xf32, #tpu.memory_space<vmem>>, vector<1x64x1xf32>
    %71 = vector.shape_cast %70 : vector<1x64x1xf32> to vector<64x1xf32>
    %c0_38 = arith.constant 0 : index
    %c0_39 = arith.constant 0 : index
    %c0_40 = arith.constant 0 : index
    %72 = vector.load %arg5[%c0_38, %c0_39, %c0_40] : memref<1x8x16xf32, #tpu.memory_space<vmem>>, vector<1x8x16xf32>
    %73 = vector.shape_cast %72 : vector<1x8x16xf32> to vector<8x16xf32>
    %c0_41 = arith.constant 0 : index
    %c0_42 = arith.constant 0 : index
    %c0_43 = arith.constant 0 : index
    %74 = vector.load %arg6[%c0_41, %c0_42, %c0_43] : memref<1x8x8xf32, #tpu.memory_space<vmem>>, vector<1x8x8xf32>
    %75 = vector.shape_cast %74 : vector<1x8x8xf32> to vector<8x8xf32>
    %76 = math.sin %69 : vector<3x128xf32>
    %77 = math.cos %69 : vector<3x128xf32>
    %cst_44 = arith.constant 2.000000e+00 : f32
    %78 = vector.broadcast %cst_44 : f32 to vector<3x128xf32>
    %79 = arith.mulf %78, %76 : vector<3x128xf32>
    %80 = arith.mulf %79, %77 : vector<3x128xf32>
    %cst_45 = arith.constant 2.000000e+00 : f32
    %81 = vector.broadcast %cst_45 : f32 to vector<3x128xf32>
    %82 = arith.mulf %81, %76 : vector<3x128xf32>
    %83 = arith.mulf %82, %76 : vector<3x128xf32>
    %cst_46 = arith.constant 1.000000e+00 : f32
    %84 = vector.broadcast %cst_46 : f32 to vector<3x128xf32>
    %85 = arith.subf %84, %83 : vector<3x128xf32>
    %cst_47 = arith.constant 2.000000e+00 : f32
    %86 = vector.broadcast %cst_47 : f32 to vector<3x128xf32>
    %87 = arith.mulf %86, %80 : vector<3x128xf32>
    %88 = arith.mulf %87, %85 : vector<3x128xf32>
    %cst_48 = arith.constant 2.000000e+00 : f32
    %89 = vector.broadcast %cst_48 : f32 to vector<3x128xf32>
    %90 = arith.mulf %89, %80 : vector<3x128xf32>
    %91 = arith.mulf %90, %80 : vector<3x128xf32>
    %cst_49 = arith.constant 1.000000e+00 : f32
    %92 = vector.broadcast %cst_49 : f32 to vector<3x128xf32>
    %93 = arith.subf %92, %91 : vector<3x128xf32>
    %cst_50 = arith.constant 2.000000e+00 : f32
    %94 = vector.broadcast %cst_50 : f32 to vector<3x128xf32>
    %95 = arith.mulf %94, %88 : vector<3x128xf32>
    %96 = arith.mulf %95, %93 : vector<3x128xf32>
    %cst_51 = arith.constant 2.000000e+00 : f32
    %97 = vector.broadcast %cst_51 : f32 to vector<3x128xf32>
    %98 = arith.mulf %97, %88 : vector<3x128xf32>
    %99 = arith.mulf %98, %88 : vector<3x128xf32>
    %cst_52 = arith.constant 1.000000e+00 : f32
    %100 = vector.broadcast %cst_52 : f32 to vector<3x128xf32>
    %101 = arith.subf %100, %99 : vector<3x128xf32>
    %cst_53 = arith.constant 2.000000e+00 : f32
    %102 = vector.broadcast %cst_53 : f32 to vector<3x128xf32>
    %103 = arith.mulf %102, %96 : vector<3x128xf32>
    %104 = arith.mulf %103, %101 : vector<3x128xf32>
    %cst_54 = arith.constant 2.000000e+00 : f32
    %105 = vector.broadcast %cst_54 : f32 to vector<3x128xf32>
    %106 = arith.mulf %105, %96 : vector<3x128xf32>
    %107 = arith.mulf %106, %96 : vector<3x128xf32>
    %cst_55 = arith.constant 1.000000e+00 : f32
    %108 = vector.broadcast %cst_55 : f32 to vector<3x128xf32>
    %109 = arith.subf %108, %107 : vector<3x128xf32>
    %cst_56 = arith.constant 2.000000e+00 : f32
    %110 = vector.broadcast %cst_56 : f32 to vector<3x128xf32>
    %111 = arith.mulf %110, %104 : vector<3x128xf32>
    %112 = arith.mulf %111, %109 : vector<3x128xf32>
    %cst_57 = arith.constant 2.000000e+00 : f32
    %113 = vector.broadcast %cst_57 : f32 to vector<3x128xf32>
    %114 = arith.mulf %113, %104 : vector<3x128xf32>
    %115 = arith.mulf %114, %104 : vector<3x128xf32>
    %cst_58 = arith.constant 1.000000e+00 : f32
    %116 = vector.broadcast %cst_58 : f32 to vector<3x128xf32>
    %117 = arith.subf %116, %115 : vector<3x128xf32>
    %cst_59 = arith.constant 0.000000e+00 : f32
    %118 = vector.broadcast %cst_59 : f32 to vector<1x128xf32>
    %119 = tpu.concatenate %69, %76, %77, %80, %85, %88, %93, %96, %101, %104, %109, %112, %117, %118 in 0 : vector<3x128xf32>, vector<3x128xf32>, vector<3x128xf32>, vector<3x128xf32>, vector<3x128xf32>, vector<3x128xf32>, vector<3x128xf32>, vector<3x128xf32>, vector<3x128xf32>, vector<3x128xf32>, vector<3x128xf32>, vector<3x128xf32>, vector<3x128xf32>, vector<1x128xf32> -> vector<40x128xf32>
    %120 = arith.truncf %119 : vector<40x128xf32> to vector<40x128xbf16>
    %c0_60 = arith.constant 0 : index
    %c0_61 = arith.constant 0 : index
    %121 = vector.load %arg12[%c0_60, %c0_61] : memref<64x40xbf16, #tpu.memory_space<vmem>>, vector<64x40xbf16>
    %cst_62 = arith.constant dense<0.000000e+00> : vector<64x128xf32>
    %122 = tpu.matmul %121, %120, %cst_62 {dimension_numbers = #tpu.dot_dimension_numbers<[1], [0], [0], [1], [0, 0, 1, 1], [], []>} : vector<64x40xbf16>, vector<40x128xbf16>, vector<64x128xf32> -> vector<64x128xf32>
    %123 = vector.broadcast %71 : vector<64x1xf32> to vector<64x128xf32>
    %124 = arith.addf %122, %123 : vector<64x128xf32>
    %cst_63 = arith.constant 0.000000e+00 : f32
    %125 = vector.broadcast %cst_63 : f32 to vector<64x128xf32>
    %126 = arith.maximumf %124, %125 : vector<64x128xf32>
    %c0_64 = arith.constant 0 : index
    %c0_65 = arith.constant 0 : index
    %127 = vector.load %arg13[%c0_64, %c0_65] : memref<8x64xbf16, #tpu.memory_space<vmem>>, vector<8x64xbf16>
    %128 = arith.truncf %126 : vector<64x128xf32> to vector<64x128xbf16>
    %cst_66 = arith.constant dense<0.000000e+00> : vector<8x128xf32>
    %129 = tpu.matmul %127, %128, %cst_66 {dimension_numbers = #tpu.dot_dimension_numbers<[1], [0], [0], [1], [0, 0, 1, 1], [], []>} : vector<8x64xbf16>, vector<64x128xbf16>, vector<8x128xf32> -> vector<8x128xf32>
    %c0_67 = arith.constant 0 : index
    %c0_68 = arith.constant 0 : index
    %130 = vector.load %arg14[%c0_67, %c0_68] : memref<8x1xf32, #tpu.memory_space<vmem>>, vector<8x1xf32>
    %131 = vector.broadcast %130 : vector<8x1xf32> to vector<8x128xf32>
    %132 = arith.addf %129, %131 : vector<8x128xf32>
    %133 = vector.extract_strided_slice %69 {offsets = [0, 0], sizes = [1, 128], strides = [1, 1]} : vector<3x128xf32> to vector<1x128xf32>
    %134 = vector.extract_strided_slice %69 {offsets = [1, 0], sizes = [1, 128], strides = [1, 1]} : vector<3x128xf32> to vector<1x128xf32>
    %135 = vector.extract_strided_slice %69 {offsets = [2, 0], sizes = [1, 128], strides = [1, 1]} : vector<3x128xf32> to vector<1x128xf32>
    %cst_69 = arith.constant 1.000000e+00 : f32
    %136 = vector.broadcast %cst_69 : f32 to vector<1x128xf32>
    %cst_70 = arith.constant 0.000000e+00 : f32
    %137 = vector.broadcast %cst_70 : f32 to vector<6x128xf32>
    %138 = arith.mulf %133, %133 : vector<1x128xf32>
    %139 = arith.mulf %134, %134 : vector<1x128xf32>
    %140 = arith.mulf %135, %135 : vector<1x128xf32>
    %141 = arith.mulf %133, %134 : vector<1x128xf32>
    %142 = arith.mulf %133, %135 : vector<1x128xf32>
    %143 = arith.mulf %134, %135 : vector<1x128xf32>
    %144 = tpu.concatenate %138, %139, %140, %141, %142, %143, %133, %134, %135, %136, %137 in 0 : vector<1x128xf32>, vector<1x128xf32>, vector<1x128xf32>, vector<1x128xf32>, vector<1x128xf32>, vector<1x128xf32>, vector<1x128xf32>, vector<1x128xf32>, vector<1x128xf32>, vector<1x128xf32>, vector<6x128xf32> -> vector<16x128xf32>
    %cst_71 = arith.constant dense<0.000000e+00> : vector<8x128xf32>
    %145 = tpu.matmul %73, %144, %cst_71 {dimension_numbers = #tpu.dot_dimension_numbers<[1], [0], [0], [1], [0, 0, 1, 1], [], []>} : vector<8x16xf32>, vector<16x128xf32>, vector<8x128xf32> -> vector<8x128xf32>
    %146 = arith.addf %132, %145 : vector<8x128xf32>
    %cst_72 = arith.constant dense<0xFF800000> : vector<128xf32>
    %147 = vector.multi_reduction <maximumf>, %146, %cst_72 [0] : vector<8x128xf32> to vector<128xf32>
    %148 = vector.shape_cast %147 : vector<128xf32> to vector<1x128xf32>
    %149 = vector.broadcast %148 : vector<1x128xf32> to vector<8x128xf32>
    %150 = arith.subf %146, %149 : vector<8x128xf32>
    %151 = math.exp %150 : vector<8x128xf32>
    %cst_73 = arith.constant dense<0.000000e+00> : vector<128xf32>
    %152 = vector.multi_reduction <add>, %151, %cst_73 [0] : vector<8x128xf32> to vector<128xf32>
    %153 = vector.shape_cast %152 : vector<128xf32> to vector<1x128xf32>
    %154 = tpu.reciprocal %153 {approx = true} : vector<1x128xf32> -> vector<1x128xf32>
    %155 = vector.broadcast %154 : vector<1x128xf32> to vector<8x128xf32>
    %156 = arith.mulf %151, %155 : vector<8x128xf32>
    %157 = math.log %153 : vector<1x128xf32>
    %158 = arith.mulf %132, %132 : vector<8x128xf32>
    %cst_74 = arith.constant dense<0.000000e+00> : vector<128xf32>
    %159 = vector.multi_reduction <add>, %158, %cst_74 [0] : vector<8x128xf32> to vector<128xf32>
    %160 = vector.shape_cast %159 : vector<128xf32> to vector<1x128xf32>
    %cst_75 = arith.constant 8.000000e+00 : f32
    %161 = vector.broadcast %cst_75 : f32 to vector<1x128xf32>
    %162 = arith.divf %160, %161 : vector<1x128xf32>
    %163 = tpu.concatenate %157, %162 in 0 : vector<1x128xf32>, vector<1x128xf32> -> vector<2x128xf32>
    %cst_76 = arith.constant dense<0.000000e+00> : vector<8x128xf32>
    %164 = tpu.matmul %75, %156, %cst_76 {dimension_numbers = #tpu.dot_dimension_numbers<[1], [0], [0], [1], [0, 0, 1, 1], [], []>} : vector<8x8xf32>, vector<8x128xf32>, vector<8x128xf32> -> vector<8x128xf32>
    %165 = vector.extract_strided_slice %164 {offsets = [0, 0], sizes = [1, 128], strides = [1, 1]} : vector<8x128xf32> to vector<1x128xf32>
    %166 = vector.extract_strided_slice %164 {offsets = [1, 0], sizes = [1, 128], strides = [1, 1]} : vector<8x128xf32> to vector<1x128xf32>
    %167 = vector.extract_strided_slice %164 {offsets = [2, 0], sizes = [1, 128], strides = [1, 1]} : vector<8x128xf32> to vector<1x128xf32>
    %168 = vector.extract_strided_slice %164 {offsets = [3, 0], sizes = [1, 128], strides = [1, 1]} : vector<8x128xf32> to vector<1x128xf32>
    %169 = vector.extract_strided_slice %164 {offsets = [4, 0], sizes = [1, 128], strides = [1, 1]} : vector<8x128xf32> to vector<1x128xf32>
    %170 = vector.extract_strided_slice %164 {offsets = [5, 0], sizes = [1, 128], strides = [1, 1]} : vector<8x128xf32> to vector<1x128xf32>
    %171 = vector.extract_strided_slice %164 {offsets = [6, 0], sizes = [1, 128], strides = [1, 1]} : vector<8x128xf32> to vector<1x128xf32>
    %172 = vector.extract_strided_slice %164 {offsets = [7, 0], sizes = [1, 128], strides = [1, 1]} : vector<8x128xf32> to vector<1x128xf32>
    %173 = arith.mulf %165, %165 : vector<1x128xf32>
    %174 = arith.mulf %166, %166 : vector<1x128xf32>
    %175 = arith.addf %173, %174 : vector<1x128xf32>
    %176 = arith.mulf %167, %167 : vector<1x128xf32>
    %177 = arith.addf %175, %176 : vector<1x128xf32>
    %178 = arith.mulf %168, %168 : vector<1x128xf32>
    %179 = arith.addf %177, %178 : vector<1x128xf32>
    %180 = math.rsqrt %179 : vector<1x128xf32>
    %181 = arith.mulf %165, %180 : vector<1x128xf32>
    %182 = arith.mulf %166, %180 : vector<1x128xf32>
    %183 = arith.mulf %167, %180 : vector<1x128xf32>
    %184 = arith.mulf %168, %180 : vector<1x128xf32>
    %185 = arith.mulf %169, %180 : vector<1x128xf32>
    %186 = arith.mulf %170, %180 : vector<1x128xf32>
    %187 = arith.mulf %171, %180 : vector<1x128xf32>
    %188 = arith.mulf %172, %180 : vector<1x128xf32>
    %189 = arith.mulf %183, %135 : vector<1x128xf32>
    %190 = arith.mulf %184, %134 : vector<1x128xf32>
    %191 = arith.subf %189, %190 : vector<1x128xf32>
    %192 = arith.mulf %184, %133 : vector<1x128xf32>
    %193 = arith.mulf %182, %135 : vector<1x128xf32>
    %194 = arith.subf %192, %193 : vector<1x128xf32>
    %195 = arith.mulf %182, %134 : vector<1x128xf32>
    %196 = arith.mulf %183, %133 : vector<1x128xf32>
    %197 = arith.subf %195, %196 : vector<1x128xf32>
    %198 = arith.mulf %183, %197 : vector<1x128xf32>
    %199 = arith.mulf %184, %194 : vector<1x128xf32>
    %200 = arith.subf %198, %199 : vector<1x128xf32>
    %201 = arith.mulf %184, %191 : vector<1x128xf32>
    %202 = arith.mulf %182, %197 : vector<1x128xf32>
    %203 = arith.subf %201, %202 : vector<1x128xf32>
    %204 = arith.mulf %182, %194 : vector<1x128xf32>
    %205 = arith.mulf %183, %191 : vector<1x128xf32>
    %206 = arith.subf %204, %205 : vector<1x128xf32>
    %207 = arith.mulf %181, %191 : vector<1x128xf32>
    %208 = arith.addf %207, %200 : vector<1x128xf32>
    %cst_77 = arith.constant 2.000000e+00 : f32
    %209 = vector.broadcast %cst_77 : f32 to vector<1x128xf32>
    %210 = arith.mulf %209, %208 : vector<1x128xf32>
    %211 = arith.addf %133, %210 : vector<1x128xf32>
    %212 = arith.mulf %181, %194 : vector<1x128xf32>
    %213 = arith.addf %212, %203 : vector<1x128xf32>
    %cst_78 = arith.constant 2.000000e+00 : f32
    %214 = vector.broadcast %cst_78 : f32 to vector<1x128xf32>
    %215 = arith.mulf %214, %213 : vector<1x128xf32>
    %216 = arith.addf %134, %215 : vector<1x128xf32>
    %217 = arith.mulf %181, %197 : vector<1x128xf32>
    %218 = arith.addf %217, %206 : vector<1x128xf32>
    %cst_79 = arith.constant 2.000000e+00 : f32
    %219 = vector.broadcast %cst_79 : f32 to vector<1x128xf32>
    %220 = arith.mulf %219, %218 : vector<1x128xf32>
    %221 = arith.addf %135, %220 : vector<1x128xf32>
    %cst_80 = arith.constant 0.000000e+00 : f32
    %222 = vector.broadcast %cst_80 : f32 to vector<1x128xf32>
    %223 = arith.subf %222, %182 : vector<1x128xf32>
    %cst_81 = arith.constant 0.000000e+00 : f32
    %224 = vector.broadcast %cst_81 : f32 to vector<1x128xf32>
    %225 = arith.subf %224, %183 : vector<1x128xf32>
    %cst_82 = arith.constant 0.000000e+00 : f32
    %226 = vector.broadcast %cst_82 : f32 to vector<1x128xf32>
    %227 = arith.subf %226, %184 : vector<1x128xf32>
    %228 = arith.mulf %185, %223 : vector<1x128xf32>
    %229 = arith.mulf %186, %181 : vector<1x128xf32>
    %230 = arith.addf %228, %229 : vector<1x128xf32>
    %231 = arith.mulf %187, %227 : vector<1x128xf32>
    %232 = arith.addf %230, %231 : vector<1x128xf32>
    %233 = arith.mulf %188, %225 : vector<1x128xf32>
    %234 = arith.subf %232, %233 : vector<1x128xf32>
    %235 = arith.mulf %185, %225 : vector<1x128xf32>
    %236 = arith.mulf %186, %227 : vector<1x128xf32>
    %237 = arith.subf %235, %236 : vector<1x128xf32>
    %238 = arith.mulf %187, %181 : vector<1x128xf32>
    %239 = arith.addf %237, %238 : vector<1x128xf32>
    %240 = arith.mulf %188, %223 : vector<1x128xf32>
    %241 = arith.addf %239, %240 : vector<1x128xf32>
    %242 = arith.mulf %185, %227 : vector<1x128xf32>
    %243 = arith.mulf %186, %225 : vector<1x128xf32>
    %244 = arith.addf %242, %243 : vector<1x128xf32>
    %245 = arith.mulf %187, %223 : vector<1x128xf32>
    %246 = arith.subf %244, %245 : vector<1x128xf32>
    %247 = arith.mulf %188, %181 : vector<1x128xf32>
    %248 = arith.addf %246, %247 : vector<1x128xf32>
    %cst_83 = arith.constant 2.000000e+00 : f32
    %249 = vector.broadcast %cst_83 : f32 to vector<1x128xf32>
    %250 = arith.mulf %249, %234 : vector<1x128xf32>
    %251 = arith.addf %211, %250 : vector<1x128xf32>
    %cst_84 = arith.constant 2.000000e+00 : f32
    %252 = vector.broadcast %cst_84 : f32 to vector<1x128xf32>
    %253 = arith.mulf %252, %241 : vector<1x128xf32>
    %254 = arith.addf %216, %253 : vector<1x128xf32>
    %cst_85 = arith.constant 2.000000e+00 : f32
    %255 = vector.broadcast %cst_85 : f32 to vector<1x128xf32>
    %256 = arith.mulf %255, %248 : vector<1x128xf32>
    %257 = arith.addf %221, %256 : vector<1x128xf32>
    %258 = tpu.concatenate %251, %254, %257 in 0 : vector<1x128xf32>, vector<1x128xf32>, vector<1x128xf32> -> vector<3x128xf32>
    %c0_86 = arith.constant 0 : index
    %c0_87 = arith.constant 0 : index
    %c0_88 = arith.constant 0 : index
    %259 = vector.load %arg15[%c0_86, %c0_87, %c0_88] : memref<1x3x128xf32, #tpu.memory_space<vmem>>, vector<1x3x128xf32>
    %260 = vector.shape_cast %259 : vector<1x3x128xf32> to vector<3x128xf32>
    %261 = vector.shape_cast %258 : vector<3x128xf32> to vector<1x3x128xf32>
    tpu.vector_store %arg15[%c0_86, %c0_87, %c0_88], %261 {strides = array<i32>} : memref<1x3x128xf32, #tpu.memory_space<vmem>>, vector<1x3x128xf32>,
    %c0_89 = arith.constant 0 : index
    %c0_90 = arith.constant 0 : index
    %c0_91 = arith.constant 0 : index
    %262 = vector.load %arg16[%c0_89, %c0_90, %c0_91] : memref<1x2x128xf32, #tpu.memory_space<vmem>>, vector<1x2x128xf32>
    %263 = vector.shape_cast %262 : vector<1x2x128xf32> to vector<2x128xf32>
    %264 = vector.shape_cast %163 : vector<2x128xf32> to vector<1x2x128xf32>
    tpu.vector_store %arg16[%c0_89, %c0_90, %c0_91], %264 {strides = array<i32>} : memref<1x2x128xf32, #tpu.memory_space<vmem>>, vector<1x2x128xf32>,
    return
  }
  func.func @transform_0(%arg0: i32, %arg1: i32) -> (i32, i32, i32) {
    %c0_i32 = arith.constant 0 : i32
    %c0_i32_0 = arith.constant 0 : i32
    return %arg0, %c0_i32, %arg1 : i32, i32, i32
  }
  func.func @transform_1(%arg0: i32, %arg1: i32) -> (i32, i32, i32) {
    %c0_i32 = arith.constant 0 : i32
    %c0_i32_0 = arith.constant 0 : i32
    %c0_i32_1 = arith.constant 0 : i32
    return %arg0, %c0_i32, %c0_i32_0 : i32, i32, i32
  }
  func.func @transform_2(%arg0: i32, %arg1: i32) -> (i32, i32, i32) {
    %c0_i32 = arith.constant 0 : i32
    %c0_i32_0 = arith.constant 0 : i32
    %c0_i32_1 = arith.constant 0 : i32
    return %arg0, %c0_i32, %c0_i32_0 : i32, i32, i32
  }
  func.func @transform_3(%arg0: i32, %arg1: i32) -> (i32, i32, i32) {
    %c0_i32 = arith.constant 0 : i32
    %c0_i32_0 = arith.constant 0 : i32
    %c0_i32_1 = arith.constant 0 : i32
    return %arg0, %c0_i32, %c0_i32_0 : i32, i32, i32
  }
  func.func @transform_4(%arg0: i32, %arg1: i32) -> (i32, i32, i32) {
    %c0_i32 = arith.constant 0 : i32
    %c0_i32_0 = arith.constant 0 : i32
    %c0_i32_1 = arith.constant 0 : i32
    return %arg0, %c0_i32, %c0_i32_0 : i32, i32, i32
  }
  func.func @transform_5(%arg0: i32, %arg1: i32) -> (i32, i32) {
    %c0_i32 = arith.constant 0 : i32
    %c0_i32_0 = arith.constant 0 : i32
    %c0_i32_1 = arith.constant 0 : i32
    return %c0_i32, %c0_i32_0 : i32, i32
  }
  func.func @transform_6(%arg0: i32, %arg1: i32) -> (i32, i32) {
    %c0_i32 = arith.constant 0 : i32
    %c0_i32_0 = arith.constant 0 : i32
    %c0_i32_1 = arith.constant 0 : i32
    return %c0_i32, %c0_i32_0 : i32, i32
  }
  func.func @transform_7(%arg0: i32, %arg1: i32) -> (i32, i32) {
    %c0_i32 = arith.constant 0 : i32
    %c0_i32_0 = arith.constant 0 : i32
    %c0_i32_1 = arith.constant 0 : i32
    return %c0_i32, %c0_i32_0 : i32, i32
  }
  func.func @transform_8(%arg0: i32, %arg1: i32) -> (i32, i32) {
    %c0_i32 = arith.constant 0 : i32
    %c0_i32_0 = arith.constant 0 : i32
    %c0_i32_1 = arith.constant 0 : i32
    return %c0_i32, %c0_i32_0 : i32, i32
  }
  func.func @transform_9(%arg0: i32, %arg1: i32) -> (i32, i32) {
    %c0_i32 = arith.constant 0 : i32
    %c0_i32_0 = arith.constant 0 : i32
    %c0_i32_1 = arith.constant 0 : i32
    return %c0_i32, %c0_i32_0 : i32, i32
  }
  func.func @transform_10(%arg0: i32, %arg1: i32) -> (i32, i32) {
    %c0_i32 = arith.constant 0 : i32
    %c0_i32_0 = arith.constant 0 : i32
    %c0_i32_1 = arith.constant 0 : i32
    return %c0_i32, %c0_i32_0 : i32, i32
  }
  func.func @transform_11(%arg0: i32, %arg1: i32) -> (i32, i32) {
    %c0_i32 = arith.constant 0 : i32
    %c0_i32_0 = arith.constant 0 : i32
    %c0_i32_1 = arith.constant 0 : i32
    return %c0_i32, %c0_i32_0 : i32, i32
  }
  func.func @transform_12(%arg0: i32, %arg1: i32) -> (i32, i32) {
    %c0_i32 = arith.constant 0 : i32
    %c0_i32_0 = arith.constant 0 : i32
    %c0_i32_1 = arith.constant 0 : i32
    return %c0_i32, %c0_i32_0 : i32, i32
  }
  func.func @transform_13(%arg0: i32, %arg1: i32) -> (i32, i32, i32) {
    %c0_i32 = arith.constant 0 : i32
    %c0_i32_0 = arith.constant 0 : i32
    return %arg0, %c0_i32, %arg1 : i32, i32, i32
  }
  func.func @transform_14(%arg0: i32, %arg1: i32) -> (i32, i32, i32) {
    %c0_i32 = arith.constant 0 : i32
    %c0_i32_0 = arith.constant 0 : i32
    return %arg0, %c0_i32, %arg1 : i32, i32, i32
  }
}

</mosaic_0001>

<llo_original>
// kernel: tpu_custom_call.1
$region0: #{tpu_custom_call.1}
  #allocation0 [shape = 'u32[]', space=smem, size = 0x4, offset = 0x4, fixed_abs, tag = 'smem constant byte address 0x4 - core index']
  #allocation1 [shape = 'u32[144,128]{1,0:T(1,128)}', space=vmem, size = 0x12000, scoped, tag = 'internal scratch']
  %s0 = inlined_call_operand.vmem [shape: f32[2,3,128], index: 0, kind: input, shape index: {}]
  %s1 = inlined_call_operand.vmem [shape: f32[2,256,1], index: 1, kind: input, shape index: {}]
  %s2 = inlined_call_operand.vmem [shape: f32[2,64,1], index: 2, kind: input, shape index: {}]
  %s3 = inlined_call_operand.vmem [shape: f32[2,8,16], index: 3, kind: input, shape index: {}]
  %s4 = inlined_call_operand.vmem [shape: f32[2,8,8], index: 4, kind: input, shape index: {}]
  %s5 = inlined_call_operand.vmem [shape: bf16[256,40], index: 5, kind: input, shape index: {}]
  %s6 = inlined_call_operand.vmem [shape: bf16[256,256], index: 6, kind: input, shape index: {}]
  %s7 = inlined_call_operand.vmem [shape: f32[256,1], index: 7, kind: input, shape index: {}]
  %s8 = inlined_call_operand.vmem [shape: bf16[3,256], index: 8, kind: input, shape index: {}]
  %s9 = inlined_call_operand.vmem [shape: f32[3,1], index: 9, kind: input, shape index: {}]
  %s10 = inlined_call_operand.vmem [shape: bf16[64,40], index: 10, kind: input, shape index: {}]
  %s11 = inlined_call_operand.vmem [shape: bf16[8,64], index: 11, kind: input, shape index: {}]
  %s12 = inlined_call_operand.vmem [shape: f32[8,1], index: 12, kind: input, shape index: {}]
  %s13 = inlined_call_operand.vmem [shape: f32[2,3,128], index: 13, kind: output, shape index: {0}]
  %s14 = inlined_call_operand.hbm [shape: f32[2,2,128], index: 14, kind: output, shape index: {1}]
  %15 = xla_tuple %s13, %s14
  %s16 = sld [smem:[#allocation0]]
  $region93: #{tpu_custom_call.1} parent=0
    _
  %s18 = ssub.s32 1, %s16
  %s19 = scalar_select 0, %s18, %s16
  $region1: #{tpu_custom_call.1} parent=0
    #allocation2 [shape = 'u8[2048]{0}', space=vmem, size = 0x800, scoped, tag = 'output window, operand 1']
    #allocation3 [shape = 's32[2]{0}', space=sflag, size = 0x8, scoped, tag = 'scoped memory for tpu_custom_call.1']
    %20 = vsyncpa [#allocation3], 0
    %s21 = scalar_lea.sflag [#allocation3], 1
    %22 = vsyncpa %s21, 0
    loop: start=0, step=1, limit=4
    $region2: #{tpu_custom_call.1} parent=1 // loop_pre_header
      _
    $region3: #{tpu_custom_call.1} parent=1 // loop_header
      %s24 = sphi 0, %s28
      %p25 = scmp.ge.s32.totalorder %s24, 4
      %s31 = sphi 0, %s43
      %s32 = sphi 0, %s39
      %s33 = sphi 0, %s31
      %s34 = sphi 0, %s32
      %s35 = sphi 0, %s33
      %s36 = sphi 0, %s34
      %s48 = sphi 0, %s50
      %s51 = sphi 0, %s48
      %s52 = sphi 0, %s51
      %s68 = sphi 0, %s52
      %s74 = sphi 0, %s76
      %s77 = sphi 0, %s74
      %s78 = sphi 0, %s77
      %s94 = sphi 0, %s78
      %s100 = sphi 0, %s102
      %s103 = sphi 0, %s100
      %s104 = sphi 0, %s103
      %s120 = sphi 0, %s104
      %s126 = sphi 0, %s128
      %s129 = sphi 0, %s126
      %s130 = sphi 0, %s129
      %s146 = sphi 0, %s130
      %s152 = sphi 0, %s154
      %s155 = sphi 0, %s152
      %s156 = sphi 0, %s155
      %s172 = sphi 0, %s156
      %s176 = sphi 0, %s176
      %s178 = sphi 0, %s176
      %s179 = sphi 0, %s178
      %s193 = sphi 0, %s179
      %s197 = sphi 0, %s197
      %s199 = sphi 0, %s197
      %s200 = sphi 0, %s199
      %s214 = sphi 0, %s200
      %s218 = sphi 0, %s218
      %s220 = sphi 0, %s218
      %s221 = sphi 0, %s220
      %s235 = sphi 0, %s221
      %s239 = sphi 0, %s239
      %s241 = sphi 0, %s239
      %s242 = sphi 0, %s241
      %s256 = sphi 0, %s242
      %s260 = sphi 0, %s260
      %s262 = sphi 0, %s260
      %s263 = sphi 0, %s262
      %s277 = sphi 0, %s263
      %s281 = sphi 0, %s281
      %s283 = sphi 0, %s281
      %s284 = sphi 0, %s283
      %s298 = sphi 0, %s284
      %s302 = sphi 0, %s302
      %s304 = sphi 0, %s302
      %s305 = sphi 0, %s304
      %s319 = sphi 0, %s305
      %s323 = sphi 0, %s323
      %s325 = sphi 0, %s323
      %s326 = sphi 0, %s325
      %s340 = sphi 0, %s326
      %s348 = sphi 0, %s350
      %s351 = sphi 0, %s348
      %s352 = sphi 0, %s351
      %s368 = sphi 0, %s352
      %s376 = sphi 0, %s378
      %s379 = sphi 0, %s376
      %s380 = sphi 0, %s379
      %s396 = sphi 0, %s380
    $region4: #{tpu_custom_call.1} parent=1 // loop_header_branch
      %27 = sbr.rel (%p25) target = $region8
    $region5: #{tpu_custom_call.1} parent=1 // loop_body
      %s29 = ssub.s32 %s24, 1
      %s30 = ssub.s32 %s24, 2
      %s37 = sadd.s32 1, %s32
      %p38 = scmp.ge.s32.totalorder %s37, 1
      %s39 = scalar_select %p38, 0, %s37
      %s40 = sadd.s32 1, %s31
      %s41 = scalar_select %p38, %s40, %s31
      %p42 = scmp.ge.s32.totalorder %s41, 2
      %s43 = scalar_select %p42, 0, %s41
      %s44 = ssub.s32 %s31, %s43
      %s45 = ssub.s32 %s32, %s39
      %s46 = sor.u32 %s44, %s45
      %p47 = scmp.eq.s32.totalorder %s46, 0
      %s49 = sadd.s32 %s48, 1
      %s50 = scalar_select %p47, %s48, %s49
      %p53 = pneg %p47
      %p54 = scmp.eq.s32.totalorder %s24, 1
      %p55 = por %p53, %p54
      %p56 = scmp.ne.s32.totalorder %s48, %s51
      %p57 = scmp.eq.s32.totalorder %s24, 0
      %p58 = por %p56, %p57
      %p59 = scmp.ne.s32.totalorder %s48, %s51
      %p60 = scmp.eq.s32.totalorder %s29, 1
      %p61 = por %p59, %p60
      %p62 = scmp.ne.s32.totalorder %s51, %s52
      %p63 = scmp.eq.s32.totalorder %s29, 0
      %p64 = por %p62, %p63
      %p65 = scmp.ne.s32.totalorder %s51, %s52
      %p66 = scmp.eq.s32.totalorder %s30, 1
      %p67 = por %p65, %p66
      %p69 = scmp.ne.s32.totalorder %s52, %s68
      %p70 = scmp.eq.s32.totalorder %s30, 0
      %p71 = por %p69, %p70
      %s72 = ssub.s32 %s31, %s43
      %p73 = scmp.eq.s32.totalorder %s72, 0
      %s75 = sadd.s32 %s74, 1
      %s76 = scalar_select %p73, %s74, %s75
      %p79 = pneg %p73
      %p80 = scmp.eq.s32.totalorder %s24, 1
      %p81 = por %p79, %p80
      %p82 = scmp.ne.s32.totalorder %s74, %s77
      %p83 = scmp.eq.s32.totalorder %s24, 0
      %p84 = por %p82, %p83
      %p85 = scmp.ne.s32.totalorder %s74, %s77
      %p86 = scmp.eq.s32.totalorder %s29, 1
      %p87 = por %p85, %p86
      %p88 = scmp.ne.s32.totalorder %s77, %s78
      %p89 = scmp.eq.s32.totalorder %s29, 0
      %p90 = por %p88, %p89
      %p91 = scmp.ne.s32.totalorder %s77, %s78
      %p92 = scmp.eq.s32.totalorder %s30, 1
      %p93 = por %p91, %p92
      %p95 = scmp.ne.s32.totalorder %s78, %s94
      %p96 = scmp.eq.s32.totalorder %s30, 0
      %p97 = por %p95, %p96
      %s98 = ssub.s32 %s31, %s43
      %p99 = scmp.eq.s32.totalorder %s98, 0
      %s101 = sadd.s32 %s100, 1
      %s102 = scalar_select %p99, %s100, %s101
      %p105 = pneg %p99
      %p106 = scmp.eq.s32.totalorder %s24, 1
      %p107 = por %p105, %p106
      %p108 = scmp.ne.s32.totalorder %s100, %s103
      %p109 = scmp.eq.s32.totalorder %s24, 0
      %p110 = por %p108, %p109
      %p111 = scmp.ne.s32.totalorder %s100, %s103
      %p112 = scmp.eq.s32.totalorder %s29, 1
      %p113 = por %p111, %p112
      %p114 = scmp.ne.s32.totalorder %s103, %s104
      %p115 = scmp.eq.s32.totalorder %s29, 0
      %p116 = por %p114, %p115
      %p117 = scmp.ne.s32.totalorder %s103, %s104
      %p118 = scmp.eq.s32.totalorder %s30, 1
      %p119 = por %p117, %p118
      %p121 = scmp.ne.s32.totalorder %s104, %s120
      %p122 = scmp.eq.s32.totalorder %s30, 0
      %p123 = por %p121, %p122
      %s124 = ssub.s32 %s31, %s43
      %p125 = scmp.eq.s32.totalorder %s124, 0
      %s127 = sadd.s32 %s126, 1
      %s128 = scalar_select %p125, %s126, %s127
      %p131 = pneg %p125
      %p132 = scmp.eq.s32.totalorder %s24, 1
      %p133 = por %p131, %p132
      %p134 = scmp.ne.s32.totalorder %s126, %s129
      %p135 = scmp.eq.s32.totalorder %s24, 0
      %p136 = por %p134, %p135
      %p137 = scmp.ne.s32.totalorder %s126, %s129
      %p138 = scmp.eq.s32.totalorder %s29, 1
      %p139 = por %p137, %p138
      %p140 = scmp.ne.s32.totalorder %s129, %s130
      %p141 = scmp.eq.s32.totalorder %s29, 0
      %p142 = por %p140, %p141
      %p143 = scmp.ne.s32.totalorder %s129, %s130
      %p144 = scmp.eq.s32.totalorder %s30, 1
      %p145 = por %p143, %p144
      %p147 = scmp.ne.s32.totalorder %s130, %s146
      %p148 = scmp.eq.s32.totalorder %s30, 0
      %p149 = por %p147, %p148
      %s150 = ssub.s32 %s31, %s43
      %p151 = scmp.eq.s32.totalorder %s150, 0
      %s153 = sadd.s32 %s152, 1
      %s154 = scalar_select %p151, %s152, %s153
      %p157 = pneg %p151
      %p158 = scmp.eq.s32.totalorder %s24, 1
      %p159 = por %p157, %p158
      %p160 = scmp.ne.s32.totalorder %s152, %s155
      %p161 = scmp.eq.s32.totalorder %s24, 0
      %p162 = por %p160, %p161
      %p163 = scmp.ne.s32.totalorder %s152, %s155
      %p164 = scmp.eq.s32.totalorder %s29, 1
      %p165 = por %p163, %p164
      %p166 = scmp.ne.s32.totalorder %s155, %s156
      %p167 = scmp.eq.s32.totalorder %s29, 0
      %p168 = por %p166, %p167
      %p169 = scmp.ne.s32.totalorder %s155, %s156
      %p170 = scmp.eq.s32.totalorder %s30, 1
      %p171 = por %p169, %p170
      %p173 = scmp.ne.s32.totalorder %s156, %s172
      %p174 = scmp.eq.s32.totalorder %s30, 0
      %p175 = por %p173, %p174
      %s177 = sadd.s32 %s176, 1
      %p180 = scmp.eq.s32.totalorder %s24, 1
      %p181 = scmp.ne.s32.totalorder %s176, %s178
      %p182 = scmp.eq.s32.totalorder %s24, 0
      %p183 = por %p181, %p182
      %p184 = scmp.ne.s32.totalorder %s176, %s178
      %p185 = scmp.eq.s32.totalorder %s29, 1
      %p186 = por %p184, %p185
      %p187 = scmp.ne.s32.totalorder %s178, %s179
      %p188 = scmp.eq.s32.totalorder %s29, 0
      %p189 = por %p187, %p188
      %p190 = scmp.ne.s32.totalorder %s178, %s179
      %p191 = scmp.eq.s32.totalorder %s30, 1
      %p192 = por %p190, %p191
      %p194 = scmp.ne.s32.totalorder %s179, %s193
      %p195 = scmp.eq.s32.totalorder %s30, 0
      %p196 = por %p194, %p195
      %s198 = sadd.s32 %s197, 1
      %p201 = scmp.eq.s32.totalorder %s24, 1
      %p202 = scmp.ne.s32.totalorder %s197, %s199
      %p203 = scmp.eq.s32.totalorder %s24, 0
      %p204 = por %p202, %p203
      %p205 = scmp.ne.s32.totalorder %s197, %s199
      %p206 = scmp.eq.s32.totalorder %s29, 1
      %p207 = por %p205, %p206
      %p208 = scmp.ne.s32.totalorder %s199, %s200
      %p209 = scmp.eq.s32.totalorder %s29, 0
      %p210 = por %p208, %p209
      %p211 = scmp.ne.s32.totalorder %s199, %s200
      %p212 = scmp.eq.s32.totalorder %s30, 1
      %p213 = por %p211, %p212
      %p215 = scmp.ne.s32.totalorder %s200, %s214
      %p216 = scmp.eq.s32.totalorder %s30, 0
      %p217 = por %p215, %p216
      %s219 = sadd.s32 %s218, 1
      %p222 = scmp.eq.s32.totalorder %s24, 1
      %p223 = scmp.ne.s32.totalorder %s218, %s220
      %p224 = scmp.eq.s32.totalorder %s24, 0
      %p225 = por %p223, %p224
      %p226 = scmp.ne.s32.totalorder %s218, %s220
      %p227 = scmp.eq.s32.totalorder %s29, 1
      %p228 = por %p226, %p227
      %p229 = scmp.ne.s32.totalorder %s220, %s221
      %p230 = scmp.eq.s32.totalorder %s29, 0
      %p231 = por %p229, %p230
      %p232 = scmp.ne.s32.totalorder %s220, %s221
      %p233 = scmp.eq.s32.totalorder %s30, 1
      %p234 = por %p232, %p233
      %p236 = scmp.ne.s32.totalorder %s221, %s235
      %p237 = scmp.eq.s32.totalorder %s30, 0
      %p238 = por %p236, %p237
      %s240 = sadd.s32 %s239, 1
      %p243 = scmp.eq.s32.totalorder %s24, 1
      %p244 = scmp.ne.s32.totalorder %s239, %s241
      %p245 = scmp.eq.s32.totalorder %s24, 0
      %p246 = por %p244, %p245
      %p247 = scmp.ne.s32.totalorder %s239, %s241
      %p248 = scmp.eq.s32.totalorder %s29, 1
      %p249 = por %p247, %p248
      %p250 = scmp.ne.s32.totalorder %s241, %s242
      %p251 = scmp.eq.s32.totalorder %s29, 0
      %p252 = por %p250, %p251
      %p253 = scmp.ne.s32.totalorder %s241, %s242
      %p254 = scmp.eq.s32.totalorder %s30, 1
      %p255 = por %p253, %p254
      %p257 = scmp.ne.s32.totalorder %s242, %s256
      %p258 = scmp.eq.s32.totalorder %s30, 0
      %p259 = por %p257, %p258
      %s261 = sadd.s32 %s260, 1
      %p264 = scmp.eq.s32.totalorder %s24, 1
      %p265 = scmp.ne.s32.totalorder %s260, %s262
      %p266 = scmp.eq.s32.totalorder %s24, 0
      %p267 = por %p265, %p266
      %p268 = scmp.ne.s32.totalorder %s260, %s262
      %p269 = scmp.eq.s32.totalorder %s29, 1
      %p270 = por %p268, %p269
      %p271 = scmp.ne.s32.totalorder %s262, %s263
      %p272 = scmp.eq.s32.totalorder %s29, 0
      %p273 = por %p271, %p272
      %p274 = scmp.ne.s32.totalorder %s262, %s263
      %p275 = scmp.eq.s32.totalorder %s30, 1
      %p276 = por %p274, %p275
      %p278 = scmp.ne.s32.totalorder %s263, %s277
      %p279 = scmp.eq.s32.totalorder %s30, 0
      %p280 = por %p278, %p279
      %s282 = sadd.s32 %s281, 1
      %p285 = scmp.eq.s32.totalorder %s24, 1
      %p286 = scmp.ne.s32.totalorder %s281, %s283
      %p287 = scmp.eq.s32.totalorder %s24, 0
      %p288 = por %p286, %p287
      %p289 = scmp.ne.s32.totalorder %s281, %s283
      %p290 = scmp.eq.s32.totalorder %s29, 1
      %p291 = por %p289, %p290
      %p292 = scmp.ne.s32.totalorder %s283, %s284
      %p293 = scmp.eq.s32.totalorder %s29, 0
      %p294 = por %p292, %p293
      %p295 = scmp.ne.s32.totalorder %s283, %s284
      %p296 = scmp.eq.s32.totalorder %s30, 1
      %p297 = por %p295, %p296
      %p299 = scmp.ne.s32.totalorder %s284, %s298
      %p300 = scmp.eq.s32.totalorder %s30, 0
      %p301 = por %p299, %p300
      %s303 = sadd.s32 %s302, 1
      %p306 = scmp.eq.s32.totalorder %s24, 1
      %p307 = scmp.ne.s32.totalorder %s302, %s304
      %p308 = scmp.eq.s32.totalorder %s24, 0
      %p309 = por %p307, %p308
      %p310 = scmp.ne.s32.totalorder %s302, %s304
      %p311 = scmp.eq.s32.totalorder %s29, 1
      %p312 = por %p310, %p311
      %p313 = scmp.ne.s32.totalorder %s304, %s305
      %p314 = scmp.eq.s32.totalorder %s29, 0
      %p315 = por %p313, %p314
      %p316 = scmp.ne.s32.totalorder %s304, %s305
      %p317 = scmp.eq.s32.totalorder %s30, 1
      %p318 = por %p316, %p317
      %p320 = scmp.ne.s32.totalorder %s305, %s319
      %p321 = scmp.eq.s32.totalorder %s30, 0
      %p322 = por %p320, %p321
      %s324 = sadd.s32 %s323, 1
      %p327 = scmp.eq.s32.totalorder %s24, 1
      %p328 = scmp.ne.s32.totalorder %s323, %s325
      %p329 = scmp.eq.s32.totalorder %s24, 0
      %p330 = por %p328, %p329
      %p331 = scmp.ne.s32.totalorder %s323, %s325
      %p332 = scmp.eq.s32.totalorder %s29, 1
      %p333 = por %p331, %p332
      %p334 = scmp.ne.s32.totalorder %s325, %s326
      %p335 = scmp.eq.s32.totalorder %s29, 0
      %p336 = por %p334, %p335
      %p337 = scmp.ne.s32.totalorder %s325, %s326
      %p338 = scmp.eq.s32.totalorder %s30, 1
      %p339 = por %p337, %p338
      %p341 = scmp.ne.s32.totalorder %s326, %s340
      %p342 = scmp.eq.s32.totalorder %s30, 0
      %p343 = por %p341, %p342
      %s344 = ssub.s32 %s31, %s43
      %s345 = ssub.s32 %s32, %s39
      %s346 = sor.u32 %s344, %s345
      %p347 = scmp.eq.s32.totalorder %s346, 0
      %s349 = sadd.s32 %s348, 1
      %s350 = scalar_select %p347, %s348, %s349
      %p353 = pneg %p347
      %p354 = scmp.eq.s32.totalorder %s24, 1
      %p355 = por %p353, %p354
      %p356 = scmp.ne.s32.totalorder %s348, %s351
      %p357 = scmp.eq.s32.totalorder %s24, 0
      %p358 = por %p356, %p357
      %p359 = scmp.ne.s32.totalorder %s348, %s351
      %p360 = scmp.eq.s32.totalorder %s29, 1
      %p361 = por %p359, %p360
      %p362 = scmp.ne.s32.totalorder %s351, %s352
      %p363 = scmp.eq.s32.totalorder %s29, 0
      %p364 = por %p362, %p363
      %p365 = scmp.ne.s32.totalorder %s351, %s352
      %p366 = scmp.eq.s32.totalorder %s30, 1
      %p367 = por %p365, %p366
      %p369 = scmp.ne.s32.totalorder %s352, %s368
      %p370 = scmp.eq.s32.totalorder %s30, 0
      %p371 = por %p369, %p370
      %s372 = ssub.s32 %s31, %s43
      %s373 = ssub.s32 %s32, %s39
      %s374 = sor.u32 %s372, %s373
      %p375 = scmp.eq.s32.totalorder %s374, 0
      %s377 = sadd.s32 %s376, 1
      %s378 = scalar_select %p375, %s376, %s377
      %p381 = pneg %p375
      %p382 = scmp.eq.s32.totalorder %s24, 1
      %p383 = por %p381, %p382
      %p384 = scmp.ne.s32.totalorder %s376, %s379
      %p385 = scmp.eq.s32.totalorder %s24, 0
      %p386 = por %p384, %p385
      %p387 = scmp.ne.s32.totalorder %s376, %s379
      %p388 = scmp.eq.s32.totalorder %s29, 1
      %p389 = por %p387, %p388
      %p390 = scmp.ne.s32.totalorder %s379, %s380
      %p391 = scmp.eq.s32.totalorder %s29, 0
      %p392 = por %p390, %p391
      %p393 = scmp.ne.s32.totalorder %s379, %s380
      %p394 = scmp.eq.s32.totalorder %s30, 1
      %p395 = por %p393, %p394
      %p397 = scmp.ne.s32.totalorder %s380, %s396
      %p398 = scmp.eq.s32.totalorder %s30, 0
      %p399 = por %p397, %p398
      %p400 = scmp.le.s32.totalorder 1, %s24
      %p401 = scmp.lt.s32.totalorder %s24, 3
      %p402 = pnand %p400, %p401
      %p403 = pneg %p402
      // Predicated region
      $region9: #{tpu_custom_call.1} parent=5 // pred_check
        _
      $region10: #{tpu_custom_call.1} parent=5 // pred_check_branch
        %405 = sbr.rel (%p402) target = $region12
      $region11: #{tpu_custom_call.1} parent=5 // pred_region
        %s406 = ssub.s32 %s24, 1
        // Predicated region
        $region13: #{tpu_custom_call.1} parent=11 // pred_check
          %p407 = pneg %p189
        $region14: #{tpu_custom_call.1} parent=11 // pred_check_branch
          %409 = sbr.rel (%p407) target = $region16
        $region15: #{tpu_custom_call.1} parent=11 // pred_region
          _
        $region16: #{tpu_custom_call.1} parent=11 // pred_fallthru
          _
        // Predicated region
        $region17: #{tpu_custom_call.1} parent=11 // pred_check
          %p410 = pneg %p210
        $region18: #{tpu_custom_call.1} parent=11 // pred_check_branch
          %412 = sbr.rel (%p410) target = $region20
        $region19: #{tpu_custom_call.1} parent=11 // pred_region
          _
        $region20: #{tpu_custom_call.1} parent=11 // pred_fallthru
          _
        // Predicated region
        $region21: #{tpu_custom_call.1} parent=11 // pred_check
          %p413 = pneg %p231
        $region22: #{tpu_custom_call.1} parent=11 // pred_check_branch
          %415 = sbr.rel (%p413) target = $region24
        $region23: #{tpu_custom_call.1} parent=11 // pred_region
          _
        $region24: #{tpu_custom_call.1} parent=11 // pred_fallthru
          _
        // Predicated region
        $region25: #{tpu_custom_call.1} parent=11 // pred_check
          %p416 = pneg %p252
        $region26: #{tpu_custom_call.1} parent=11 // pred_check_branch
          %418 = sbr.rel (%p416) target = $region28
        $region27: #{tpu_custom_call.1} parent=11 // pred_region
          _
        $region28: #{tpu_custom_call.1} parent=11 // pred_fallthru
          _
        // Predicated region
        $region29: #{tpu_custom_call.1} parent=11 // pred_check
          %p419 = pneg %p273
        $region30: #{tpu_custom_call.1} parent=11 // pred_check_branch
          %421 = sbr.rel (%p419) target = $region32
        $region31: #{tpu_custom_call.1} parent=11 // pred_region
          _
        $region32: #{tpu_custom_call.1} parent=11 // pred_fallthru
          _
        // Predicated region
        $region33: #{tpu_custom_call.1} parent=11 // pred_check
          %p422 = pneg %p294
        $region34: #{tpu_custom_call.1} parent=11 // pred_check_branch
          %424 = sbr.rel (%p422) target = $region36
        $region35: #{tpu_custom_call.1} parent=11 // pred_region
          _
        $region36: #{tpu_custom_call.1} parent=11 // pred_fallthru
          _
        // Predicated region
        $region37: #{tpu_custom_call.1} parent=11 // pred_check
          %p425 = pneg %p315
        $region38: #{tpu_custom_call.1} parent=11 // pred_check_branch
          %427 = sbr.rel (%p425) target = $region40
        $region39: #{tpu_custom_call.1} parent=11 // pred_region
          _
        $region40: #{tpu_custom_call.1} parent=11 // pred_fallthru
          _
        // Predicated region
        $region41: #{tpu_custom_call.1} parent=11 // pred_check
          %p428 = pneg %p336
        $region42: #{tpu_custom_call.1} parent=11 // pred_check_branch
          %430 = sbr.rel (%p428) target = $region44
        $region43: #{tpu_custom_call.1} parent=11 // pred_region
          _
        $region44: #{tpu_custom_call.1} parent=11 // pred_fallthru
          _
      $region12: #{tpu_custom_call.1} parent=5 // pred_fallthru
        _
      %p431 = scmp.lt.s32.totalorder %s24, 2
      // Predicated region
      $region45: #{tpu_custom_call.1} parent=5 // pred_check
        %p432 = pneg %p431
      $region46: #{tpu_custom_call.1} parent=5 // pred_check_branch
        %434 = sbr.rel (%p432) target = $region48
      $region47: #{tpu_custom_call.1} parent=5 // pred_region
        // Predicated region
        $region49: #{tpu_custom_call.1} parent=47 // pred_check
          %p435 = pneg %p58
        $region50: #{tpu_custom_call.1} parent=47 // pred_check_branch
          %437 = sbr.rel (%p435) target = $region52
        $region51: #{tpu_custom_call.1} parent=47 // pred_region
          %p438 = scmp.lt.s32.totalorder %s31, 1
          %s439 = scalar_select %p438, %s31, 1
          %p440 = scmp.lt.s32.totalorder %s32, 0
          %s441 = scalar_select %p440, %s32, 0
          %s442 = sadd.s32 %s441, %s439
          %s443 = smul.addr %s442, 4
          %s444 = scalar_lea.vmem %s0, %s443
        $region52: #{tpu_custom_call.1} parent=47 // pred_fallthru
          _
        // Predicated region
        $region53: #{tpu_custom_call.1} parent=47 // pred_check
          %p445 = pneg %p84
        $region54: #{tpu_custom_call.1} parent=47 // pred_check_branch
          %447 = sbr.rel (%p445) target = $region56
        $region55: #{tpu_custom_call.1} parent=47 // pred_region
          %p448 = scmp.lt.s32.totalorder %s31, 1
          %s449 = scalar_select %p448, %s31, 1
          %s450 = smul.addr %s449, 32
          %s451 = smul.addr %s450, 8
          %s452 = scalar_lea.vmem %s1, %s451
        $region56: #{tpu_custom_call.1} parent=47 // pred_fallthru
          _
        // Predicated region
        $region57: #{tpu_custom_call.1} parent=47 // pred_check
          %p453 = pneg %p110
        $region58: #{tpu_custom_call.1} parent=47 // pred_check_branch
          %455 = sbr.rel (%p453) target = $region60
        $region59: #{tpu_custom_call.1} parent=47 // pred_region
          %p456 = scmp.lt.s32.totalorder %s31, 1
          %s457 = scalar_select %p456, %s31, 1
          %s458 = smul.addr %s457, 8
          %s459 = smul.addr %s458, 8
          %s460 = scalar_lea.vmem %s2, %s459
        $region60: #{tpu_custom_call.1} parent=47 // pred_fallthru
          _
        // Predicated region
        $region61: #{tpu_custom_call.1} parent=47 // pred_check
          %p461 = pneg %p136
        $region62: #{tpu_custom_call.1} parent=47 // pred_check_branch
          %463 = sbr.rel (%p461) target = $region64
        $region63: #{tpu_custom_call.1} parent=47 // pred_region
          %p464 = scmp.lt.s32.totalorder %s31, 1
          %s465 = scalar_select %p464, %s31, 1
          %s466 = smul.addr %s465, 8
          %s467 = scalar_lea.vmem %s3, %s466
        $region64: #{tpu_custom_call.1} parent=47 // pred_fallthru
          _
        // Predicated region
        $region65: #{tpu_custom_call.1} parent=47 // pred_check
          %p468 = pneg %p162
        $region66: #{tpu_custom_call.1} parent=47 // pred_check_branch
          %470 = sbr.rel (%p468) target = $region68
        $region67: #{tpu_custom_call.1} parent=47 // pred_region
          %p471 = scmp.lt.s32.totalorder %s31, 1
          %s472 = scalar_select %p471, %s31, 1
          %s473 = smul.addr %s472, 8
          %s474 = scalar_lea.vmem %s4, %s473
        $region68: #{tpu_custom_call.1} parent=47 // pred_fallthru
          _
      $region48: #{tpu_custom_call.1} parent=5 // pred_fallthru
        _
      %p475 = scmp.le.s32.totalorder 1, %s24
      %p476 = scmp.lt.s32.totalorder %s24, 3
      %p477 = pnand %p475, %p476
      %p478 = pneg %p477
      // Predicated region
      $region69: #{tpu_custom_call.1} parent=5 // pred_check
        _
      $region70: #{tpu_custom_call.1} parent=5 // pred_check_branch
        %480 = sbr.rel (%p477) target = $region72
      $region71: #{tpu_custom_call.1} parent=5 // pred_region
        %s481 = ssub.s32 %s24, 1
        %p482 = scmp.lt.s32.totalorder %s33, 1
        %s483 = scalar_select %p482, %s33, 1
        %p484 = scmp.lt.s32.totalorder %s34, 0
        %s485 = scalar_select %p484, %s34, 0
        %s486 = sadd.s32 %s485, %s483
        %s487 = smul.addr %s486, 4
        %s488 = scalar_lea.vmem %s0, %s487
        %p489 = pneg %p64
        %p490 = pneg %p61
        %p491 = scmp.lt.s32.totalorder %s33, 1
        %s492 = scalar_select %p491, %s33, 1
        %s493 = smul.addr %s492, 32
        %s494 = smul.addr %s493, 8
        %s495 = scalar_lea.vmem %s1, %s494
        %p496 = pneg %p90
        %p497 = pneg %p87
        %p498 = scmp.lt.s32.totalorder %s33, 1
        %s499 = scalar_select %p498, %s33, 1
        %s500 = smul.addr %s499, 8
        %s501 = smul.addr %s500, 8
        %s502 = scalar_lea.vmem %s2, %s501
        %p503 = pneg %p116
        %p504 = pneg %p113
        %p505 = scmp.lt.s32.totalorder %s33, 1
        %s506 = scalar_select %p505, %s33, 1
        %s507 = smul.addr %s506, 8
        %s508 = scalar_lea.vmem %s3, %s507
        %p509 = pneg %p142
        %p510 = pneg %p139
        %p511 = scmp.lt.s32.totalorder %s33, 1
        %s512 = scalar_select %p511, %s33, 1
        %s513 = smul.addr %s512, 8
        %s514 = scalar_lea.vmem %s4, %s513
        %p515 = pneg %p168
        %p516 = pneg %p165
        %p517 = pneg %p189
        %p518 = pneg %p186
        %p519 = pneg %p210
        %p520 = pneg %p207
        %p521 = pneg %p231
        %p522 = pneg %p228
        %p523 = pneg %p252
        %p524 = pneg %p249
        %p525 = pneg %p273
        %p526 = pneg %p270
        %p527 = pneg %p294
        %p528 = pneg %p291
        %p529 = pneg %p315
        %p530 = pneg %p312
        %p531 = pneg %p336
        %p532 = pneg %p333
        %p533 = pneg %p364
        %p534 = pneg %p361
        %p535 = scmp.lt.s32.totalorder %s33, 1
        %s536 = scalar_select %p535, %s33, 1
        %p537 = scmp.lt.s32.totalorder %s34, 0
        %s538 = scalar_select %p537, %s34, 0
        %s539 = sadd.s32 %s538, %s536
        %s540 = smul.addr %s539, 4
        %s541 = scalar_lea.vmem %s13, %s540
        %p542 = pneg %p392
        %p543 = pneg %p389
        %s544 = sand.u32 %s379, 1
        %s545 = scalar_lea.sflag [#allocation3], %s544
        %s546 = sand.u32 %s379, 1
        %s547 = smul.addr %s546, 2
        %s548 = scalar_lea.vmem [#allocation2], %s547
        %p549 = scmp.lt.s32.totalorder %s33, 1
        %s550 = scalar_select %p549, %s33, 1
        %p551 = scmp.lt.s32.totalorder %s34, 0
        %s552 = scalar_select %p551, %s34, 0
        %s553 = sadd.s32 %s552, %s550
        %s554 = smul.addr %s553, 4
        %s555 = scalar_lea.vmem %s0, %s554
        %p556 = scmp.lt.s32.totalorder %s33, 1
        %s557 = scalar_select %p556, %s33, 1
        %s558 = smul.addr %s557, 32
        %s559 = smul.addr %s558, 8
        %s560 = scalar_lea.vmem %s1, %s559
        %p561 = scmp.lt.s32.totalorder %s33, 1
        %s562 = scalar_select %p561, %s33, 1
        %s563 = smul.addr %s562, 8
        %s564 = smul.addr %s563, 8
        %s565 = scalar_lea.vmem %s2, %s564
        %p566 = scmp.lt.s32.totalorder %s33, 1
        %s567 = scalar_select %p566, %s33, 1
        %s568 = smul.addr %s567, 8
        %s569 = scalar_lea.vmem %s3, %s568
        %p570 = scmp.lt.s32.totalorder %s33, 1
        %s571 = scalar_select %p570, %s33, 1
        %s572 = smul.addr %s571, 8
        %s573 = scalar_lea.vmem %s4, %s572
        %p574 = scmp.lt.s32.totalorder %s33, 1
        %s575 = scalar_select %p574, %s33, 1
        %p576 = scmp.lt.s32.totalorder %s34, 0
        %s577 = scalar_select %p576, %s34, 0
        %s578 = sadd.s32 %s577, %s575
        %s579 = smul.addr %s578, 4
        %s580 = scalar_lea.vmem %s13, %s579
        %v582 = vld [vmem:[%s555] sm:$0x7]
        %v583 = vld [vmem:[%s560] sm:$0xff]
        %v584 = vld [vmem:[%s560 + $0x8] sm:$0xff]
        %v585 = vld [vmem:[%s560 + $0x10] sm:$0xff]
        %v586 = vld [vmem:[%s560 + $0x18] sm:$0xff]
        %v587 = vld [vmem:[%s560 + $0x20] sm:$0xff]
        %v588 = vld [vmem:[%s560 + $0x28] sm:$0xff]
        %v589 = vld [vmem:[%s560 + $0x30] sm:$0xff]
        %v590 = vld [vmem:[%s560 + $0x38] sm:$0xff]
        %v591 = vld [vmem:[%s560 + $0x40] sm:$0xff]
        %v592 = vld [vmem:[%s560 + $0x48] sm:$0xff]
        %v593 = vld [vmem:[%s560 + $0x50] sm:$0xff]
        %v594 = vld [vmem:[%s560 + $0x58] sm:$0xff]
        %v595 = vld [vmem:[%s560 + $0x60] sm:$0xff]
        %v596 = vld [vmem:[%s560 + $0x68] sm:$0xff]
        %v597 = vld [vmem:[%s560 + $0x70] sm:$0xff]
        %v598 = vld [vmem:[%s560 + $0x78] sm:$0xff]
        %v599 = vld [vmem:[%s560 + $0x80] sm:$0xff]
        %v600 = vld [vmem:[%s560 + $0x88] sm:$0xff]
        %v601 = vld [vmem:[%s560 + $0x90] sm:$0xff]
        %v602 = vld [vmem:[%s560 + $0x98] sm:$0xff]
        %v603 = vld [vmem:[%s560 + $0xa0] sm:$0xff]
        %v604 = vld [vmem:[%s560 + $0xa8] sm:$0xff]
        %v605 = vld [vmem:[%s560 + $0xb0] sm:$0xff]
        %v606 = vld [vmem:[%s560 + $0xb8] sm:$0xff]
        %v607 = vld [vmem:[%s560 + $0xc0] sm:$0xff]
        %v608 = vld [vmem:[%s560 + $0xc8] sm:$0xff]
        %v609 = vld [vmem:[%s560 + $0xd0] sm:$0xff]
        %v610 = vld [vmem:[%s560 + $0xd8] sm:$0xff]
        %v611 = vld [vmem:[%s560 + $0xe0] sm:$0xff]
        %v612 = vld [vmem:[%s560 + $0xe8] sm:$0xff]
        %v613 = vld [vmem:[%s560 + $0xf0] sm:$0xff]
        %v614 = vld [vmem:[%s560 + $0xf8] sm:$0xff]
        %v615 = vand.u32 2147483647, %v582
        %vm616 = vcmp.le.f32.partialorder %v615, 0.7853982
        %vm617 = vcmp.lt.s32.totalorder %v582, 0
        %v618 = vand.u32 %v582, 2139095040
        %v619 = vshrl.u32 %v618, 23
        %v620 = vsub.s32 %v619, 127
        %v621 = vand.u32 2147483647, %v582
        %v622 = vand.u32 %v621, 8388607
        %v623 = vor.u32 %v622, 8388608
        %v624 = vsub.s32 0, %v623
        %v625 = vadd.s32 %v620, 1
        %vm626 = vcmp.gt.s32.totalorder %v625, 0
        %v627 = vsel %vm626, %v625, 0
        %v628 = vshrl.u32 %v627, 5
        %v629 = vand.u32 %v627, 31
        %v630 = vsub.s32 32, %v629
        %v631 = vshrl.u32 683565275, %v630
        %v632 = vshll.u32 683565275, %v629
        %v633 = vshrl.u32 2475754826, %v630
        %v634 = vor.u32 %v632, %v633
        %v635 = vshll.u32 2475754826, %v629
        %v636 = vshrl.u32 2131351028, %v630
        %v637 = vor.u32 %v635, %v636
        %v638 = vshll.u32 2131351028, %v629
        %v639 = vshrl.u32 2102212464, %v630
        %v640 = vor.u32 %v638, %v639
        %v641 = vshll.u32 2102212464, %v629
        %v642 = vshrl.u32 920167782, %v630
        %v643 = vor.u32 %v641, %v642
        %v644 = vshll.u32 920167782, %v629
        %v645 = vshrl.u32 1326507024, %v630
        %v646 = vor.u32 %v644, %v645
        %vm647 = vcmp.lt.s32.totalorder %v628, 1
        %vm648 = vcmp.lt.s32.totalorder %v628, 2
        %vm649 = vcmp.lt.s32.totalorder %v628, 3
        %vm650 = vcmp.lt.s32.totalorder %v628, 4
        %v651 = vsel %vm647, %v631, %v634
        %v652 = vsel %vm650, %v640, 2102212464
        %v653 = vsel %vm649, %v637, %v652
        %v654 = vsel %vm648, %v651, %v653
        %v655 = vsel %vm647, %v634, %v637
        %v656 = vsel %vm650, %v643, 920167782
        %v657 = vsel %vm649, %v640, %v656
        %v658 = vsel %vm648, %v655, %v657
        %v659 = vsel %vm647, %v637, %v640
        %v660 = vsel %vm650, %v646, 1326507024
        %v661 = vsel %vm649, %v643, %v660
        %v662 = vsel %vm648, %v659, %v661
        %v663 = vshll.u32 %v623, 8
        %v664 = vmul.u32.u64.compose %v663, %v662
        %v665 = vextract.low.u32 %v664
        %v666 = vextract.high.u32 %v664
        %v667 = vmul.u32.u64.compose %v663, %v658
        %v668 = vextract.low.u32 %v667
        %v669 = vextract.high.u32 %v667
        %v670 = vmul.u32 %v663, %v654
        %v671 = vadd.s32 %v666, %v668
        %vm672 = vc.u32 %v666, %v668
        %v673 = vadd.s32 %v669, 1
        %v674 = vsel %vm672, %v673, %v669
        %v675 = vadd.s32 %v670, %v674
        %v676 = vadd.s32 %v675, 536870912
        %v677 = vshrl.u32 %v676, 30
        %v678 = vshll.u32 %v677, 30
        %v679 = vsub.s32 %v675, %v678
        %vm680 = vcmp.lt.s32.totalorder %v679, 0
        %v681 = vsub.s32 0, %v679
        %v682 = vsel %vm680, %v681, %v679
        %v683 = vclz %v682
        %v684 = vsub.s32 %v683, 2
        %vm685 = vcmp.gt.s32.totalorder 0, %v684
        %v686 = vsel %vm685, 0, %v684
        %v687 = vsub.s32 32, %v686
        %v688 = vshll.u32 %v679, %v686
        %v689 = vshrl.u32 %v671, %v687
        %v690 = vor.u32 %v688, %v689
        %v691 = vsub.s32 4294967266, %v686
        %v692 = vadd.s32 %v691, 127
        %v693 = vshll.u32 %v692, 23
        %v694 = vor.u32 4788187, %v693
        %v695 = vand.u32 2147483647, %v694
        %v697 = vcvt.s32.f32 %v690
        %v698 = vmul.f32 %v697, %v695
        %v699 = vxor.u32 %v698, 2147483648
        %v700 = vsel %vm617, %v699, %v698
        %v701 = vsub.s32 4, %v677
        %v702 = vsel %vm617, %v701, %v677
        %v703 = vsel %vm616, %v582, %v700
        %v704 = vsel %vm616, 0, %v702
        %v705 = vcosq.f32.pop %v703
        %v706 = vsinq.f32.pop %v703
        %vm707 = vweird.f32 %v582
        %v708 = vadd.s32 %v704, 3
        %v709 = vand.u32 %v708, 3
        %vm710 = vcmp.lt.s32.totalorder %v709, 2
        %vm711 = vcmp.eq.s32.totalorder %v709, 0
        %v712 = vxor.u32 %v706, 2147483648
        %v713 = vsel %vm711, %v705, %v712
        %vm714 = vcmp.eq.s32.totalorder %v709, 2
        %v715 = vxor.u32 %v705, 2147483648
        %v716 = vsel %vm714, %v715, %v706
        %v717 = vsel %vm710, %v713, %v716
        %v718 = vsel %vm707, nan, %v717
        %v719 = vand.u32 2147483647, %v582
        %vm720 = vcmp.le.f32.partialorder %v719, 0.7853982
        %vm721 = vcmp.lt.s32.totalorder %v582, 0
        %v722 = vand.u32 %v582, 2139095040
        %v723 = vshrl.u32 %v722, 23
        %v724 = vsub.s32 %v723, 127
        %v725 = vand.u32 2147483647, %v582
        %v726 = vand.u32 %v725, 8388607
        %v727 = vor.u32 %v726, 8388608
        %v728 = vsub.s32 0, %v727
        %v729 = vadd.s32 %v724, 1
        %vm730 = vcmp.gt.s32.totalorder %v729, 0
        %v731 = vsel %vm730, %v729, 0
        %v732 = vshrl.u32 %v731, 5
        %v733 = vand.u32 %v731, 31
        %v734 = vsub.s32 32, %v733
        %v735 = vshrl.u32 683565275, %v734
        %v736 = vshll.u32 683565275, %v733
        %v737 = vshrl.u32 2475754826, %v734
        %v738 = vor.u32 %v736, %v737
        %v739 = vshll.u32 2475754826, %v733
        %v740 = vshrl.u32 2131351028, %v734
        %v741 = vor.u32 %v739, %v740
        %v742 = vshll.u32 2131351028, %v733
        %v743 = vshrl.u32 2102212464, %v734
        %v744 = vor.u32 %v742, %v743
        %v745 = vshll.u32 2102212464, %v733
        %v746 = vshrl.u32 920167782, %v734
        %v747 = vor.u32 %v745, %v746
        %v748 = vshll.u32 920167782, %v733
        %v749 = vshrl.u32 1326507024, %v734
        %v750 = vor.u32 %v748, %v749
        %vm751 = vcmp.lt.s32.totalorder %v732, 1
        %vm752 = vcmp.lt.s32.totalorder %v732, 2
        %vm753 = vcmp.lt.s32.totalorder %v732, 3
        %vm754 = vcmp.lt.s32.totalorder %v732, 4
        %v755 = vsel %vm751, %v735, %v738
        %v756 = vsel %vm754, %v744, 2102212464
        %v757 = vsel %vm753, %v741, %v756
        %v758 = vsel %vm752, %v755, %v757
        %v759 = vsel %vm751, %v738, %v741
        %v760 = vsel %vm754, %v747, 920167782
        %v761 = vsel %vm753, %v744, %v760
        %v762 = vsel %vm752, %v759, %v761
        %v763 = vsel %vm751, %v741, %v744
        %v764 = vsel %vm754, %v750, 1326507024
        %v765 = vsel %vm753, %v747, %v764
        %v766 = vsel %vm752, %v763, %v765
        %v767 = vshll.u32 %v727, 8
        %v768 = vmul.u32.u64.compose %v767, %v766
        %v769 = vextract.low.u32 %v768
        %v770 = vextract.high.u32 %v768
        %v771 = vmul.u32.u64.compose %v767, %v762
        %v772 = vextract.low.u32 %v771
        %v773 = vextract.high.u32 %v771
        %v774 = vmul.u32 %v767, %v758
        %v775 = vadd.s32 %v770, %v772
        %vm776 = vc.u32 %v770, %v772
        %v777 = vadd.s32 %v773, 1
        %v778 = vsel %vm776, %v777, %v773
        %v779 = vadd.s32 %v774, %v778
        %v780 = vadd.s32 %v779, 536870912
        %v781 = vshrl.u32 %v780, 30
        %v782 = vshll.u32 %v781, 30
        %v783 = vsub.s32 %v779, %v782
        %vm784 = vcmp.lt.s32.totalorder %v783, 0
        %v785 = vsub.s32 0, %v783
        %v786 = vsel %vm784, %v785, %v783
        %v787 = vclz %v786
        %v788 = vsub.s32 %v787, 2
        %vm789 = vcmp.gt.s32.totalorder 0, %v788
        %v790 = vsel %vm789, 0, %v788
        %v791 = vsub.s32 32, %v790
        %v792 = vshll.u32 %v783, %v790
        %v793 = vshrl.u32 %v775, %v791
        %v794 = vor.u32 %v792, %v793
        %v795 = vsub.s32 4294967266, %v790
        %v796 = vadd.s32 %v795, 127
        %v797 = vshll.u32 %v796, 23
        %v798 = vor.u32 4788187, %v797
        %v799 = vand.u32 2147483647, %v798
        %v801 = vcvt.s32.f32 %v794
        %v802 = vmul.f32 %v801, %v799
        %v803 = vxor.u32 %v802, 2147483648
        %v804 = vsel %vm721, %v803, %v802
        %v805 = vsub.s32 4, %v781
        %v806 = vsel %vm721, %v805, %v781
        %v807 = vsel %vm720, %v582, %v804
        %v808 = vsel %vm720, 0, %v806
        %v809 = vcosq.f32.pop %v807
        %v810 = vsinq.f32.pop %v807
        %vm811 = vweird.f32 %v582
        %v812 = vand.u32 %v808, 3
        %vm813 = vcmp.lt.s32.totalorder %v812, 2
        %vm814 = vcmp.eq.s32.totalorder %v812, 0
        %v815 = vxor.u32 %v810, 2147483648
        %v816 = vsel %vm814, %v809, %v815
        %vm817 = vcmp.eq.s32.totalorder %v812, 2
        %v818 = vxor.u32 %v809, 2147483648
        %v819 = vsel %vm817, %v818, %v810
        %v820 = vsel %vm813, %v816, %v819
        %v821 = vsel %vm811, nan, %v820
        %v822 = vmul.f32 %v718, 2.0
        %v823 = vmul.f32 %v822, %v821
        %v824 = vmul.f32 %v822, %v718
        %v825 = vsub.f32 1.0, %v824
        %v826 = vmul.f32 %v823, 2.0
        %v827 = vmul.f32 %v826, %v825
        %v828 = vmul.f32 %v826, %v823
        %v829 = vsub.f32 1.0, %v828
        %v830 = vmul.f32 %v827, 2.0
        %v831 = vmul.f32 %v830, %v829
        %v832 = vmul.f32 %v830, %v827
        %v833 = vsub.f32 1.0, %v832
        %v834 = vmul.f32 %v831, 2.0
        %v835 = vmul.f32 %v834, %v833
        %v836 = vmul.f32 %v834, %v831
        %v837 = vsub.f32 1.0, %v836
        %v838 = vmul.f32 %v835, 2.0
        %v839 = vmul.f32 %v838, %v837
        %v840 = vmul.f32 %v838, %v835
        %v841 = vsub.f32 1.0, %v840
        %v843 = vrot.slane %v718, 5
        %v846 = vrot.slane %v821, 2
        %v849 = vrot.slane %v823, 7
        %v852 = vrot.slane %v825, 4
        %v855 = vrot.slane %v827, 1
        %v858 = vrot.slane %v829, 6
        %v861 = vrot.slane %v831, 3
        %v864 = vrot.slane %v835, 5
        %v867 = vrot.slane %v837, 2
        %v870 = vrot.slane %v839, 7
        %v873 = vrot.slane %v841, 4
        %vm875 = vcmask 1042432
        %v876 = vsel %vm875, %v582, %v843
        %vm877 = vcmask 1045504
        %v878 = vsel %vm877, %v876, %v846
        %vm879 = vcmask 1040384
        %v880 = vsel %vm879, %v846, %v849
        %vm881 = vcmask 1043456
        %v882 = vsel %vm881, %v880, %v852
        %vm883 = vcmask 1046528
        %v884 = vsel %vm883, %v882, %v855
        %vm885 = vcmask 1041408
        %v886 = vsel %vm885, %v855, %v858
        %vm887 = vcmask 1044480
        %v888 = vsel %vm887, %v886, %v861
        %v889 = vsel %vm875, %v833, %v864
        %v890 = vsel %vm877, %v889, %v867
        %v891 = vsel %vm879, %v867, %v870
        %v892 = vsel %vm881, %v891, %v873
        %v893 = vsel %vm883, %v892, 0.0
        %v894 = vpack.c.bf16 %v884, %v878
        %v895 = vpack.c.bf16 %v890, %v888
        %v896 = vpack.c.bf16 %v893, %v893
        %v897 = vld [vmem:[%s5] sm:$0xf]
        %v898 = vld [vmem:[%s5 + $0x4] sm:$0xf]
        %v899 = vld [vmem:[%s5 + $0x8] sm:$0xf]
        %v900 = vld [vmem:[%s5 + $0xc] sm:$0xf]
        %v901 = vld [vmem:[%s5 + $0x10] sm:$0xf]
        %v902 = vld [vmem:[%s5 + $0x14] sm:$0xf]
        %v903 = vld [vmem:[%s5 + $0x18] sm:$0xf]
        %v904 = vld [vmem:[%s5 + $0x1c] sm:$0xf]
        %v905 = vld [vmem:[%s5 + $0x20] sm:$0xf]
        %v906 = vld [vmem:[%s5 + $0x24] sm:$0xf]
        %v907 = vld [vmem:[%s5 + $0x28] sm:$0xf]
        %v908 = vld [vmem:[%s5 + $0x2c] sm:$0xf]
        %v909 = vld [vmem:[%s5 + $0x30] sm:$0xf]
        %v910 = vld [vmem:[%s5 + $0x34] sm:$0xf]
        %v911 = vld [vmem:[%s5 + $0x38] sm:$0xf]
        %v912 = vld [vmem:[%s5 + $0x3c] sm:$0xf]
        %v913 = vld [vmem:[%s5 + $0x40] sm:$0xf]
        %v914 = vld [vmem:[%s5 + $0x44] sm:$0xf]
        %v915 = vld [vmem:[%s5 + $0x48] sm:$0xf]
        %v916 = vld [vmem:[%s5 + $0x4c] sm:$0xf]
        %v917 = vld [vmem:[%s5 + $0x50] sm:$0xf]
        %v918 = vld [vmem:[%s5 + $0x54] sm:$0xf]
        %v919 = vld [vmem:[%s5 + $0x58] sm:$0xf]
        %v920 = vld [vmem:[%s5 + $0x5c] sm:$0xf]
        %v921 = vld [vmem:[%s5 + $0x60] sm:$0xf]
        %v922 = vld [vmem:[%s5 + $0x64] sm:$0xf]
        %v923 = vld [vmem:[%s5 + $0x68] sm:$0xf]
        %v924 = vld [vmem:[%s5 + $0x6c] sm:$0xf]
        %v925 = vld [vmem:[%s5 + $0x70] sm:$0xf]
        %v926 = vld [vmem:[%s5 + $0x74] sm:$0xf]
        %v927 = vld [vmem:[%s5 + $0x78] sm:$0xf]
        %v928 = vld [vmem:[%s5 + $0x7c] sm:$0xf]
        %930 = vset.pattern.permute.xlu0 0
        %931 = vperm.xlu0 %930, %v583
        %v932 = vpop.permute.xlu0 %931
        %935 = vset.pattern.permute.xlu0 0
        %936 = vperm.xlu0 %935, %v584
        %v937 = vpop.permute.xlu0 %936
        %940 = vset.pattern.permute.xlu0 0
        %941 = vperm.xlu0 %940, %v585
        %v942 = vpop.permute.xlu0 %941
        %945 = vset.pattern.permute.xlu0 0
        %946 = vperm.xlu0 %945, %v586
        %v947 = vpop.permute.xlu0 %946
        %950 = vset.pattern.permute.xlu0 0
        %951 = vperm.xlu0 %950, %v587
        %v952 = vpop.permute.xlu0 %951
        %955 = vset.pattern.permute.xlu0 0
        %956 = vperm.xlu0 %955, %v588
        %v957 = vpop.permute.xlu0 %956
        %960 = vset.pattern.permute.xlu0 0
        %961 = vperm.xlu0 %960, %v589
        %v962 = vpop.permute.xlu0 %961
        %965 = vset.pattern.permute.xlu0 0
        %966 = vperm.xlu0 %965, %v590
        %v967 = vpop.permute.xlu0 %966
        %970 = vset.pattern.permute.xlu0 0
        %971 = vperm.xlu0 %970, %v591
        %v972 = vpop.permute.xlu0 %971
        %975 = vset.pattern.permute.xlu0 0
        %976 = vperm.xlu0 %975, %v592
        %v977 = vpop.permute.xlu0 %976
        %980 = vset.pattern.permute.xlu0 0
        %981 = vperm.xlu0 %980, %v593
        %v982 = vpop.permute.xlu0 %981
        %985 = vset.pattern.permute.xlu0 0
        %986 = vperm.xlu0 %985, %v594
        %v987 = vpop.permute.xlu0 %986
        %990 = vset.pattern.permute.xlu0 0
        %991 = vperm.xlu0 %990, %v595
        %v992 = vpop.permute.xlu0 %991
        %995 = vset.pattern.permute.xlu0 0
        %996 = vperm.xlu0 %995, %v596
        %v997 = vpop.permute.xlu0 %996
        %1000 = vset.pattern.permute.xlu0 0
        %1001 = vperm.xlu0 %1000, %v597
        %v1002 = vpop.permute.xlu0 %1001
        %1005 = vset.pattern.permute.xlu0 0
        %1006 = vperm.xlu0 %1005, %v598
        %v1007 = vpop.permute.xlu0 %1006
        %1010 = vset.pattern.permute.xlu0 0
        %1011 = vperm.xlu0 %1010, %v599
        %v1012 = vpop.permute.xlu0 %1011
        %1015 = vset.pattern.permute.xlu0 0
        %1016 = vperm.xlu0 %1015, %v600
        %v1017 = vpop.permute.xlu0 %1016
        %1020 = vset.pattern.permute.xlu0 0
        %1021 = vperm.xlu0 %1020, %v601
        %v1022 = vpop.permute.xlu0 %1021
        %1025 = vset.pattern.permute.xlu0 0
        %1026 = vperm.xlu0 %1025, %v602
        %v1027 = vpop.permute.xlu0 %1026
        %1030 = vset.pattern.permute.xlu0 0
        %1031 = vperm.xlu0 %1030, %v603
        %v1032 = vpop.permute.xlu0 %1031
        %1035 = vset.pattern.permute.xlu0 0
        %1036 = vperm.xlu0 %1035, %v604
        %v1037 = vpop.permute.xlu0 %1036
        %1040 = vset.pattern.permute.xlu0 0
        %1041 = vperm.xlu0 %1040, %v605
        %v1042 = vpop.permute.xlu0 %1041
        %1045 = vset.pattern.permute.xlu0 0
        %1046 = vperm.xlu0 %1045, %v606
        %v1047 = vpop.permute.xlu0 %1046
        %1050 = vset.pattern.permute.xlu0 0
        %1051 = vperm.xlu0 %1050, %v607
        %v1052 = vpop.permute.xlu0 %1051
        %1055 = vset.pattern.permute.xlu0 0
        %1056 = vperm.xlu0 %1055, %v608
        %v1057 = vpop.permute.xlu0 %1056
        %1060 = vset.pattern.permute.xlu0 0
        %1061 = vperm.xlu0 %1060, %v609
        %v1062 = vpop.permute.xlu0 %1061
        %1065 = vset.pattern.permute.xlu0 0
        %1066 = vperm.xlu0 %1065, %v610
        %v1067 = vpop.permute.xlu0 %1066
        %1070 = vset.pattern.permute.xlu0 0
        %1071 = vperm.xlu0 %1070, %v611
        %v1072 = vpop.permute.xlu0 %1071
        %1075 = vset.pattern.permute.xlu0 0
        %1076 = vperm.xlu0 %1075, %v612
        %v1077 = vpop.permute.xlu0 %1076
        %1080 = vset.pattern.permute.xlu0 0
        %1081 = vperm.xlu0 %1080, %v613
        %v1082 = vpop.permute.xlu0 %1081
        %1085 = vset.pattern.permute.xlu0 0
        %1086 = vperm.xlu0 %1085, %v614
        %v1087 = vpop.permute.xlu0 %1086
        %v1121 = vunpack.c.l.b16 %v897
        %v1122 = vunpack.c.l.b16 %v898
        %v1123 = vunpack.c.l.b16 %v899
        %v1124 = vunpack.c.l.b16 %v900
        %v1125 = vunpack.c.l.b16 %v901
        %v1126 = vunpack.c.l.b16 %v902
        %v1127 = vunpack.c.l.b16 %v903
        %v1128 = vunpack.c.l.b16 %v904
        %v1129 = vunpack.c.l.b16 %v905
        %v1130 = vunpack.c.l.b16 %v906
        %v1131 = vunpack.c.l.b16 %v907
        %v1132 = vunpack.c.l.b16 %v908
        %v1133 = vunpack.c.l.b16 %v909
        %v1134 = vunpack.c.l.b16 %v910
        %v1135 = vunpack.c.l.b16 %v911
        %v1136 = vunpack.c.l.b16 %v912
        %v1137 = vunpack.c.l.b16 %v913
        %v1138 = vunpack.c.l.b16 %v914
        %v1139 = vunpack.c.l.b16 %v915
        %v1140 = vunpack.c.l.b16 %v916
        %v1141 = vunpack.c.l.b16 %v917
        %v1142 = vunpack.c.l.b16 %v918
        %v1143 = vunpack.c.l.b16 %v919
        %v1144 = vunpack.c.l.b16 %v920
        %v1145 = vunpack.c.l.b16 %v921
        %v1146 = vunpack.c.l.b16 %v922
        %v1147 = vunpack.c.l.b16 %v923
        %v1148 = vunpack.c.l.b16 %v924
        %v1149 = vunpack.c.l.b16 %v925
        %v1150 = vunpack.c.l.b16 %v926
        %v1151 = vunpack.c.l.b16 %v927
        %v1152 = vunpack.c.l.b16 %v928
        %v1153 = vpack.c.b16 %v1122, %v1121
        %v1154 = vpack.c.b16 %v1124, %v1123
        %v1155 = vpack.c.b16 %v1126, %v1125
        %v1156 = vpack.c.b16 %v1128, %v1127
        %v1157 = vpack.c.b16 %v1130, %v1129
        %v1158 = vpack.c.b16 %v1132, %v1131
        %v1159 = vpack.c.b16 %v1134, %v1133
        %v1160 = vpack.c.b16 %v1136, %v1135
        %v1161 = vpack.c.b16 %v1138, %v1137
        %v1162 = vpack.c.b16 %v1140, %v1139
        %v1163 = vpack.c.b16 %v1142, %v1141
        %v1164 = vpack.c.b16 %v1144, %v1143
        %v1165 = vpack.c.b16 %v1146, %v1145
        %v1166 = vpack.c.b16 %v1148, %v1147
        %v1167 = vpack.c.b16 %v1150, %v1149
        %v1168 = vpack.c.b16 %v1152, %v1151
        %vm1169 = vcmask 326656
        %v1171 = vsel %vm1169, %v1153, 0
        %v1174 = vsel %vm1169, %v1154, 0
        %v1177 = vsel %vm1169, %v1155, 0
        %v1180 = vsel %vm1169, %v1156, 0
        %v1183 = vsel %vm1169, %v1157, 0
        %v1186 = vsel %vm1169, %v1158, 0
        %v1189 = vsel %vm1169, %v1159, 0
        %v1192 = vsel %vm1169, %v1160, 0
        %v1195 = vsel %vm1169, %v1161, 0
        %v1198 = vsel %vm1169, %v1162, 0
        %v1201 = vsel %vm1169, %v1163, 0
        %v1204 = vsel %vm1169, %v1164, 0
        %v1207 = vsel %vm1169, %v1165, 0
        %v1210 = vsel %vm1169, %v1166, 0
        %v1213 = vsel %vm1169, %v1167, 0
        %v1216 = vsel %vm1169, %v1168, 0
        %v1219 = vsel %vm881, %v896, 0
        %1221 = vmatprep.subr.bf16.mxu0 0
        %1222 = vmatpush1.bf16.msra.mxu0 %v894
        %1223 = vmatprep.subr.bf16.mxu0 0
        %1224 = vmatpush1.bf16.msra.mxu0 %v895
        %1225 = vmatprep.subr.bf16.mxu0 0
        %1226 = vmatpush1.bf16.msra.mxu0 %v1219
        %1227 = vmatprep.subr.bf16.mxu0 0
        %1228 = vmatpush1.bf16.msra.mxu0 0
        %1229 = vmatprep.subr.bf16.mxu0 0
        %1230 = vmatpush1.bf16.msra.mxu0 0
        %1231 = vmatprep.subr.bf16.mxu0 0
        %1232 = vmatpush1.bf16.msra.mxu0 0
        %1233 = vmatprep.subr.bf16.mxu0 0
        %1234 = vmatpush1.bf16.msra.mxu0 0
        %1235 = vmatprep.subr.bf16.mxu0 0
        %1236 = vmatpush1.bf16.msra.mxu0 0
        %1237 = vmatprep.subr.bf16.mxu0 0
        %1238 = vmatpush1.bf16.msra.mxu0 0
        %1239 = vmatprep.subr.bf16.mxu0 0
        %1240 = vmatpush1.bf16.msra.mxu0 0
        %1241 = vmatprep.subr.bf16.mxu0 0
        %1242 = vmatpush1.bf16.msra.mxu0 0
        %1243 = vmatprep.subr.bf16.mxu0 0
        %1244 = vmatpush1.bf16.msra.mxu0 0
        %1245 = vmatprep.subr.bf16.mxu0 0
        %1246 = vmatpush1.bf16.msra.mxu0 0
        %1247 = vmatprep.subr.bf16.mxu0 0
        %1248 = vmatpush1.bf16.msra.mxu0 0
        %1249 = vmatprep.subr.bf16.mxu0 0
        %1250 = vmatpush1.bf16.msra.mxu0 0
        %1251 = vmatprep.subr.bf16.mxu0 0
        %1252 = vmatpush1.bf16.msra.mxu0 0
        %1253 = vmatprep.mubr.bf16.mxu0 0
        %1254 = vmatmul.mubr.bf16.gmra.mrb[0].mxu0 %v1171
        %v1255 = vpop.f32.mrb[0].mxu0
        %v1256 = vadd.f32 %v932, %v1255
        %v1257 = vpop.f32.mrb[0].mxu0
        %v1258 = vpop.f32.mrb[0].mxu0
        %v1259 = vadd.f32 %v937, %v1258
        %v1260 = vpop.f32.mrb[0].mxu0
        %1261 = vmatprep.mubr.bf16.mxu0 0
        %1262 = vmatmul.mubr.bf16.gmra.mrb[0].mxu0 %v1174
        %v1263 = vpop.f32.mrb[0].mxu0
        %v1264 = vadd.f32 %v942, %v1263
        %v1265 = vpop.f32.mrb[0].mxu0
        %v1266 = vpop.f32.mrb[0].mxu0
        %v1267 = vadd.f32 %v947, %v1266
        %v1268 = vpop.f32.mrb[0].mxu0
        %1269 = vmatprep.mubr.bf16.mxu0 0
        %1270 = vmatmul.mubr.bf16.gmra.mrb[0].mxu0 %v1177
        %v1271 = vpop.f32.mrb[0].mxu0
        %v1272 = vadd.f32 %v952, %v1271
        %v1273 = vpop.f32.mrb[0].mxu0
        %v1274 = vpop.f32.mrb[0].mxu0
        %v1275 = vadd.f32 %v957, %v1274
        %v1276 = vpop.f32.mrb[0].mxu0
        %1277 = vmatprep.mubr.bf16.mxu0 0
        %1278 = vmatmul.mubr.bf16.gmra.mrb[0].mxu0 %v1180
        %v1279 = vpop.f32.mrb[0].mxu0
        %v1280 = vadd.f32 %v962, %v1279
        %v1281 = vpop.f32.mrb[0].mxu0
        %v1282 = vpop.f32.mrb[0].mxu0
        %v1283 = vadd.f32 %v967, %v1282
        %v1284 = vpop.f32.mrb[0].mxu0
        %1285 = vmatprep.mubr.bf16.mxu0 0
        %1286 = vmatmul.mubr.bf16.gmra.mrb[0].mxu0 %v1183
        %v1287 = vpop.f32.mrb[0].mxu0
        %v1288 = vadd.f32 %v972, %v1287
        %v1289 = vpop.f32.mrb[0].mxu0
        %v1290 = vpop.f32.mrb[0].mxu0
        %v1291 = vadd.f32 %v977, %v1290
        %v1292 = vpop.f32.mrb[0].mxu0
        %1293 = vmatprep.mubr.bf16.mxu0 0
        %1294 = vmatmul.mubr.bf16.gmra.mrb[0].mxu0 %v1186
        %v1295 = vpop.f32.mrb[0].mxu0
        %v1296 = vadd.f32 %v982, %v1295
        %v1297 = vpop.f32.mrb[0].mxu0
        %v1298 = vpop.f32.mrb[0].mxu0
        %v1299 = vadd.f32 %v987, %v1298
        %v1300 = vpop.f32.mrb[0].mxu0
        %1301 = vmatprep.mubr.bf16.mxu0 0
        %1302 = vmatmul.mubr.bf16.gmra.mrb[0].mxu0 %v1189
        %v1303 = vpop.f32.mrb[0].mxu0
        %v1304 = vadd.f32 %v992, %v1303
        %v1305 = vpop.f32.mrb[0].mxu0
        %v1306 = vpop.f32.mrb[0].mxu0
        %v1307 = vadd.f32 %v997, %v1306
        %v1308 = vpop.f32.mrb[0].mxu0
        %1309 = vmatprep.mubr.bf16.mxu0 0
        %1310 = vmatmul.mubr.bf16.gmra.mrb[0].mxu0 %v1192
        %v1311 = vpop.f32.mrb[0].mxu0
        %v1312 = vadd.f32 %v1002, %v1311
        %v1313 = vpop.f32.mrb[0].mxu0
        %v1314 = vpop.f32.mrb[0].mxu0
        %v1315 = vadd.f32 %v1007, %v1314
        %v1316 = vpop.f32.mrb[0].mxu0
        %1317 = vmatprep.mubr.bf16.mxu0 0
        %1318 = vmatmul.mubr.bf16.gmra.mrb[0].mxu0 %v1195
        %v1319 = vpop.f32.mrb[0].mxu0
        %v1320 = vadd.f32 %v1012, %v1319
        %v1321 = vpop.f32.mrb[0].mxu0
        %v1322 = vpop.f32.mrb[0].mxu0
        %v1323 = vadd.f32 %v1017, %v1322
        %v1324 = vpop.f32.mrb[0].mxu0
        %1325 = vmatprep.mubr.bf16.mxu0 0
        %1326 = vmatmul.mubr.bf16.gmra.mrb[0].mxu0 %v1198
        %v1327 = vpop.f32.mrb[0].mxu0
        %v1328 = vadd.f32 %v1022, %v1327
        %v1329 = vpop.f32.mrb[0].mxu0
        %v1330 = vpop.f32.mrb[0].mxu0
        %v1331 = vadd.f32 %v1027, %v1330
        %v1332 = vpop.f32.mrb[0].mxu0
        %1333 = vmatprep.mubr.bf16.mxu0 0
        %1334 = vmatmul.mubr.bf16.gmra.mrb[0].mxu0 %v1201
        %v1335 = vpop.f32.mrb[0].mxu0
        %v1336 = vadd.f32 %v1032, %v1335
        %v1337 = vpop.f32.mrb[0].mxu0
        %v1338 = vpop.f32.mrb[0].mxu0
        %v1339 = vadd.f32 %v1037, %v1338
        %v1340 = vpop.f32.mrb[0].mxu0
        %1341 = vmatprep.mubr.bf16.mxu0 0
        %1342 = vmatmul.mubr.bf16.gmra.mrb[0].mxu0 %v1204
        %v1343 = vpop.f32.mrb[0].mxu0
        %v1344 = vadd.f32 %v1042, %v1343
        %v1345 = vpop.f32.mrb[0].mxu0
        %v1346 = vpop.f32.mrb[0].mxu0
        %v1347 = vadd.f32 %v1047, %v1346
        %v1348 = vpop.f32.mrb[0].mxu0
        %1349 = vmatprep.mubr.bf16.mxu0 0
        %1350 = vmatmul.mubr.bf16.gmra.mrb[0].mxu0 %v1207
        %v1351 = vpop.f32.mrb[0].mxu0
        %v1352 = vadd.f32 %v1052, %v1351
        %v1353 = vpop.f32.mrb[0].mxu0
        %v1354 = vpop.f32.mrb[0].mxu0
        %v1355 = vadd.f32 %v1057, %v1354
        %v1356 = vpop.f32.mrb[0].mxu0
        %1357 = vmatprep.mubr.bf16.mxu0 0
        %1358 = vmatmul.mubr.bf16.gmra.mrb[0].mxu0 %v1210
        %v1359 = vpop.f32.mrb[0].mxu0
        %v1360 = vadd.f32 %v1062, %v1359
        %v1361 = vpop.f32.mrb[0].mxu0
        %v1362 = vpop.f32.mrb[0].mxu0
        %v1363 = vadd.f32 %v1067, %v1362
        %v1364 = vpop.f32.mrb[0].mxu0
        %1365 = vmatprep.mubr.bf16.mxu0 0
        %1366 = vmatmul.mubr.bf16.gmra.mrb[0].mxu0 %v1213
        %v1367 = vpop.f32.mrb[0].mxu0
        %v1368 = vadd.f32 %v1072, %v1367
        %v1369 = vpop.f32.mrb[0].mxu0
        %v1370 = vpop.f32.mrb[0].mxu0
        %v1371 = vadd.f32 %v1077, %v1370
        %v1372 = vpop.f32.mrb[0].mxu0
        %1373 = vmatprep.mubr.bf16.mxu0 0
        %1374 = vmatmul.mubr.bf16.gmra.mrb[0].mxu0 %v1216
        %v1375 = vpop.f32.mrb[0].mxu0
        %v1376 = vadd.f32 %v1082, %v1375
        %v1377 = vpop.f32.mrb[0].mxu0
        %v1378 = vpop.f32.mrb[0].mxu0
        %v1379 = vadd.f32 %v1087, %v1378
        %v1380 = vpop.f32.mrb[0].mxu0
        %1381 = vdwg.mxu0
        %v1382 = vmax.f32 %v1256, 0.0
        %v1383 = vmax.f32 %v1259, 0.0
        %v1384 = vmax.f32 %v1264, 0.0
        %v1385 = vmax.f32 %v1267, 0.0
        %v1386 = vmax.f32 %v1272, 0.0
        %v1387 = vmax.f32 %v1275, 0.0
        %v1388 = vmax.f32 %v1280, 0.0
        %v1389 = vmax.f32 %v1283, 0.0
        %v1390 = vmax.f32 %v1288, 0.0
        %v1391 = vmax.f32 %v1291, 0.0
        %v1392 = vmax.f32 %v1296, 0.0
        %v1393 = vmax.f32 %v1299, 0.0
        %v1394 = vmax.f32 %v1304, 0.0
        %v1395 = vmax.f32 %v1307, 0.0
        %v1396 = vmax.f32 %v1312, 0.0
        %v1397 = vmax.f32 %v1315, 0.0
        %v1398 = vmax.f32 %v1320, 0.0
        %v1399 = vmax.f32 %v1323, 0.0
        %v1400 = vmax.f32 %v1328, 0.0
        %v1401 = vmax.f32 %v1331, 0.0
        %v1402 = vmax.f32 %v1336, 0.0
        %v1403 = vmax.f32 %v1339, 0.0
        %v1404 = vmax.f32 %v1344, 0.0
        %v1405 = vmax.f32 %v1347, 0.0
        %v1406 = vmax.f32 %v1352, 0.0
        %v1407 = vmax.f32 %v1355, 0.0
        %v1408 = vmax.f32 %v1360, 0.0
        %v1409 = vmax.f32 %v1363, 0.0
        %v1410 = vmax.f32 %v1368, 0.0
        %v1411 = vmax.f32 %v1371, 0.0
        %v1412 = vmax.f32 %v1376, 0.0
        %v1413 = vmax.f32 %v1379, 0.0
        %v1414 = vld [vmem:[%s6] sm:$0xff]
        %v1415 = vld [vmem:[%s6 + $0x8] sm:$0xff]
        %v1416 = vld [vmem:[%s6 + $0x10] sm:$0xff]
        %v1417 = vld [vmem:[%s6 + $0x18] sm:$0xff]
        %v1418 = vld [vmem:[%s6 + $0x20] sm:$0xff]
        %v1419 = vld [vmem:[%s6 + $0x28] sm:$0xff]
        %v1420 = vld [vmem:[%s6 + $0x30] sm:$0xff]
        %v1421 = vld [vmem:[%s6 + $0x38] sm:$0xff]
        %v1422 = vld [vmem:[%s6 + $0x40] sm:$0xff]
        %v1423 = vld [vmem:[%s6 + $0x48] sm:$0xff]
        %v1424 = vld [vmem:[%s6 + $0x50] sm:$0xff]
        %v1425 = vld [vmem:[%s6 + $0x58] sm:$0xff]
        %v1426 = vld [vmem:[%s6 + $0x60] sm:$0xff]
        %v1427 = vld [vmem:[%s6 + $0x68] sm:$0xff]
        %v1428 = vld [vmem:[%s6 + $0x70] sm:$0xff]
        %v1429 = vld [vmem:[%s6 + $0x78] sm:$0xff]
        %v1430 = vld [vmem:[%s6 + $0x80] sm:$0xff]
        %v1431 = vld [vmem:[%s6 + $0x88] sm:$0xff]
        %v1432 = vld [vmem:[%s6 + $0x90] sm:$0xff]
        %v1433 = vld [vmem:[%s6 + $0x98] sm:$0xff]
        %v1434 = vld [vmem:[%s6 + $0xa0] sm:$0xff]
        %v1435 = vld [vmem:[%s6 + $0xa8] sm:$0xff]
        %v1436 = vld [vmem:[%s6 + $0xb0] sm:$0xff]
        %v1437 = vld [vmem:[%s6 + $0xb8] sm:$0xff]
        %v1438 = vld [vmem:[%s6 + $0xc0] sm:$0xff]
        %v1439 = vld [vmem:[%s6 + $0xc8] sm:$0xff]
        %v1440 = vld [vmem:[%s6 + $0xd0] sm:$0xff]
        %v1441 = vld [vmem:[%s6 + $0xd8] sm:$0xff]
        %v1442 = vld [vmem:[%s6 + $0xe0] sm:$0xff]
        %v1443 = vld [vmem:[%s6 + $0xe8] sm:$0xff]
        %v1444 = vld [vmem:[%s6 + $0xf0] sm:$0xff]
        %v1445 = vld [vmem:[%s6 + $0xf8] sm:$0xff]
        %v1446 = vpack.c.bf16 %v1383, %v1382
        %v1447 = vpack.c.bf16 %v1385, %v1384
        %v1448 = vpack.c.bf16 %v1387, %v1386
        %v1449 = vpack.c.bf16 %v1389, %v1388
        %v1450 = vpack.c.bf16 %v1391, %v1390
        %v1451 = vpack.c.bf16 %v1393, %v1392
        %v1452 = vpack.c.bf16 %v1395, %v1394
        %v1453 = vpack.c.bf16 %v1397, %v1396
        %v1454 = vpack.c.bf16 %v1399, %v1398
        %v1455 = vpack.c.bf16 %v1401, %v1400
        %v1456 = vpack.c.bf16 %v1403, %v1402
        %v1457 = vpack.c.bf16 %v1405, %v1404
        %v1458 = vpack.c.bf16 %v1407, %v1406
        %v1459 = vpack.c.bf16 %v1409, %v1408
        %v1460 = vpack.c.bf16 %v1411, %v1410
        %v1461 = vpack.c.bf16 %v1413, %v1412
        %v1462 = vld [vmem:[%s7] sm:$0xff]
        %v1463 = vld [vmem:[%s7 + $0x8] sm:$0xff]
        %v1464 = vld [vmem:[%s7 + $0x10] sm:$0xff]
        %v1465 = vld [vmem:[%s7 + $0x18] sm:$0xff]
        %v1466 = vld [vmem:[%s7 + $0x20] sm:$0xff]
        %v1467 = vld [vmem:[%s7 + $0x28] sm:$0xff]
        %v1468 = vld [vmem:[%s7 + $0x30] sm:$0xff]
        %v1469 = vld [vmem:[%s7 + $0x38] sm:$0xff]
        %v1470 = vld [vmem:[%s7 + $0x40] sm:$0xff]
        %v1471 = vld [vmem:[%s7 + $0x48] sm:$0xff]
        %v1472 = vld [vmem:[%s7 + $0x50] sm:$0xff]
        %v1473 = vld [vmem:[%s7 + $0x58] sm:$0xff]
        %v1474 = vld [vmem:[%s7 + $0x60] sm:$0xff]
        %v1475 = vld [vmem:[%s7 + $0x68] sm:$0xff]
        %v1476 = vld [vmem:[%s7 + $0x70] sm:$0xff]
        %v1477 = vld [vmem:[%s7 + $0x78] sm:$0xff]
        %v1478 = vld [vmem:[%s7 + $0x80] sm:$0xff]
        %v1479 = vld [vmem:[%s7 + $0x88] sm:$0xff]
        %v1480 = vld [vmem:[%s7 + $0x90] sm:$0xff]
        %v1481 = vld [vmem:[%s7 + $0x98] sm:$0xff]
        %v1482 = vld [vmem:[%s7 + $0xa0] sm:$0xff]
        %v1483 = vld [vmem:[%s7 + $0xa8] sm:$0xff]
        %v1484 = vld [vmem:[%s7 + $0xb0] sm:$0xff]
        %v1485 = vld [vmem:[%s7 + $0xb8] sm:$0xff]
        %v1486 = vld [vmem:[%s7 + $0xc0] sm:$0xff]
        %v1487 = vld [vmem:[%s7 + $0xc8] sm:$0xff]
        %v1488 = vld [vmem:[%s7 + $0xd0] sm:$0xff]
        %v1489 = vld [vmem:[%s7 + $0xd8] sm:$0xff]
        %v1490 = vld [vmem:[%s7 + $0xe0] sm:$0xff]
        %v1491 = vld [vmem:[%s7 + $0xe8] sm:$0xff]
        %v1492 = vld [vmem:[%s7 + $0xf0] sm:$0xff]
        %v1493 = vld [vmem:[%s7 + $0xf8] sm:$0xff]
        %1495 = vset.pattern.permute.xlu0 0
        %1496 = vperm.xlu0 %1495, %v1462
        %v1497 = vpop.permute.xlu0 %1496
        %1500 = vset.pattern.permute.xlu0 0
        %1501 = vperm.xlu0 %1500, %v1463
        %v1502 = vpop.permute.xlu0 %1501
        %1505 = vset.pattern.permute.xlu0 0
        %1506 = vperm.xlu0 %1505, %v1464
        %v1507 = vpop.permute.xlu0 %1506
        %1510 = vset.pattern.permute.xlu0 0
        %1511 = vperm.xlu0 %1510, %v1465
        %v1512 = vpop.permute.xlu0 %1511
        %1515 = vset.pattern.permute.xlu0 0
        %1516 = vperm.xlu0 %1515, %v1466
        %v1517 = vpop.permute.xlu0 %1516
        %1520 = vset.pattern.permute.xlu0 0
        %1521 = vperm.xlu0 %1520, %v1467
        %v1522 = vpop.permute.xlu0 %1521
        %1525 = vset.pattern.permute.xlu0 0
        %1526 = vperm.xlu0 %1525, %v1468
        %v1527 = vpop.permute.xlu0 %1526
        %1530 = vset.pattern.permute.xlu0 0
        %1531 = vperm.xlu0 %1530, %v1469
        %v1532 = vpop.permute.xlu0 %1531
        %1535 = vset.pattern.permute.xlu0 0
        %1536 = vperm.xlu0 %1535, %v1470
        %v1537 = vpop.permute.xlu0 %1536
        %1540 = vset.pattern.permute.xlu0 0
        %1541 = vperm.xlu0 %1540, %v1471
        %v1542 = vpop.permute.xlu0 %1541
        %1545 = vset.pattern.permute.xlu0 0
        %1546 = vperm.xlu0 %1545, %v1472
        %v1547 = vpop.permute.xlu0 %1546
        %1550 = vset.pattern.permute.xlu0 0
        %1551 = vperm.xlu0 %1550, %v1473
        %v1552 = vpop.permute.xlu0 %1551
        %1555 = vset.pattern.permute.xlu0 0
        %1556 = vperm.xlu0 %1555, %v1474
        %v1557 = vpop.permute.xlu0 %1556
        %1560 = vset.pattern.permute.xlu0 0
        %1561 = vperm.xlu0 %1560, %v1475
        %v1562 = vpop.permute.xlu0 %1561
        %1565 = vset.pattern.permute.xlu0 0
        %1566 = vperm.xlu0 %1565, %v1476
        %v1567 = vpop.permute.xlu0 %1566
        %1570 = vset.pattern.permute.xlu0 0
        %1571 = vperm.xlu0 %1570, %v1477
        %v1572 = vpop.permute.xlu0 %1571
        %1575 = vset.pattern.permute.xlu0 0
        %1576 = vperm.xlu0 %1575, %v1478
        %v1577 = vpop.permute.xlu0 %1576
        %1580 = vset.pattern.permute.xlu0 0
        %1581 = vperm.xlu0 %1580, %v1479
        %v1582 = vpop.permute.xlu0 %1581
        %1585 = vset.pattern.permute.xlu0 0
        %1586 = vperm.xlu0 %1585, %v1480
        %v1587 = vpop.permute.xlu0 %1586
        %1590 = vset.pattern.permute.xlu0 0
        %1591 = vperm.xlu0 %1590, %v1481
        %v1592 = vpop.permute.xlu0 %1591
        %1595 = vset.pattern.permute.xlu0 0
        %1596 = vperm.xlu0 %1595, %v1482
        %v1597 = vpop.permute.xlu0 %1596
        %1600 = vset.pattern.permute.xlu0 0
        %1601 = vperm.xlu0 %1600, %v1483
        %v1602 = vpop.permute.xlu0 %1601
        %1605 = vset.pattern.permute.xlu0 0
        %1606 = vperm.xlu0 %1605, %v1484
        %v1607 = vpop.permute.xlu0 %1606
        %1610 = vset.pattern.permute.xlu0 0
        %1611 = vperm.xlu0 %1610, %v1485
        %v1612 = vpop.permute.xlu0 %1611
        %1615 = vset.pattern.permute.xlu0 0
        %1616 = vperm.xlu0 %1615, %v1486
        %v1617 = vpop.permute.xlu0 %1616
        %1620 = vset.pattern.permute.xlu0 0
        %1621 = vperm.xlu0 %1620, %v1487
        %v1622 = vpop.permute.xlu0 %1621
        %1625 = vset.pattern.permute.xlu0 0
        %1626 = vperm.xlu0 %1625, %v1488
        %v1627 = vpop.permute.xlu0 %1626
        %1630 = vset.pattern.permute.xlu0 0
        %1631 = vperm.xlu0 %1630, %v1489
        %v1632 = vpop.permute.xlu0 %1631
        %1635 = vset.pattern.permute.xlu0 0
        %1636 = vperm.xlu0 %1635, %v1490
        %v1637 = vpop.permute.xlu0 %1636
        %1640 = vset.pattern.permute.xlu0 0
        %1641 = vperm.xlu0 %1640, %v1491
        %v1642 = vpop.permute.xlu0 %1641
        %1645 = vset.pattern.permute.xlu0 0
        %1646 = vperm.xlu0 %1645, %v1492
        %v1647 = vpop.permute.xlu0 %1646
        %1650 = vset.pattern.permute.xlu0 0
        %1651 = vperm.xlu0 %1650, %v1493
        %v1652 = vpop.permute.xlu0 %1651
        %v1686 = vunpack.c.l.b16 %v1414
        %v1687 = vunpack.c.h.b16 %v1414
        %v1688 = vunpack.c.l.b16 %v1415
        %v1689 = vunpack.c.h.b16 %v1415
        %v1690 = vunpack.c.l.b16 %v1416
        %v1691 = vunpack.c.h.b16 %v1416
        %v1692 = vunpack.c.l.b16 %v1417
        %v1693 = vunpack.c.h.b16 %v1417
        %v1694 = vunpack.c.l.b16 %v1418
        %v1695 = vunpack.c.h.b16 %v1418
        %v1696 = vunpack.c.l.b16 %v1419
        %v1697 = vunpack.c.h.b16 %v1419
        %v1698 = vunpack.c.l.b16 %v1420
        %v1699 = vunpack.c.h.b16 %v1420
        %v1700 = vunpack.c.l.b16 %v1421
        %v1701 = vunpack.c.h.b16 %v1421
        %v1702 = vunpack.c.l.b16 %v1422
        %v1703 = vunpack.c.h.b16 %v1422
        %v1704 = vunpack.c.l.b16 %v1423
        %v1705 = vunpack.c.h.b16 %v1423
        %v1706 = vunpack.c.l.b16 %v1424
        %v1707 = vunpack.c.h.b16 %v1424
        %v1708 = vunpack.c.l.b16 %v1425
        %v1709 = vunpack.c.h.b16 %v1425
        %v1710 = vunpack.c.l.b16 %v1426
        %v1711 = vunpack.c.h.b16 %v1426
        %v1712 = vunpack.c.l.b16 %v1427
        %v1713 = vunpack.c.h.b16 %v1427
        %v1714 = vunpack.c.l.b16 %v1428
        %v1715 = vunpack.c.h.b16 %v1428
        %v1716 = vunpack.c.l.b16 %v1429
        %v1717 = vunpack.c.h.b16 %v1429
        %v1718 = vunpack.c.l.b16 %v1430
        %v1719 = vunpack.c.h.b16 %v1430
        %v1720 = vunpack.c.l.b16 %v1431
        %v1721 = vunpack.c.h.b16 %v1431
        %v1722 = vunpack.c.l.b16 %v1432
        %v1723 = vunpack.c.h.b16 %v1432
        %v1724 = vunpack.c.l.b16 %v1433
        %v1725 = vunpack.c.h.b16 %v1433
        %v1726 = vunpack.c.l.b16 %v1434
        %v1727 = vunpack.c.h.b16 %v1434
        %v1728 = vunpack.c.l.b16 %v1435
        %v1729 = vunpack.c.h.b16 %v1435
        %v1730 = vunpack.c.l.b16 %v1436
        %v1731 = vunpack.c.h.b16 %v1436
        %v1732 = vunpack.c.l.b16 %v1437
        %v1733 = vunpack.c.h.b16 %v1437
        %v1734 = vunpack.c.l.b16 %v1438
        %v1735 = vunpack.c.h.b16 %v1438
        %v1736 = vunpack.c.l.b16 %v1439
        %v1737 = vunpack.c.h.b16 %v1439
        %v1738 = vunpack.c.l.b16 %v1440
        %v1739 = vunpack.c.h.b16 %v1440
        %v1740 = vunpack.c.l.b16 %v1441
        %v1741 = vunpack.c.h.b16 %v1441
        %v1742 = vunpack.c.l.b16 %v1442
        %v1743 = vunpack.c.h.b16 %v1442
        %v1744 = vunpack.c.l.b16 %v1443
        %v1745 = vunpack.c.h.b16 %v1443
        %v1746 = vunpack.c.l.b16 %v1444
        %v1747 = vunpack.c.h.b16 %v1444
        %v1748 = vunpack.c.l.b16 %v1445
        %v1749 = vunpack.c.h.b16 %v1445
        %v1750 = vpack.c.b16 %v1688, %v1686
        %v1751 = vpack.c.b16 %v1689, %v1687
        %v1752 = vpack.c.b16 %v1692, %v1690
        %v1753 = vpack.c.b16 %v1693, %v1691
        %v1754 = vpack.c.b16 %v1696, %v1694
        %v1755 = vpack.c.b16 %v1697, %v1695
        %v1756 = vpack.c.b16 %v1700, %v1698
        %v1757 = vpack.c.b16 %v1701, %v1699
        %v1758 = vpack.c.b16 %v1704, %v1702
        %v1759 = vpack.c.b16 %v1705, %v1703
        %v1760 = vpack.c.b16 %v1708, %v1706
        %v1761 = vpack.c.b16 %v1709, %v1707
        %v1762 = vpack.c.b16 %v1712, %v1710
        %v1763 = vpack.c.b16 %v1713, %v1711
        %v1764 = vpack.c.b16 %v1716, %v1714
        %v1765 = vpack.c.b16 %v1717, %v1715
        %v1766 = vpack.c.b16 %v1720, %v1718
        %v1767 = vpack.c.b16 %v1721, %v1719
        %v1768 = vpack.c.b16 %v1724, %v1722
        %v1769 = vpack.c.b16 %v1725, %v1723
        %v1770 = vpack.c.b16 %v1728, %v1726
        %v1771 = vpack.c.b16 %v1729, %v1727
        %v1772 = vpack.c.b16 %v1732, %v1730
        %v1773 = vpack.c.b16 %v1733, %v1731
        %v1774 = vpack.c.b16 %v1736, %v1734
        %v1775 = vpack.c.b16 %v1737, %v1735
        %v1776 = vpack.c.b16 %v1740, %v1738
        %v1777 = vpack.c.b16 %v1741, %v1739
        %v1778 = vpack.c.b16 %v1744, %v1742
        %v1779 = vpack.c.b16 %v1745, %v1743
        %v1780 = vpack.c.b16 %v1748, %v1746
        %v1781 = vpack.c.b16 %v1749, %v1747
        %1814 = vmatprep.subr.bf16.mxu0 0
        %1815 = vmatpush1.bf16.msra.mxu0 %v1446
        %1816 = vmatprep.subr.bf16.mxu0 0
        %1817 = vmatpush1.bf16.msra.mxu0 %v1447
        %1818 = vmatprep.subr.bf16.mxu0 0
        %1819 = vmatpush1.bf16.msra.mxu0 %v1448
        %1820 = vmatprep.subr.bf16.mxu0 0
        %1821 = vmatpush1.bf16.msra.mxu0 %v1449
        %1822 = vmatprep.subr.bf16.mxu0 0
        %1823 = vmatpush1.bf16.msra.mxu0 %v1450
        %1824 = vmatprep.subr.bf16.mxu0 0
        %1825 = vmatpush1.bf16.msra.mxu0 %v1451
        %1826 = vmatprep.subr.bf16.mxu0 0
        %1827 = vmatpush1.bf16.msra.mxu0 %v1452
        %1828 = vmatprep.subr.bf16.mxu0 0
        %1829 = vmatpush1.bf16.msra.mxu0 %v1453
        %1830 = vmatprep.subr.bf16.mxu0 0
        %1831 = vmatpush1.bf16.msra.mxu0 %v1454
        %1832 = vmatprep.subr.bf16.mxu0 0
        %1833 = vmatpush1.bf16.msra.mxu0 %v1455
        %1834 = vmatprep.subr.bf16.mxu0 0
        %1835 = vmatpush1.bf16.msra.mxu0 %v1456
        %1836 = vmatprep.subr.bf16.mxu0 0
        %1837 = vmatpush1.bf16.msra.mxu0 %v1457
        %1838 = vmatprep.subr.bf16.mxu0 0
        %1839 = vmatpush1.bf16.msra.mxu0 %v1458
        %1840 = vmatprep.subr.bf16.mxu0 0
        %1841 = vmatpush1.bf16.msra.mxu0 %v1459
        %1842 = vmatprep.subr.bf16.mxu0 0
        %1843 = vmatpush1.bf16.msra.mxu0 %v1460
        %1844 = vmatprep.subr.bf16.mxu0 0
        %1845 = vmatpush1.bf16.msra.mxu0 %v1461
        %1846 = vmatprep.mubr.bf16.mxu0 %v1751
        %1847 = vmatmul.mubr.bf16.gmra.mrb[0].mxu0 %v1750
        %v1848 = vpop.f32.mrb[0].mxu0
        %v1849 = vadd.f32 %v1497, %v1848
        %v1850 = vpop.f32.mrb[0].mxu0
        %v1851 = vpop.f32.mrb[0].mxu0
        %v1852 = vadd.f32 %v1502, %v1851
        %v1853 = vpop.f32.mrb[0].mxu0
        %1854 = vmatprep.mubr.bf16.mxu0 %v1753
        %1855 = vmatmul.mubr.bf16.gmra.mrb[0].mxu0 %v1752
        %v1856 = vpop.f32.mrb[0].mxu0
        %v1857 = vadd.f32 %v1507, %v1856
        %v1858 = vpop.f32.mrb[0].mxu0
        %v1859 = vpop.f32.mrb[0].mxu0
        %v1860 = vadd.f32 %v1512, %v1859
        %v1861 = vpop.f32.mrb[0].mxu0
        %1862 = vmatprep.mubr.bf16.mxu0 %v1755
        %1863 = vmatmul.mubr.bf16.gmra.mrb[0].mxu0 %v1754
        %v1864 = vpop.f32.mrb[0].mxu0
        %v1865 = vadd.f32 %v1517, %v1864
        %v1866 = vpop.f32.mrb[0].mxu0
        %v1867 = vpop.f32.mrb[0].mxu0
        %v1868 = vadd.f32 %v1522, %v1867
        %v1869 = vpop.f32.mrb[0].mxu0
        %1870 = vmatprep.mubr.bf16.mxu0 %v1757
        %1871 = vmatmul.mubr.bf16.gmra.mrb[0].mxu0 %v1756
        %v1872 = vpop.f32.mrb[0].mxu0
        %v1873 = vadd.f32 %v1527, %v1872
        %v1874 = vpop.f32.mrb[0].mxu0
        %v1875 = vpop.f32.mrb[0].mxu0
        %v1876 = vadd.f32 %v1532, %v1875
        %v1877 = vpop.f32.mrb[0].mxu0
        %1878 = vmatprep.mubr.bf16.mxu0 %v1759
        %1879 = vmatmul.mubr.bf16.gmra.mrb[0].mxu0 %v1758
        %v1880 = vpop.f32.mrb[0].mxu0
        %v1881 = vadd.f32 %v1537, %v1880
        %v1882 = vpop.f32.mrb[0].mxu0
        %v1883 = vpop.f32.mrb[0].mxu0
        %v1884 = vadd.f32 %v1542, %v1883
        %v1885 = vpop.f32.mrb[0].mxu0
        %1886 = vmatprep.mubr.bf16.mxu0 %v1761
        %1887 = vmatmul.mubr.bf16.gmra.mrb[0].mxu0 %v1760
        %v1888 = vpop.f32.mrb[0].mxu0
        %v1889 = vadd.f32 %v1547, %v1888
        %v1890 = vpop.f32.mrb[0].mxu0
        %v1891 = vpop.f32.mrb[0].mxu0
        %v1892 = vadd.f32 %v1552, %v1891
        %v1893 = vpop.f32.mrb[0].mxu0
        %1894 = vmatprep.mubr.bf16.mxu0 %v1763
        %1895 = vmatmul.mubr.bf16.gmra.mrb[0].mxu0 %v1762
        %v1896 = vpop.f32.mrb[0].mxu0
        %v1897 = vadd.f32 %v1557, %v1896
        %v1898 = vpop.f32.mrb[0].mxu0
        %v1899 = vpop.f32.mrb[0].mxu0
        %v1900 = vadd.f32 %v1562, %v1899
        %v1901 = vpop.f32.mrb[0].mxu0
        %1902 = vmatprep.mubr.bf16.mxu0 %v1765
        %1903 = vmatmul.mubr.bf16.gmra.mrb[0].mxu0 %v1764
        %v1904 = vpop.f32.mrb[0].mxu0
        %v1905 = vadd.f32 %v1567, %v1904
        %v1906 = vpop.f32.mrb[0].mxu0
        %v1907 = vpop.f32.mrb[0].mxu0
        %v1908 = vadd.f32 %v1572, %v1907
        %v1909 = vpop.f32.mrb[0].mxu0
        %1910 = vmatprep.mubr.bf16.mxu0 %v1767
        %1911 = vmatmul.mubr.bf16.gmra.mrb[0].mxu0 %v1766
        %v1912 = vpop.f32.mrb[0].mxu0
        %v1913 = vadd.f32 %v1577, %v1912
        %v1914 = vpop.f32.mrb[0].mxu0
        %v1915 = vpop.f32.mrb[0].mxu0
        %v1916 = vadd.f32 %v1582, %v1915
        %v1917 = vpop.f32.mrb[0].mxu0
        %1918 = vmatprep.mubr.bf16.mxu0 %v1769
        %1919 = vmatmul.mubr.bf16.gmra.mrb[0].mxu0 %v1768
        %v1920 = vpop.f32.mrb[0].mxu0
        %v1921 = vadd.f32 %v1587, %v1920
        %v1922 = vpop.f32.mrb[0].mxu0
        %v1923 = vpop.f32.mrb[0].mxu0
        %v1924 = vadd.f32 %v1592, %v1923
        %v1925 = vpop.f32.mrb[0].mxu0
        %1926 = vmatprep.mubr.bf16.mxu0 %v1771
        %1927 = vmatmul.mubr.bf16.gmra.mrb[0].mxu0 %v1770
        %v1928 = vpop.f32.mrb[0].mxu0
        %v1929 = vadd.f32 %v1597, %v1928
        %v1930 = vpop.f32.mrb[0].mxu0
        %v1931 = vpop.f32.mrb[0].mxu0
        %v1932 = vadd.f32 %v1602, %v1931
        %v1933 = vpop.f32.mrb[0].mxu0
        %1934 = vmatprep.mubr.bf16.mxu0 %v1773
        %1935 = vmatmul.mubr.bf16.gmra.mrb[0].mxu0 %v1772
        %v1936 = vpop.f32.mrb[0].mxu0
        %v1937 = vadd.f32 %v1607, %v1936
        %v1938 = vpop.f32.mrb[0].mxu0
        %v1939 = vpop.f32.mrb[0].mxu0
        %v1940 = vadd.f32 %v1612, %v1939
        %v1941 = vpop.f32.mrb[0].mxu0
        %1942 = vmatprep.mubr.bf16.mxu0 %v1775
        %1943 = vmatmul.mubr.bf16.gmra.mrb[0].mxu0 %v1774
        %v1944 = vpop.f32.mrb[0].mxu0
        %v1945 = vadd.f32 %v1617, %v1944
        %v1946 = vpop.f32.mrb[0].mxu0
        %v1947 = vpop.f32.mrb[0].mxu0
        %v1948 = vadd.f32 %v1622, %v1947
        %v1949 = vpop.f32.mrb[0].mxu0
        %1950 = vmatprep.mubr.bf16.mxu0 %v1777
        %1951 = vmatmul.mubr.bf16.gmra.mrb[0].mxu0 %v1776
        %v1952 = vpop.f32.mrb[0].mxu0
        %v1953 = vadd.f32 %v1627, %v1952
        %v1954 = vpop.f32.mrb[0].mxu0
        %v1955 = vpop.f32.mrb[0].mxu0
        %v1956 = vadd.f32 %v1632, %v1955
        %v1957 = vpop.f32.mrb[0].mxu0
        %1958 = vmatprep.mubr.bf16.mxu0 %v1779
        %1959 = vmatmul.mubr.bf16.gmra.mrb[0].mxu0 %v1778
        %v1960 = vpop.f32.mrb[0].mxu0
        %v1961 = vadd.f32 %v1637, %v1960
        %v1962 = vpop.f32.mrb[0].mxu0
        %v1963 = vpop.f32.mrb[0].mxu0
        %v1964 = vadd.f32 %v1642, %v1963
        %v1965 = vpop.f32.mrb[0].mxu0
        %1966 = vmatprep.mubr.bf16.mxu0 %v1781
        %1967 = vmatmul.mubr.bf16.gmra.mrb[0].mxu0 %v1780
        %v1968 = vpop.f32.mrb[0].mxu0
        %v1969 = vadd.f32 %v1647, %v1968
        %v1970 = vpop.f32.mrb[0].mxu0
        %v1971 = vpop.f32.mrb[0].mxu0
        %v1972 = vadd.f32 %v1652, %v1971
        %v1973 = vpop.f32.mrb[0].mxu0
        %1974 = vdwg.mxu0
        %v1975 = vmax.f32 %v1849, 0.0
        %v1976 = vmax.f32 %v1852, 0.0
        %v1977 = vmax.f32 %v1857, 0.0
        %v1978 = vmax.f32 %v1860, 0.0
        %v1979 = vmax.f32 %v1865, 0.0
        %v1980 = vmax.f32 %v1868, 0.0
        %v1981 = vmax.f32 %v1873, 0.0
        %v1982 = vmax.f32 %v1876, 0.0
        %v1983 = vmax.f32 %v1881, 0.0
        %v1984 = vmax.f32 %v1884, 0.0
        %v1985 = vmax.f32 %v1889, 0.0
        %v1986 = vmax.f32 %v1892, 0.0
        %v1987 = vmax.f32 %v1897, 0.0
        %v1988 = vmax.f32 %v1900, 0.0
        %v1989 = vmax.f32 %v1905, 0.0
        %v1990 = vmax.f32 %v1908, 0.0
        %v1991 = vmax.f32 %v1913, 0.0
        %v1992 = vmax.f32 %v1916, 0.0
        %v1993 = vmax.f32 %v1921, 0.0
        %v1994 = vmax.f32 %v1924, 0.0
        %v1995 = vmax.f32 %v1929, 0.0
        %v1996 = vmax.f32 %v1932, 0.0
        %v1997 = vmax.f32 %v1937, 0.0
        %v1998 = vmax.f32 %v1940, 0.0
        %v1999 = vmax.f32 %v1945, 0.0
        %v2000 = vmax.f32 %v1948, 0.0
        %v2001 = vmax.f32 %v1953, 0.0
        %v2002 = vmax.f32 %v1956, 0.0
        %v2003 = vmax.f32 %v1961, 0.0
        %v2004 = vmax.f32 %v1964, 0.0
        %v2005 = vmax.f32 %v1969, 0.0
        %v2006 = vmax.f32 %v1972, 0.0
        %v2007 = vld [vmem:[%s8] sm:$0xf]
        %v2008 = vpack.c.bf16 %v1976, %v1975
        %v2009 = vpack.c.bf16 %v1978, %v1977
        %v2010 = vpack.c.bf16 %v1980, %v1979
        %v2011 = vpack.c.bf16 %v1982, %v1981
        %v2012 = vpack.c.bf16 %v1984, %v1983
        %v2013 = vpack.c.bf16 %v1986, %v1985
        %v2014 = vpack.c.bf16 %v1988, %v1987
        %v2015 = vpack.c.bf16 %v1990, %v1989
        %v2016 = vpack.c.bf16 %v1992, %v1991
        %v2017 = vpack.c.bf16 %v1994, %v1993
        %v2018 = vpack.c.bf16 %v1996, %v1995
        %v2019 = vpack.c.bf16 %v1998, %v1997
        %v2020 = vpack.c.bf16 %v2000, %v1999
        %v2021 = vpack.c.bf16 %v2002, %v2001
        %v2022 = vpack.c.bf16 %v2004, %v2003
        %v2023 = vpack.c.bf16 %v2006, %v2005
        %v2024 = vld [vmem:[%s9] sm:$0x7]
        %2026 = vset.pattern.permute.xlu0 0
        %2027 = vperm.xlu0 %2026, %v2024
        %v2028 = vpop.permute.xlu0 %2027
        %v2032 = vunpack.c.l.s4 1983009808
        %v2033 = vunpack.c.0.s8 %v2032
        %v2034 = vlaneseq
        %v2035 = vshrl.u32 %v2034, 7
        %v2036 = vsub.s32 %v2033, %v2035
        %v2037 = vrot.slane %v2007, %v2036
        %v2038 = vcombine.high %v2037, %v2037
        %2041 = vmatprep.subr.bf16.mxu0 0
        %2042 = vmatpush1.bf16.msra.mxu0 %v2008
        %2043 = vmatprep.subr.bf16.mxu0 0
        %2044 = vmatpush1.bf16.msra.mxu0 %v2009
        %2045 = vmatprep.subr.bf16.mxu0 0
        %2046 = vmatpush1.bf16.msra.mxu0 %v2010
        %2047 = vmatprep.subr.bf16.mxu0 0
        %2048 = vmatpush1.bf16.msra.mxu0 %v2011
        %2049 = vmatprep.subr.bf16.mxu0 0
        %2050 = vmatpush1.bf16.msra.mxu0 %v2012
        %2051 = vmatprep.subr.bf16.mxu0 0
        %2052 = vmatpush1.bf16.msra.mxu0 %v2013
        %2053 = vmatprep.subr.bf16.mxu0 0
        %2054 = vmatpush1.bf16.msra.mxu0 %v2014
        %2055 = vmatprep.subr.bf16.mxu0 0
        %2056 = vmatpush1.bf16.msra.mxu0 %v2015
        %2057 = vmatprep.subr.bf16.mxu0 0
        %2058 = vmatpush1.bf16.msra.mxu0 %v2016
        %2059 = vmatprep.subr.bf16.mxu0 0
        %2060 = vmatpush1.bf16.msra.mxu0 %v2017
        %2061 = vmatprep.subr.bf16.mxu0 0
        %2062 = vmatpush1.bf16.msra.mxu0 %v2018
        %2063 = vmatprep.subr.bf16.mxu0 0
        %2064 = vmatpush1.bf16.msra.mxu0 %v2019
        %2065 = vmatprep.subr.bf16.mxu0 0
        %2066 = vmatpush1.bf16.msra.mxu0 %v2020
        %2067 = vmatprep.subr.bf16.mxu0 0
        %2068 = vmatpush1.bf16.msra.mxu0 %v2021
        %2069 = vmatprep.subr.bf16.mxu0 0
        %2070 = vmatpush1.bf16.msra.mxu0 %v2022
        %2071 = vmatprep.subr.bf16.mxu0 0
        %2072 = vmatpush1.bf16.msra.mxu0 %v2023
        %2073 = vmatprep.mubr.bf16.mxu0 %v2038
        %2074 = vmatmul.mubr.bf16.gmra.mrb[0].mxu0 %v2037
        %v2075 = vpop.f32.mrb[0].mxu0
        %v2076 = vadd.f32 %v2028, %v2075
        %v2077 = vpop.f32.mrb[0].mxu0
        %v2078 = vpop.f32.mrb[0].mxu0
        %v2079 = vpop.f32.mrb[0].mxu0
        %2080 = vdwg.mxu0
        %v2081 = vadd.f32 %v582, %v2076
        %v2082 = vld [vmem:[%s565] sm:$0xff]
        %v2083 = vld [vmem:[%s565 + $0x8] sm:$0xff]
        %v2084 = vld [vmem:[%s565 + $0x10] sm:$0xff]
        %v2085 = vld [vmem:[%s565 + $0x18] sm:$0xff]
        %v2086 = vld [vmem:[%s565 + $0x20] sm:$0xff]
        %v2087 = vld [vmem:[%s565 + $0x28] sm:$0xff]
        %v2088 = vld [vmem:[%s565 + $0x30] sm:$0xff]
        %v2089 = vld [vmem:[%s565 + $0x38] sm:$0xff]
        %v2090 = vld [vmem:[%s569] sm:$0xff]
        %v2091 = vld [vmem:[%s573] sm:$0xff]
        %v2092 = vand.u32 2147483647, %v2081
        %vm2093 = vcmp.le.f32.partialorder %v2092, 0.7853982
        %vm2094 = vcmp.lt.s32.totalorder %v2081, 0
        %v2095 = vand.u32 %v2081, 2139095040
        %v2096 = vshrl.u32 %v2095, 23
        %v2097 = vsub.s32 %v2096, 127
        %v2098 = vand.u32 2147483647, %v2081
        %v2099 = vand.u32 %v2098, 8388607
        %v2100 = vor.u32 %v2099, 8388608
        %v2101 = vsub.s32 0, %v2100
        %v2102 = vadd.s32 %v2097, 1
        %vm2103 = vcmp.gt.s32.totalorder %v2102, 0
        %v2104 = vsel %vm2103, %v2102, 0
        %v2105 = vshrl.u32 %v2104, 5
        %v2106 = vand.u32 %v2104, 31
        %v2107 = vsub.s32 32, %v2106
        %v2108 = vshrl.u32 683565275, %v2107
        %v2109 = vshll.u32 683565275, %v2106
        %v2110 = vshrl.u32 2475754826, %v2107
        %v2111 = vor.u32 %v2109, %v2110
        %v2112 = vshll.u32 2475754826, %v2106
        %v2113 = vshrl.u32 2131351028, %v2107
        %v2114 = vor.u32 %v2112, %v2113
        %v2115 = vshll.u32 2131351028, %v2106
        %v2116 = vshrl.u32 2102212464, %v2107
        %v2117 = vor.u32 %v2115, %v2116
        %v2118 = vshll.u32 2102212464, %v2106
        %v2119 = vshrl.u32 920167782, %v2107
        %v2120 = vor.u32 %v2118, %v2119
        %v2121 = vshll.u32 920167782, %v2106
        %v2122 = vshrl.u32 1326507024, %v2107
        %v2123 = vor.u32 %v2121, %v2122
        %vm2124 = vcmp.lt.s32.totalorder %v2105, 1
        %vm2125 = vcmp.lt.s32.totalorder %v2105, 2
        %vm2126 = vcmp.lt.s32.totalorder %v2105, 3
        %vm2127 = vcmp.lt.s32.totalorder %v2105, 4
        %v2128 = vsel %vm2124, %v2108, %v2111
        %v2129 = vsel %vm2127, %v2117, 2102212464
        %v2130 = vsel %vm2126, %v2114, %v2129
        %v2131 = vsel %vm2125, %v2128, %v2130
        %v2132 = vsel %vm2124, %v2111, %v2114
        %v2133 = vsel %vm2127, %v2120, 920167782
        %v2134 = vsel %vm2126, %v2117, %v2133
        %v2135 = vsel %vm2125, %v2132, %v2134
        %v2136 = vsel %vm2124, %v2114, %v2117
        %v2137 = vsel %vm2127, %v2123, 1326507024
        %v2138 = vsel %vm2126, %v2120, %v2137
        %v2139 = vsel %vm2125, %v2136, %v2138
        %v2140 = vshll.u32 %v2100, 8
        %v2141 = vmul.u32.u64.compose %v2140, %v2139
        %v2142 = vextract.low.u32 %v2141
        %v2143 = vextract.high.u32 %v2141
        %v2144 = vmul.u32.u64.compose %v2140, %v2135
        %v2145 = vextract.low.u32 %v2144
        %v2146 = vextract.high.u32 %v2144
        %v2147 = vmul.u32 %v2140, %v2131
        %v2148 = vadd.s32 %v2143, %v2145
        %vm2149 = vc.u32 %v2143, %v2145
        %v2150 = vadd.s32 %v2146, 1
        %v2151 = vsel %vm2149, %v2150, %v2146
        %v2152 = vadd.s32 %v2147, %v2151
        %v2153 = vadd.s32 %v2152, 536870912
        %v2154 = vshrl.u32 %v2153, 30
        %v2155 = vshll.u32 %v2154, 30
        %v2156 = vsub.s32 %v2152, %v2155
        %vm2157 = vcmp.lt.s32.totalorder %v2156, 0
        %v2158 = vsub.s32 0, %v2156
        %v2159 = vsel %vm2157, %v2158, %v2156
        %v2160 = vclz %v2159
        %v2161 = vsub.s32 %v2160, 2
        %vm2162 = vcmp.gt.s32.totalorder 0, %v2161
        %v2163 = vsel %vm2162, 0, %v2161
        %v2164 = vsub.s32 32, %v2163
        %v2165 = vshll.u32 %v2156, %v2163
        %v2166 = vshrl.u32 %v2148, %v2164
        %v2167 = vor.u32 %v2165, %v2166
        %v2168 = vsub.s32 4294967266, %v2163
        %v2169 = vadd.s32 %v2168, 127
        %v2170 = vshll.u32 %v2169, 23
        %v2171 = vor.u32 4788187, %v2170
        %v2172 = vand.u32 2147483647, %v2171
        %v2174 = vcvt.s32.f32 %v2167
        %v2175 = vmul.f32 %v2174, %v2172
        %v2176 = vxor.u32 %v2175, 2147483648
        %v2177 = vsel %vm2094, %v2176, %v2175
        %v2178 = vsub.s32 4, %v2154
        %v2179 = vsel %vm2094, %v2178, %v2154
        %v2180 = vsel %vm2093, %v2081, %v2177
        %v2181 = vsel %vm2093, 0, %v2179
        %v2182 = vcosq.f32.pop %v2180
        %v2183 = vsinq.f32.pop %v2180
        %vm2184 = vweird.f32 %v2081
        %v2185 = vadd.s32 %v2181, 3
        %v2186 = vand.u32 %v2185, 3
        %vm2187 = vcmp.lt.s32.totalorder %v2186, 2
        %vm2188 = vcmp.eq.s32.totalorder %v2186, 0
        %v2189 = vxor.u32 %v2183, 2147483648
        %v2190 = vsel %vm2188, %v2182, %v2189
        %vm2191 = vcmp.eq.s32.totalorder %v2186, 2
        %v2192 = vxor.u32 %v2182, 2147483648
        %v2193 = vsel %vm2191, %v2192, %v2183
        %v2194 = vsel %vm2187, %v2190, %v2193
        %v2195 = vsel %vm2184, nan, %v2194
        %v2196 = vand.u32 2147483647, %v2081
        %vm2197 = vcmp.le.f32.partialorder %v2196, 0.7853982
        %vm2198 = vcmp.lt.s32.totalorder %v2081, 0
        %v2199 = vand.u32 %v2081, 2139095040
        %v2200 = vshrl.u32 %v2199, 23
        %v2201 = vsub.s32 %v2200, 127
        %v2202 = vand.u32 2147483647, %v2081
        %v2203 = vand.u32 %v2202, 8388607
        %v2204 = vor.u32 %v2203, 8388608
        %v2205 = vsub.s32 0, %v2204
        %v2206 = vadd.s32 %v2201, 1
        %vm2207 = vcmp.gt.s32.totalorder %v2206, 0
        %v2208 = vsel %vm2207, %v2206, 0
        %v2209 = vshrl.u32 %v2208, 5
        %v2210 = vand.u32 %v2208, 31
        %v2211 = vsub.s32 32, %v2210
        %v2212 = vshrl.u32 683565275, %v2211
        %v2213 = vshll.u32 683565275, %v2210
        %v2214 = vshrl.u32 2475754826, %v2211
        %v2215 = vor.u32 %v2213, %v2214
        %v2216 = vshll.u32 2475754826, %v2210
        %v2217 = vshrl.u32 2131351028, %v2211
        %v2218 = vor.u32 %v2216, %v2217
        %v2219 = vshll.u32 2131351028, %v2210
        %v2220 = vshrl.u32 2102212464, %v2211
        %v2221 = vor.u32 %v2219, %v2220
        %v2222 = vshll.u32 2102212464, %v2210
        %v2223 = vshrl.u32 920167782, %v2211
        %v2224 = vor.u32 %v2222, %v2223
        %v2225 = vshll.u32 920167782, %v2210
        %v2226 = vshrl.u32 1326507024, %v2211
        %v2227 = vor.u32 %v2225, %v2226
        %vm2228 = vcmp.lt.s32.totalorder %v2209, 1
        %vm2229 = vcmp.lt.s32.totalorder %v2209, 2
        %vm2230 = vcmp.lt.s32.totalorder %v2209, 3
        %vm2231 = vcmp.lt.s32.totalorder %v2209, 4
        %v2232 = vsel %vm2228, %v2212, %v2215
        %v2233 = vsel %vm2231, %v2221, 2102212464
        %v2234 = vsel %vm2230, %v2218, %v2233
        %v2235 = vsel %vm2229, %v2232, %v2234
        %v2236 = vsel %vm2228, %v2215, %v2218
        %v2237 = vsel %vm2231, %v2224, 920167782
        %v2238 = vsel %vm2230, %v2221, %v2237
        %v2239 = vsel %vm2229, %v2236, %v2238
        %v2240 = vsel %vm2228, %v2218, %v2221
        %v2241 = vsel %vm2231, %v2227, 1326507024
        %v2242 = vsel %vm2230, %v2224, %v2241
        %v2243 = vsel %vm2229, %v2240, %v2242
        %v2244 = vshll.u32 %v2204, 8
        %v2245 = vmul.u32.u64.compose %v2244, %v2243
        %v2246 = vextract.low.u32 %v2245
        %v2247 = vextract.high.u32 %v2245
        %v2248 = vmul.u32.u64.compose %v2244, %v2239
        %v2249 = vextract.low.u32 %v2248
        %v2250 = vextract.high.u32 %v2248
        %v2251 = vmul.u32 %v2244, %v2235
        %v2252 = vadd.s32 %v2247, %v2249
        %vm2253 = vc.u32 %v2247, %v2249
        %v2254 = vadd.s32 %v2250, 1
        %v2255 = vsel %vm2253, %v2254, %v2250
        %v2256 = vadd.s32 %v2251, %v2255
        %v2257 = vadd.s32 %v2256, 536870912
        %v2258 = vshrl.u32 %v2257, 30
        %v2259 = vshll.u32 %v2258, 30
        %v2260 = vsub.s32 %v2256, %v2259
        %vm2261 = vcmp.lt.s32.totalorder %v2260, 0
        %v2262 = vsub.s32 0, %v2260
        %v2263 = vsel %vm2261, %v2262, %v2260
        %v2264 = vclz %v2263
        %v2265 = vsub.s32 %v2264, 2
        %vm2266 = vcmp.gt.s32.totalorder 0, %v2265
        %v2267 = vsel %vm2266, 0, %v2265
        %v2268 = vsub.s32 32, %v2267
        %v2269 = vshll.u32 %v2260, %v2267
        %v2270 = vshrl.u32 %v2252, %v2268
        %v2271 = vor.u32 %v2269, %v2270
        %v2272 = vsub.s32 4294967266, %v2267
        %v2273 = vadd.s32 %v2272, 127
        %v2274 = vshll.u32 %v2273, 23
        %v2275 = vor.u32 4788187, %v2274
        %v2276 = vand.u32 2147483647, %v2275
        %v2278 = vcvt.s32.f32 %v2271
        %v2279 = vmul.f32 %v2278, %v2276
        %v2280 = vxor.u32 %v2279, 2147483648
        %v2281 = vsel %vm2198, %v2280, %v2279
        %v2282 = vsub.s32 4, %v2258
        %v2283 = vsel %vm2198, %v2282, %v2258
        %v2284 = vsel %vm2197, %v2081, %v2281
        %v2285 = vsel %vm2197, 0, %v2283
        %v2286 = vcosq.f32.pop %v2284
        %v2287 = vsinq.f32.pop %v2284
        %vm2288 = vweird.f32 %v2081
        %v2289 = vand.u32 %v2285, 3
        %vm2290 = vcmp.lt.s32.totalorder %v2289, 2
        %vm2291 = vcmp.eq.s32.totalorder %v2289, 0
        %v2292 = vxor.u32 %v2287, 2147483648
        %v2293 = vsel %vm2291, %v2286, %v2292
        %vm2294 = vcmp.eq.s32.totalorder %v2289, 2
        %v2295 = vxor.u32 %v2286, 2147483648
        %v2296 = vsel %vm2294, %v2295, %v2287
        %v2297 = vsel %vm2290, %v2293, %v2296
        %v2298 = vsel %vm2288, nan, %v2297
        %v2299 = vmul.f32 %v2195, 2.0
        %v2300 = vmul.f32 %v2299, %v2298
        %v2301 = vmul.f32 %v2299, %v2195
        %v2302 = vsub.f32 1.0, %v2301
        %v2303 = vmul.f32 %v2300, 2.0
        %v2304 = vmul.f32 %v2303, %v2302
        %v2305 = vmul.f32 %v2303, %v2300
        %v2306 = vsub.f32 1.0, %v2305
        %v2307 = vmul.f32 %v2304, 2.0
        %v2308 = vmul.f32 %v2307, %v2306
        %v2309 = vmul.f32 %v2307, %v2304
        %v2310 = vsub.f32 1.0, %v2309
        %v2311 = vmul.f32 %v2308, 2.0
        %v2312 = vmul.f32 %v2311, %v2310
        %v2313 = vmul.f32 %v2311, %v2308
        %v2314 = vsub.f32 1.0, %v2313
        %v2315 = vmul.f32 %v2312, 2.0
        %v2316 = vmul.f32 %v2315, %v2314
        %v2317 = vmul.f32 %v2315, %v2312
        %v2318 = vsub.f32 1.0, %v2317
        %v2320 = vrot.slane %v2195, 5
        %v2323 = vrot.slane %v2298, 2
        %v2326 = vrot.slane %v2300, 7
        %v2329 = vrot.slane %v2302, 4
        %v2332 = vrot.slane %v2304, 1
        %v2335 = vrot.slane %v2306, 6
        %v2338 = vrot.slane %v2308, 3
        %v2341 = vrot.slane %v2312, 5
        %v2344 = vrot.slane %v2314, 2
        %v2347 = vrot.slane %v2316, 7
        %v2350 = vrot.slane %v2318, 4
        %v2352 = vsel %vm875, %v2081, %v2320
        %v2353 = vsel %vm877, %v2352, %v2323
        %v2354 = vsel %vm879, %v2323, %v2326
        %v2355 = vsel %vm881, %v2354, %v2329
        %v2356 = vsel %vm883, %v2355, %v2332
        %v2357 = vsel %vm885, %v2332, %v2335
        %v2358 = vsel %vm887, %v2357, %v2338
        %v2359 = vsel %vm875, %v2310, %v2341
        %v2360 = vsel %vm877, %v2359, %v2344
        %v2361 = vsel %vm879, %v2344, %v2347
        %v2362 = vsel %vm881, %v2361, %v2350
        %v2363 = vsel %vm883, %v2362, 0.0
        %v2364 = vpack.c.bf16 %v2356, %v2353
        %v2365 = vpack.c.bf16 %v2360, %v2358
        %v2366 = vpack.c.bf16 %v2363, %v2363
        %v2367 = vld [vmem:[%s10] sm:$0xf]
        %v2368 = vld [vmem:[%s10 + $0x4] sm:$0xf]
        %v2369 = vld [vmem:[%s10 + $0x8] sm:$0xf]
        %v2370 = vld [vmem:[%s10 + $0xc] sm:$0xf]
        %v2371 = vld [vmem:[%s10 + $0x10] sm:$0xf]
        %v2372 = vld [vmem:[%s10 + $0x14] sm:$0xf]
        %v2373 = vld [vmem:[%s10 + $0x18] sm:$0xf]
        %v2374 = vld [vmem:[%s10 + $0x1c] sm:$0xf]
        %2376 = vset.pattern.permute.xlu0 0
        %2377 = vperm.xlu0 %2376, %v2082
        %v2378 = vpop.permute.xlu0 %2377
        %2381 = vset.pattern.permute.xlu0 0
        %2382 = vperm.xlu0 %2381, %v2083
        %v2383 = vpop.permute.xlu0 %2382
        %2386 = vset.pattern.permute.xlu0 0
        %2387 = vperm.xlu0 %2386, %v2084
        %v2388 = vpop.permute.xlu0 %2387
        %2391 = vset.pattern.permute.xlu0 0
        %2392 = vperm.xlu0 %2391, %v2085
        %v2393 = vpop.permute.xlu0 %2392
        %2396 = vset.pattern.permute.xlu0 0
        %2397 = vperm.xlu0 %2396, %v2086
        %v2398 = vpop.permute.xlu0 %2397
        %2401 = vset.pattern.permute.xlu0 0
        %2402 = vperm.xlu0 %2401, %v2087
        %v2403 = vpop.permute.xlu0 %2402
        %2406 = vset.pattern.permute.xlu0 0
        %2407 = vperm.xlu0 %2406, %v2088
        %v2408 = vpop.permute.xlu0 %2407
        %2411 = vset.pattern.permute.xlu0 0
        %2412 = vperm.xlu0 %2411, %v2089
        %v2413 = vpop.permute.xlu0 %2412
        %v2423 = vunpack.c.l.b16 %v2367
        %v2424 = vunpack.c.l.b16 %v2368
        %v2425 = vunpack.c.l.b16 %v2369
        %v2426 = vunpack.c.l.b16 %v2370
        %v2427 = vunpack.c.l.b16 %v2371
        %v2428 = vunpack.c.l.b16 %v2372
        %v2429 = vunpack.c.l.b16 %v2373
        %v2430 = vunpack.c.l.b16 %v2374
        %v2431 = vpack.c.b16 %v2424, %v2423
        %v2432 = vpack.c.b16 %v2426, %v2425
        %v2433 = vpack.c.b16 %v2428, %v2427
        %v2434 = vpack.c.b16 %v2430, %v2429
        %v2436 = vsel %vm1169, %v2431, 0
        %v2439 = vsel %vm1169, %v2432, 0
        %v2442 = vsel %vm1169, %v2433, 0
        %v2445 = vsel %vm1169, %v2434, 0
        %v2448 = vsel %vm881, %v2366, 0
        %2450 = vmatprep.subr.bf16.mxu0 0
        %2451 = vmatpush1.bf16.msra.mxu0 %v2364
        %2452 = vmatprep.subr.bf16.mxu0 0
        %2453 = vmatpush1.bf16.msra.mxu0 %v2365
        %2454 = vmatprep.subr.bf16.mxu0 0
        %2455 = vmatpush1.bf16.msra.mxu0 %v2448
        %2456 = vmatprep.subr.bf16.mxu0 0
        %2457 = vmatpush1.bf16.msra.mxu0 0
        %2458 = vmatprep.subr.bf16.mxu0 0
        %2459 = vmatpush1.bf16.msra.mxu0 0
        %2460 = vmatprep.subr.bf16.mxu0 0
        %2461 = vmatpush1.bf16.msra.mxu0 0
        %2462 = vmatprep.subr.bf16.mxu0 0
        %2463 = vmatpush1.bf16.msra.mxu0 0
        %2464 = vmatprep.subr.bf16.mxu0 0
        %2465 = vmatpush1.bf16.msra.mxu0 0
        %2466 = vmatprep.subr.bf16.mxu0 0
        %2467 = vmatpush1.bf16.msra.mxu0 0
        %2468 = vmatprep.subr.bf16.mxu0 0
        %2469 = vmatpush1.bf16.msra.mxu0 0
        %2470 = vmatprep.subr.bf16.mxu0 0
        %2471 = vmatpush1.bf16.msra.mxu0 0
        %2472 = vmatprep.subr.bf16.mxu0 0
        %2473 = vmatpush1.bf16.msra.mxu0 0
        %2474 = vmatprep.subr.bf16.mxu0 0
        %2475 = vmatpush1.bf16.msra.mxu0 0
        %2476 = vmatprep.subr.bf16.mxu0 0
        %2477 = vmatpush1.bf16.msra.mxu0 0
        %2478 = vmatprep.subr.bf16.mxu0 0
        %2479 = vmatpush1.bf16.msra.mxu0 0
        %2480 = vmatprep.subr.bf16.mxu0 0
        %2481 = vmatpush1.bf16.msra.mxu0 0
        %2482 = vmatprep.mubr.bf16.mxu0 0
        %2483 = vmatmul.mubr.bf16.gmra.mrb[0].mxu0 %v2436
        %v2484 = vpop.f32.mrb[0].mxu0
        %v2485 = vadd.f32 %v2378, %v2484
        %v2486 = vpop.f32.mrb[0].mxu0
        %v2487 = vpop.f32.mrb[0].mxu0
        %v2488 = vadd.f32 %v2383, %v2487
        %v2489 = vpop.f32.mrb[0].mxu0
        %2490 = vmatprep.mubr.bf16.mxu0 0
        %2491 = vmatmul.mubr.bf16.gmra.mrb[0].mxu0 %v2439
        %v2492 = vpop.f32.mrb[0].mxu0
        %v2493 = vadd.f32 %v2388, %v2492
        %v2494 = vpop.f32.mrb[0].mxu0
        %v2495 = vpop.f32.mrb[0].mxu0
        %v2496 = vadd.f32 %v2393, %v2495
        %v2497 = vpop.f32.mrb[0].mxu0
        %2498 = vmatprep.mubr.bf16.mxu0 0
        %2499 = vmatmul.mubr.bf16.gmra.mrb[0].mxu0 %v2442
        %v2500 = vpop.f32.mrb[0].mxu0
        %v2501 = vadd.f32 %v2398, %v2500
        %v2502 = vpop.f32.mrb[0].mxu0
        %v2503 = vpop.f32.mrb[0].mxu0
        %v2504 = vadd.f32 %v2403, %v2503
        %v2505 = vpop.f32.mrb[0].mxu0
        %2506 = vmatprep.mubr.bf16.mxu0 0
        %2507 = vmatmul.mubr.bf16.gmra.mrb[0].mxu0 %v2445
        %v2508 = vpop.f32.mrb[0].mxu0
        %v2509 = vadd.f32 %v2408, %v2508
        %v2510 = vpop.f32.mrb[0].mxu0
        %v2511 = vpop.f32.mrb[0].mxu0
        %v2512 = vadd.f32 %v2413, %v2511
        %v2513 = vpop.f32.mrb[0].mxu0
        %2514 = vdwg.mxu0
        %v2515 = vmax.f32 %v2485, 0.0
        %v2516 = vmax.f32 %v2488, 0.0
        %v2517 = vmax.f32 %v2493, 0.0
        %v2518 = vmax.f32 %v2496, 0.0
        %v2519 = vmax.f32 %v2501, 0.0
        %v2520 = vmax.f32 %v2504, 0.0
        %v2521 = vmax.f32 %v2509, 0.0
        %v2522 = vmax.f32 %v2512, 0.0
        %v2523 = vld [vmem:[%s11] sm:$0xf]
        %v2524 = vpack.c.bf16 %v2516, %v2515
        %v2525 = vpack.c.bf16 %v2518, %v2517
        %v2526 = vpack.c.bf16 %v2520, %v2519
        %v2527 = vpack.c.bf16 %v2522, %v2521
        %v2528 = vld [vmem:[%s12] sm:$0xff]
        %2530 = vset.pattern.permute.xlu0 0
        %2531 = vperm.xlu0 %2530, %v2528
        %v2532 = vpop.permute.xlu0 %2531
        %vm2534 = vcmask 523264
        %v2536 = vsel %vm2534, %v2523, 0
        %2538 = vmatprep.subr.bf16.mxu0 0
        %2539 = vmatpush1.bf16.msra.mxu0 %v2524
        %2540 = vmatprep.subr.bf16.mxu0 0
        %2541 = vmatpush1.bf16.msra.mxu0 %v2525
        %2542 = vmatprep.subr.bf16.mxu0 0
        %2543 = vmatpush1.bf16.msra.mxu0 %v2526
        %2544 = vmatprep.subr.bf16.mxu0 0
        %2545 = vmatpush1.bf16.msra.mxu0 %v2527
        %2546 = vmatprep.subr.bf16.mxu0 0
        %2547 = vmatpush1.bf16.msra.mxu0 0
        %2548 = vmatprep.subr.bf16.mxu0 0
        %2549 = vmatpush1.bf16.msra.mxu0 0
        %2550 = vmatprep.subr.bf16.mxu0 0
        %2551 = vmatpush1.bf16.msra.mxu0 0
        %2552 = vmatprep.subr.bf16.mxu0 0
        %2553 = vmatpush1.bf16.msra.mxu0 0
        %2554 = vmatprep.subr.bf16.mxu0 0
        %2555 = vmatpush1.bf16.msra.mxu0 0
        %2556 = vmatprep.subr.bf16.mxu0 0
        %2557 = vmatpush1.bf16.msra.mxu0 0
        %2558 = vmatprep.subr.bf16.mxu0 0
        %2559 = vmatpush1.bf16.msra.mxu0 0
        %2560 = vmatprep.subr.bf16.mxu0 0
        %2561 = vmatpush1.bf16.msra.mxu0 0
        %2562 = vmatprep.subr.bf16.mxu0 0
        %2563 = vmatpush1.bf16.msra.mxu0 0
        %2564 = vmatprep.subr.bf16.mxu0 0
        %2565 = vmatpush1.bf16.msra.mxu0 0
        %2566 = vmatprep.subr.bf16.mxu0 0
        %2567 = vmatpush1.bf16.msra.mxu0 0
        %2568 = vmatprep.subr.bf16.mxu0 0
        %2569 = vmatpush1.bf16.msra.mxu0 0
        %2570 = vmatprep.mubr.bf16.mxu0 0
        %2571 = vmatmul.mubr.bf16.gmra.mrb[0].mxu0 %v2536
        %v2572 = vpop.f32.mrb[0].mxu0
        %v2573 = vadd.f32 %v2532, %v2572
        %v2574 = vpop.f32.mrb[0].mxu0
        %v2575 = vpop.f32.mrb[0].mxu0
        %v2576 = vpop.f32.mrb[0].mxu0
        %2577 = vdwg.mxu0
        %v2578 = vmul.f32 %v2081, %v2081
        %v2580 = vrot.slane %v2081, 1
        %v2582 = vmul.f32 %v2081, %v2580
        %v2583 = vrot.slane %v2081, 2
        %v2585 = vmul.f32 %v2081, %v2583
        %v2587 = vrot.slane %v2582, 5
        %v2590 = vrot.slane %v2585, 4
        %v2592 = vrot.slane %v2582, 4
        %v2594 = vsel %vm885, %v2578, %v2578
        %v2595 = vsel %vm875, %v2594, %v2587
        %v2596 = vsel %vm881, %v2595, %v2590
        %v2597 = vsel %vm887, %v2596, %v2592
        %v2598 = vsel %vm877, %v2597, %v2583
        %v2599 = vsel %vm883, %v2598, %v2583
        %v2600 = vsel %vm879, %v2583, 1.0
        %v2601 = vsel %vm885, %v2600, 0.0
        %vm2602 = vcmask 130048
        %v2604 = vsel %vm2602, %v2090, 0
        %2606 = vmatprep.subr.mxu0 0.0
        %2607 = vmatpush1.msra.mxu0 %v2599
        %2608 = vmatprep.subr.mxu0 0.0
        %2609 = vmatpush1.msra.mxu0 %v2601
        %2610 = vmatprep.subr.mxu0 0.0
        %2611 = vmatpush1.msra.mxu0 0.0
        %2612 = vmatprep.subr.mxu0 0.0
        %2613 = vmatpush1.msra.mxu0 0.0
        %2614 = vmatprep.subr.mxu0 0.0
        %2615 = vmatpush1.msra.mxu0 0.0
        %2616 = vmatprep.subr.mxu0 0.0
        %2617 = vmatpush1.msra.mxu0 0.0
        %2618 = vmatprep.subr.mxu0 0.0
        %2619 = vmatpush1.msra.mxu0 0.0
        %2620 = vmatprep.subr.mxu0 0.0
        %2621 = vmatpush1.msra.mxu0 0.0
        %2622 = vmatprep.subr.mxu0 0.0
        %2623 = vmatpush1.msra.mxu0 0.0
        %2624 = vmatprep.subr.mxu0 0.0
        %2625 = vmatpush1.msra.mxu0 0.0
        %2626 = vmatprep.subr.mxu0 0.0
        %2627 = vmatpush1.msra.mxu0 0.0
        %2628 = vmatprep.subr.mxu0 0.0
        %2629 = vmatpush1.msra.mxu0 0.0
        %2630 = vmatprep.subr.mxu0 0.0
        %2631 = vmatpush1.msra.mxu0 0.0
        %2632 = vmatprep.subr.mxu0 0.0
        %2633 = vmatpush1.msra.mxu0 0.0
        %2634 = vmatprep.subr.mxu0 0.0
        %2635 = vmatpush1.msra.mxu0 0.0
        %2636 = vmatprep.subr.mxu0 0.0
        %2637 = vmatpush1.msra.mxu0 0.0
        %2638 = vmatprep.subr.mxu0 0.0
        %2639 = vmatpush1.msra.mxu0 0.0
        %2640 = vmatprep.subr.mxu0 0.0
        %2641 = vmatpush1.msra.mxu0 0.0
        %2642 = vmatprep.subr.mxu0 0.0
        %2643 = vmatpush1.msra.mxu0 0.0
        %2644 = vmatprep.subr.mxu0 0.0
        %2645 = vmatpush1.msra.mxu0 0.0
        %2646 = vmatprep.subr.mxu0 0.0
        %2647 = vmatpush1.msra.mxu0 0.0
        %2648 = vmatprep.subr.mxu0 0.0
        %2649 = vmatpush1.msra.mxu0 0.0
        %2650 = vmatprep.subr.mxu0 0.0
        %2651 = vmatpush1.msra.mxu0 0.0
        %2652 = vmatprep.subr.mxu0 0.0
        %2653 = vmatpush1.msra.mxu0 0.0
        %2654 = vmatprep.subr.mxu0 0.0
        %2655 = vmatpush1.msra.mxu0 0.0
        %2656 = vmatprep.subr.mxu0 0.0
        %2657 = vmatpush1.msra.mxu0 0.0
        %2658 = vmatprep.subr.mxu0 0.0
        %2659 = vmatpush1.msra.mxu0 0.0
        %2660 = vmatprep.subr.mxu0 0.0
        %2661 = vmatpush1.msra.mxu0 0.0
        %2662 = vmatprep.subr.mxu0 0.0
        %2663 = vmatpush1.msra.mxu0 0.0
        %2664 = vmatprep.subr.mxu0 0.0
        %2665 = vmatpush1.msra.mxu0 0.0
        %2666 = vmatprep.subr.mxu0 0.0
        %2667 = vmatpush1.msra.mxu0 0.0
        %2668 = vmatprep.subr.mxu0 0.0
        %2669 = vmatpush1.msra.mxu0 0.0
        %2670 = vmatprep.mubr.f32.mxu0 0.0
        %2671 = vmatmul.mubr.f32.gmra.mrb[0].mxu0 %v2604
        %v2672 = vpop.f32.mrb[0].mxu0
        %v2673 = vadd.f32 0.0, %v2672
        %v2674 = vpop.f32.mrb[0].mxu0
        %2675 = vdwg.mxu0
        %v2676 = vadd.f32 %v2573, %v2673
        %v2677 = vrot.slane %v2676, 4
        %v2678 = vmax.f32 %v2676, %v2677
        %v2679 = vrot.slane %v2678, 2
        %v2680 = vmax.f32 %v2678, %v2679
        %v2681 = vrot.slane %v2680, 1
        %v2682 = vmax.f32 %v2680, %v2681
        %v2683 = vsub.f32 %v2676, %v2682
        %v2684 = vmul.f32 %v2683, 1.442695
        %v2685 = vpow.pop %v2684
        %v2686 = vrot.slane %v2685, 4
        %v2687 = vadd.f32 %v2685, %v2686
        %v2688 = vrot.slane %v2687, 2
        %v2689 = vadd.f32 %v2687, %v2688
        %v2690 = vrot.slane %v2689, 1
        %v2691 = vadd.f32 %v2689, %v2690
        %v2692 = vrcp.pop %v2691
        %v2693 = vmul.f32 %v2685, %v2692
        %v2694 = vlog2.pop %v2691
        %v2695 = vmul.f32 %v2694, 0.6931472
        %v2696 = vmul.f32 %v2573, %v2573
        %v2697 = vrot.slane %v2696, 4
        %v2698 = vadd.f32 %v2696, %v2697
        %v2699 = vrot.slane %v2698, 2
        %v2700 = vadd.f32 %v2698, %v2699
        %v2701 = vrot.slane %v2700, 1
        %v2702 = vadd.f32 %v2700, %v2701
        %v2703 = vrcp.pop 8.0
        %v2704 = vmul.f32 %v2702, %v2703
        %v2705 = vsel %vm879, %v2695, %v2704
        %vm2706 = vcmask 64512
        %v2708 = vsel %vm2706, %v2091, 0
        %2710 = vmatprep.subr.mxu0 0.0
        %2711 = vmatpush1.msra.mxu0 %v2693
        %2712 = vmatprep.subr.mxu0 0.0
        %2713 = vmatpush1.msra.mxu0 0.0
        %2714 = vmatprep.subr.mxu0 0.0
        %2715 = vmatpush1.msra.mxu0 0.0
        %2716 = vmatprep.subr.mxu0 0.0
        %2717 = vmatpush1.msra.mxu0 0.0
        %2718 = vmatprep.subr.mxu0 0.0
        %2719 = vmatpush1.msra.mxu0 0.0
        %2720 = vmatprep.subr.mxu0 0.0
        %2721 = vmatpush1.msra.mxu0 0.0
        %2722 = vmatprep.subr.mxu0 0.0
        %2723 = vmatpush1.msra.mxu0 0.0
        %2724 = vmatprep.subr.mxu0 0.0
        %2725 = vmatpush1.msra.mxu0 0.0
        %2726 = vmatprep.subr.mxu0 0.0
        %2727 = vmatpush1.msra.mxu0 0.0
        %2728 = vmatprep.subr.mxu0 0.0
        %2729 = vmatpush1.msra.mxu0 0.0
        %2730 = vmatprep.subr.mxu0 0.0
        %2731 = vmatpush1.msra.mxu0 0.0
        %2732 = vmatprep.subr.mxu0 0.0
        %2733 = vmatpush1.msra.mxu0 0.0
        %2734 = vmatprep.subr.mxu0 0.0
        %2735 = vmatpush1.msra.mxu0 0.0
        %2736 = vmatprep.subr.mxu0 0.0
        %2737 = vmatpush1.msra.mxu0 0.0
        %2738 = vmatprep.subr.mxu0 0.0
        %2739 = vmatpush1.msra.mxu0 0.0
        %2740 = vmatprep.subr.mxu0 0.0
        %2741 = vmatpush1.msra.mxu0 0.0
        %2742 = vmatprep.subr.mxu0 0.0
        %2743 = vmatpush1.msra.mxu0 0.0
        %2744 = vmatprep.subr.mxu0 0.0
        %2745 = vmatpush1.msra.mxu0 0.0
        %2746 = vmatprep.subr.mxu0 0.0
        %2747 = vmatpush1.msra.mxu0 0.0
        %2748 = vmatprep.subr.mxu0 0.0
        %2749 = vmatpush1.msra.mxu0 0.0
        %2750 = vmatprep.subr.mxu0 0.0
        %2751 = vmatpush1.msra.mxu0 0.0
        %2752 = vmatprep.subr.mxu0 0.0
        %2753 = vmatpush1.msra.mxu0 0.0
        %2754 = vmatprep.subr.mxu0 0.0
        %2755 = vmatpush1.msra.mxu0 0.0
        %2756 = vmatprep.subr.mxu0 0.0
        %2757 = vmatpush1.msra.mxu0 0.0
        %2758 = vmatprep.subr.mxu0 0.0
        %2759 = vmatpush1.msra.mxu0 0.0
        %2760 = vmatprep.subr.mxu0 0.0
        %2761 = vmatpush1.msra.mxu0 0.0
        %2762 = vmatprep.subr.mxu0 0.0
        %2763 = vmatpush1.msra.mxu0 0.0
        %2764 = vmatprep.subr.mxu0 0.0
        %2765 = vmatpush1.msra.mxu0 0.0
        %2766 = vmatprep.subr.mxu0 0.0
        %2767 = vmatpush1.msra.mxu0 0.0
        %2768 = vmatprep.subr.mxu0 0.0
        %2769 = vmatpush1.msra.mxu0 0.0
        %2770 = vmatprep.subr.mxu0 0.0
        %2771 = vmatpush1.msra.mxu0 0.0
        %2772 = vmatprep.subr.mxu0 0.0
        %2773 = vmatpush1.msra.mxu0 0.0
        %2774 = vmatprep.mubr.f32.mxu0 0.0
        %2775 = vmatmul.mubr.f32.gmra.mrb[0].mxu0 %v2708
        %v2776 = vpop.f32.mrb[0].mxu0
        %v2777 = vadd.f32 0.0, %v2776
        %v2778 = vpop.f32.mrb[0].mxu0
        %2779 = vdwg.mxu0
        %v2780 = vmul.f32 %v2777, %v2777
        %v2782 = vrot.slane %v2780, 1
        %v2784 = vadd.f32 %v2780, %v2782
        %v2785 = vrot.slane %v2780, 2
        %v2787 = vadd.f32 %v2784, %v2785
        %v2788 = vrot.slane %v2780, 3
        %v2790 = vadd.f32 %v2787, %v2788
        %v2791 = vrsqrt.pop %v2790
        %v2792 = vmul.f32 %v2777, %v2791
        %v2794 = vrot.slane %v2791, 7
        %v2796 = vmul.f32 %v2777, %v2794
        %v2797 = vrot.slane %v2791, 6
        %v2799 = vmul.f32 %v2777, %v2797
        %v2800 = vrot.slane %v2791, 5
        %v2802 = vmul.f32 %v2777, %v2800
        %v2803 = vrot.slane %v2791, 4
        %v2805 = vmul.f32 %v2777, %v2803
        %v2806 = vrot.slane %v2791, 3
        %v2808 = vmul.f32 %v2777, %v2806
        %v2809 = vrot.slane %v2791, 2
        %v2811 = vmul.f32 %v2777, %v2809
        %v2812 = vrot.slane %v2791, 1
        %v2814 = vmul.f32 %v2777, %v2812
        %v2815 = vmul.f32 %v2799, %v2081
        %v2816 = vrot.slane %v2081, 6
        %v2818 = vmul.f32 %v2802, %v2816
        %v2820 = vrot.slane %v2818, 1
        %v2822 = vsub.f32 %v2815, %v2820
        %v2823 = vrot.slane %v2081, 5
        %v2825 = vmul.f32 %v2802, %v2823
        %v2826 = vmul.f32 %v2796, %v2580
        %v2828 = vrot.slane %v2826, 6
        %v2830 = vsub.f32 %v2825, %v2828
        %v2831 = vmul.f32 %v2796, %v2081
        %v2832 = vmul.f32 %v2799, %v2816
        %v2834 = vrot.slane %v2832, 1
        %v2836 = vsub.f32 %v2831, %v2834
        %v2838 = vrot.slane %v2836, 7
        %v2840 = vmul.f32 %v2799, %v2838
        %v2841 = vmul.f32 %v2802, %v2830
        %v2843 = vrot.slane %v2841, 1
        %v2845 = vsub.f32 %v2840, %v2843
        %v2847 = vrot.slane %v2822, 7
        %v2849 = vmul.f32 %v2802, %v2847
        %v2850 = vmul.f32 %v2796, %v2836
        %v2852 = vrot.slane %v2850, 6
        %v2854 = vsub.f32 %v2849, %v2852
        %v2856 = vrot.slane %v2830, 2
        %v2858 = vmul.f32 %v2796, %v2856
        %v2859 = vmul.f32 %v2799, %v2822
        %v2861 = vrot.slane %v2859, 1
        %v2863 = vsub.f32 %v2858, %v2861
        %v2864 = vrot.slane %v2822, 2
        %v2866 = vmul.f32 %v2792, %v2864
        %v2868 = vrot.slane %v2845, 2
        %v2870 = vadd.f32 %v2866, %v2868
        %v2871 = vmul.f32 %v2870, 2.0
        %v2872 = vadd.f32 %v2081, %v2871
        %v2873 = vrot.slane %v2830, 3
        %v2875 = vmul.f32 %v2792, %v2873
        %v2877 = vrot.slane %v2854, 3
        %v2879 = vadd.f32 %v2875, %v2877
        %v2880 = vmul.f32 %v2879, 2.0
        %v2882 = vrot.slane %v2880, 7
        %v2884 = vadd.f32 %v2081, %v2882
        %v2885 = vrot.slane %v2836, 1
        %v2887 = vmul.f32 %v2792, %v2885
        %v2889 = vrot.slane %v2863, 1
        %v2891 = vadd.f32 %v2887, %v2889
        %v2892 = vmul.f32 %v2891, 2.0
        %v2894 = vrot.slane %v2892, 6
        %v2896 = vadd.f32 %v2081, %v2894
        %v2897 = vsub.f32 0.0, %v2796
        %v2898 = vsub.f32 0.0, %v2799
        %v2899 = vsub.f32 0.0, %v2802
        %v2901 = vrot.slane %v2897, 5
        %v2903 = vmul.f32 %v2805, %v2901
        %v2905 = vrot.slane %v2792, 3
        %v2907 = vmul.f32 %v2808, %v2905
        %v2909 = vrot.slane %v2907, 1
        %v2911 = vadd.f32 %v2903, %v2909
        %v2913 = vrot.slane %v2899, 5
        %v2915 = vmul.f32 %v2811, %v2913
        %v2917 = vrot.slane %v2915, 2
        %v2919 = vadd.f32 %v2911, %v2917
        %v2921 = vrot.slane %v2898, 3
        %v2923 = vmul.f32 %v2814, %v2921
        %v2925 = vrot.slane %v2923, 3
        %v2927 = vsub.f32 %v2919, %v2925
        %v2928 = vrot.slane %v2898, 6
        %v2930 = vmul.f32 %v2805, %v2928
        %v2931 = vrot.slane %v2899, 6
        %v2933 = vmul.f32 %v2808, %v2931
        %v2935 = vrot.slane %v2933, 1
        %v2937 = vsub.f32 %v2930, %v2935
        %v2938 = vrot.slane %v2792, 2
        %v2940 = vmul.f32 %v2811, %v2938
        %v2942 = vrot.slane %v2940, 2
        %v2944 = vadd.f32 %v2937, %v2942
        %v2945 = vrot.slane %v2897, 2
        %v2947 = vmul.f32 %v2814, %v2945
        %v2949 = vrot.slane %v2947, 3
        %v2951 = vadd.f32 %v2944, %v2949
        %v2952 = vrot.slane %v2899, 7
        %v2954 = vmul.f32 %v2805, %v2952
        %v2955 = vrot.slane %v2898, 5
        %v2957 = vmul.f32 %v2808, %v2955
        %v2959 = vrot.slane %v2957, 1
        %v2961 = vadd.f32 %v2954, %v2959
        %v2962 = vrot.slane %v2897, 3
        %v2964 = vmul.f32 %v2811, %v2962
        %v2966 = vrot.slane %v2964, 2
        %v2968 = vsub.f32 %v2961, %v2966
        %v2969 = vrot.slane %v2792, 1
        %v2971 = vmul.f32 %v2814, %v2969
        %v2973 = vrot.slane %v2971, 3
        %v2975 = vadd.f32 %v2968, %v2973
        %v2976 = vmul.f32 %v2927, 2.0
        %v2978 = vrot.slane %v2976, 4
        %v2980 = vadd.f32 %v2872, %v2978
        %v2981 = vmul.f32 %v2951, 2.0
        %v2983 = vrot.slane %v2981, 3
        %v2985 = vadd.f32 %v2884, %v2983
        %v2986 = vmul.f32 %v2975, 2.0
        %v2988 = vrot.slane %v2986, 2
        %v2990 = vadd.f32 %v2896, %v2988
        %v2991 = vsel %vm879, %v2980, %v2985
        %v2992 = vsel %vm885, %v2991, %v2990
        %2993 = vst [vmem:[%s580] sm:$0x7] %v2992
        %2994 = vst [vmem:[%s548] sm:$0x3] %v2705
        %p2995 = scmp.lt.s32.totalorder %s33, 1
        %s2996 = scalar_select %p2995, %s33, 1
        %p2997 = scmp.lt.s32.totalorder %s34, 0
        %s2998 = scalar_select %p2997, %s34, 0
        %s2999 = sadd.s32 %s2998, %s2996
        %s3000 = smul.addr %s2999, 4
        %s3001 = scalar_lea.vmem %s13, %s3000
        %s3002 = sand.u32 %s379, 1
        %s3003 = scalar_lea.sflag [#allocation3], %s3002
        %s3004 = sand.u32 %s379, 1
        %s3005 = smul.addr %s3004, 2
        %s3006 = scalar_lea.vmem [#allocation2], %s3005
        // Predicated region
        $region73: #{tpu_custom_call.1} parent=71 // pred_check
          %p3007 = pneg %p361
        $region74: #{tpu_custom_call.1} parent=71 // pred_check_branch
          %3009 = sbr.rel (%p3007) target = $region76
        $region75: #{tpu_custom_call.1} parent=71 // pred_region
          _
        $region76: #{tpu_custom_call.1} parent=71 // pred_fallthru
          _
        // Predicated region
        $region77: #{tpu_custom_call.1} parent=71 // pred_check
          %p3010 = pneg %p389
        $region78: #{tpu_custom_call.1} parent=71 // pred_check_branch
          %3012 = sbr.rel (%p3010) target = $region80
        $region79: #{tpu_custom_call.1} parent=71 // pred_region
          %s3014 = ssub.s32 32, 32
          %3015 = vsyncadd %s3003, %s3014
          %s3016 = sadd.s32 %s34, %s33
          %s3017 = smul.addr %s3016, 32
          %s3018 = scalar_lea.hbm %s14, %s3017
          %s3020 = sshll.u32 %s3006, 4
          %s3021 = int_to_ptr.vmem [resolvable:$true] %s3020
          %3023 = dma.vmem_to_hbm [thread:$0]  %s3021, 32, %s3018, %s3003
        $region80: #{tpu_custom_call.1} parent=71 // pred_fallthru
          _
      $region72: #{tpu_custom_call.1} parent=5 // pred_fallthru
        _
      %p3024 = scmp.le.s32.totalorder 2, %s24
      // Predicated region
      $region81: #{tpu_custom_call.1} parent=5 // pred_check
        %p3025 = pneg %p3024
      $region82: #{tpu_custom_call.1} parent=5 // pred_check_branch
        %3027 = sbr.rel (%p3025) target = $region84
      $region83: #{tpu_custom_call.1} parent=5 // pred_region
        %s3028 = ssub.s32 %s24, 2
        // Predicated region
        $region85: #{tpu_custom_call.1} parent=83 // pred_check
          %p3029 = pneg %p367
        $region86: #{tpu_custom_call.1} parent=83 // pred_check_branch
          %3031 = sbr.rel (%p3029) target = $region88
        $region87: #{tpu_custom_call.1} parent=83 // pred_region
          %p3032 = scmp.lt.s32.totalorder %s35, 1
          %s3033 = scalar_select %p3032, %s35, 1
          %p3034 = scmp.lt.s32.totalorder %s36, 0
          %s3035 = scalar_select %p3034, %s36, 0
          %s3036 = sadd.s32 %s3035, %s3033
          %s3037 = smul.addr %s3036, 4
          %s3038 = scalar_lea.vmem %s13, %s3037
        $region88: #{tpu_custom_call.1} parent=83 // pred_fallthru
          _
        // Predicated region
        $region89: #{tpu_custom_call.1} parent=83 // pred_check
          %p3039 = pneg %p395
        $region90: #{tpu_custom_call.1} parent=83 // pred_check_branch
          %3041 = sbr.rel (%p3039) target = $region92
        $region91: #{tpu_custom_call.1} parent=83 // pred_region
          %s3042 = sand.u32 %s380, 1
          %s3043 = scalar_lea.sflag [#allocation3], %s3042
          %s3044 = sand.u32 %s380, 1
          %s3045 = smul.addr %s3044, 2
          %s3046 = scalar_lea.vmem [#allocation2], %s3045
          %3047 = dma.done %s3043, 32
        $region92: #{tpu_custom_call.1} parent=83 // pred_fallthru
          _
      $region84: #{tpu_custom_call.1} parent=5 // pred_fallthru
        _
    $region6: #{tpu_custom_call.1} parent=1 // loop_footer
      %s28 = sadd.s32 1, %s24
    $region7: #{tpu_custom_call.1} parent=1 // loop_footer_branch
      %23 = sbr.rel target = $region3
    $region8: #{tpu_custom_call.1} parent=1 // loop_exit
      _
    %3048 = vsyncpa [#allocation3], 1
    %s3049 = scalar_lea.sflag [#allocation3], 1
    %3050 = vsyncpa %s3049, 1

</llo_original>
